<compile_context>
chip_gen: v6e
topology: v6e:2x2x1
jax: 0.10.0
libtpu: 0.0.40
codegen_flags: <defaults>
</compile_context>

<pallas_src>
import jax
import jax.numpy as jnp
from jax.experimental import pallas as pl
from jax.experimental.pallas import tpu as pltpu

LATENT_CODE_SIZE = 32
POINT_DIM = 3
BREADTH = LATENT_CODE_SIZE * 2                       # 64
D_IN = LATENT_CODE_SIZE + POINT_DIM                  # 35
D_MID = BREADTH - LATENT_CODE_SIZE - POINT_DIM       # 29 (layers1 output width)
D_MID_P = 32                                         # 29 padded to a lane-friendly 32


# --------------------------------------------------------------------------
# Kernel
# --------------------------------------------------------------------------
def _sdf_kernel(x_ref, w_in_ref, w_sq_ref, w3_ref, w4a_ref, w8_ref, b_ref, o_ref):
    """One grid step processes TM packed super-rows (= TM*G original rows).

    x_ref   : (TM, G*35)  fp32  packed input rows
    w_in_ref: (2, G*35, G*64) bf16  [0]=layers1[0], [1]=layers2[0] input-half
    w_sq_ref: (5, G*64, G*64) bf16  layers1[1], layers1[2], layers2[1..3]
    w3_ref  : (G*64, G*32) bf16     layers1[3] (29 -> padded 32 outputs)
    w4a_ref : (G*32, G*64) bf16     layers2[0] hidden-half (padded rows = 0)
    w8_ref  : (G*64, G)    bf16     final Linear(64, 1), block-diagonal
    b_ref   : (9, G*64)    fp32     packed (tiled) biases, zero padded
    o_ref   : (TM, G)      fp32     per-row SDF value (tanh applied)
    """
    G = w8_ref.shape[1]
    GM = w4a_ref.shape[0]                            # G * 32

    x = x_ref[...].astype(jnp.bfloat16)              # (TM, G*35)

    def lin_relu(h, w, b):
        y = jnp.dot(h, w, preferred_element_type=jnp.float32) + b
        return jnp.maximum(y, 0.0).astype(jnp.bfloat16)   # carry activations in bf16

    # ---- layers1: 4x (weight_norm Linear -> ReLU -> Dropout(identity)) ----
    h = lin_relu(x, w_in_ref[0], b_ref[0:1, :])      # (TM, G*64)
    h = lin_relu(h, w_sq_ref[0], b_ref[1:2, :])
    h = lin_relu(h, w_sq_ref[1], b_ref[2:3, :])
    h = lin_relu(h, w3_ref[...], b_ref[3:4, :GM])    # (TM, G*32), cols 29..31 are 0

    # ---- x = cat([h, input], -1) then layers2[0]: split dot ----------------
    y = (jnp.dot(h, w4a_ref[...], preferred_element_type=jnp.float32)
         + jnp.dot(x, w_in_ref[1], preferred_element_type=jnp.float32)
         + b_ref[4:5, :])
    h = jnp.maximum(y, 0.0).astype(jnp.bfloat16)     # (TM, G*64)

    # ---- layers2[1..3] ------------------------------------------------------
    h = lin_relu(h, w_sq_ref[2], b_ref[5:6, :])
    h = lin_relu(h, w_sq_ref[3], b_ref[6:7, :])
    h = lin_relu(h, w_sq_ref[4], b_ref[7:8, :])

    # ---- final Linear(64, 1) + Tanh -----------------------------------------
    # Plain jnp.dot keeps h un-transposed (small stationary weight on the MXU);
    # the (TM, G) result maps back to original rows by a pure reshape outside.
    y = jnp.dot(h, w8_ref[...], preferred_element_type=jnp.float32)   # (TM, G)
    o_ref[...] = jnp.tanh(y + b_ref[8:9, :G]).astype(o_ref.dtype)


# --------------------------------------------------------------------------
# Parameters
# --------------------------------------------------------------------------
def _make_linear(key, fan_in, fan_out, weight_norm=True):
    """Deterministic init mirroring a (weight-normed) nn.Linear.

    Returns W as [in, out] fp32 (weight-norm folded) and b as [out] fp32.
    """
    k1, k2, k3 = jax.random.split(key, 3)
    v = jax.random.normal(k1, (fan_out, fan_in), jnp.float32) * 0.2
    b = jax.random.normal(k2, (fan_out,), jnp.float32) * 0.05
    if weight_norm:
        # nn.utils.weight_norm(dim=0): w[o, :] = g[o] * v[o, :] / ||v[o, :]||
        g = jax.random.uniform(k3, (fan_out,), jnp.float32, minval=0.5, maxval=1.5)
        w = g[:, None] * v / jnp.linalg.norm(v, axis=1, keepdims=True)
    else:
        w = v
    return w.T, b


def init_sdfnet_params(seed=0):
    """Base (unpacked) fp32 params: 9 (W [in,out], b [out]) pairs."""
    keys = jax.random.split(jax.random.PRNGKey(seed), 9)
    dims = [(D_IN, BREADTH), (BREADTH, BREADTH), (BREADTH, BREADTH),
            (BREADTH, D_MID),
            (BREADTH, BREADTH), (BREADTH, BREADTH), (BREADTH, BREADTH),
            (BREADTH, BREADTH), (BREADTH, 1)]
    wn = [True] * 8 + [False]
    return [_make_linear(k, fi, fo, weight_norm=w)
            for k, (fi, fo), w in zip(keys, dims, wn)]


def _block_diag(w, g):
    # kron(I_g, w) == g-way block-diagonal stack of w
    return jnp.kron(jnp.eye(g, dtype=w.dtype), w)


def pack_sdfnet_params(base, G):
    """Build G-way block-diagonal bf16 weights and stacked fp32 biases."""
    (W0, b0), (W1, b1), (W2, b2), (W3, b3), (W4, b4), \
        (W5, b5), (W6, b6), (W7, b7), (W8, b8) = base
    GO = G * BREADTH
    pad = D_MID_P - D_MID

    # pad layers1[3] output 29 -> 32 (zero columns) and the matching rows of
    # the hidden-half of layers2[0]'s weight (zero rows) -> results unchanged.
    W3p = jnp.pad(W3, ((0, 0), (0, pad)))            # (64, 32)
    b3p = jnp.pad(b3, (0, pad))                      # (32,)
    W4a = jnp.pad(W4[:D_MID], ((0, pad), (0, 0)))    # (32, 64)
    W4b = W4[D_MID:]                                 # (35, 64)

    bd = lambda w: _block_diag(w, G).astype(jnp.bfloat16)

    w_in = jnp.stack([bd(W0), bd(W4b)])              # (2, G*35, GO)
    w_sq = jnp.stack([bd(W1), bd(W2), bd(W5), bd(W6), bd(W7)])   # (5, GO, GO)
    w3 = bd(W3p)                                     # (GO, G*32)
    w4a = bd(W4a)                                    # (G*32, GO)
    w8 = bd(W8)                                      # (GO, G)

    def brow(b):
        t = jnp.tile(b, G)
        return jnp.pad(t, (0, GO - t.shape[0]))
    biases = jnp.stack([brow(b0), brow(b1), brow(b2), brow(b3p), brow(b4),
                        brow(b5), brow(b6), brow(b7), brow(b8)]
                       ).astype(jnp.float32)         # (9, GO)

    return w_in, w_sq, w3, w4a, w8, biases


def _default_packing():
    """G=2 on 128x128-MXU parts (<= v5), G=4 on 256x256-MXU parts (v6e/v7x)."""
    try:
        kind = jax.devices()[0].device_kind.lower()
    except Exception:
        return 4
    if any(tag in kind for tag in ("v2", "v3", "v4", "v5")):
        return 2
    return 4


# --------------------------------------------------------------------------
# Wrapper
# --------------------------------------------------------------------------
def _choose_tm(m_packed, cap=4096):
    """Packed-row tile: big to amortize per-grid-step overhead, but keep at
    least a few grid steps on large inputs so the 'parallel' axis can shard
    across v7x's two TensorCores and the pipeline stays busy."""
    tm = 256
    while tm < cap and (m_packed + 2 * tm - 1) // (2 * tm) >= 4:
        tm *= 2
    return tm


@jax.jit
def sdfnet_forward(x, packed_params):
    """x: [B, N, latent+3] fp32 -> [B, N, 1] fp32 (matches the torch module)."""
    w_in, w_sq, w3, w4a, w8, biases = packed_params
    G = int(w8.shape[1])

    B, N, D = x.shape
    assert D == D_IN
    M = B * N

    m_packed = (M + G - 1) // G
    TM = _choose_tm(m_packed)
    mp_packed = ((m_packed + TM - 1) // TM) * TM     # packed rows, padded
    Mp = mp_packed * G                               # original rows, padded

    xm = x.reshape(M, D)
    if Mp != M:
        xm = jnp.pad(xm, ((0, Mp - M), (0, 0)))      # dead work, sliced off below
    xp = xm.reshape(mp_packed, G * D)                # free contiguous reshape
    n_tiles = mp_packed // TM

    def full_spec(p):
        nd = p.ndim
        return pl.BlockSpec(p.shape, lambda i: (0,) * nd)

    weights = (w_in, w_sq, w3, w4a, w8, biases)
    in_specs = [pl.BlockSpec((TM, G * D), lambda i: (i, 0))]
    in_specs += [full_spec(p) for p in weights]

    out = pl.pallas_call(
        _sdf_kernel,
        out_shape=jax.ShapeDtypeStruct((mp_packed, G), jnp.float32),
        grid_spec=pltpu.PrefetchScalarGridSpec(
            num_scalar_prefetch=0,
            grid=(n_tiles,),
            in_specs=in_specs,
            out_specs=pl.BlockSpec((TM, G), lambda i: (i, 0)),
        ),
        compiler_params=pltpu.CompilerParams(
            dimension_semantics=("parallel",),
            vmem_limit_bytes=48 * 1024 * 1024),
    )(xp, *weights)

    # (mp_packed, G) row-major is exactly original row order -> pure reshape.
    return out.reshape(Mp)[:M].reshape(B, N, 1)


# --------------------------------------------------------------------------
# Pure-JAX reference (unpacked weights, same bf16-operand / fp32-accum math)
# --------------------------------------------------------------------------
def sdfnet_reference(x, base_params):
    def lin(h, w, b):
        return jnp.dot(h.astype(jnp.bfloat16), w.astype(jnp.bfloat16),
                       preferred_element_type=jnp.float32) + b

    (W0, b0), (W1, b1), (W2, b2), (W3, b3), (W4, b4), \
        (W5, b5), (W6, b6), (W7, b7), (W8, b8) = base_params

    h = x
    for W, b in ((W0, b0), (W1, b1), (W2, b2), (W3, b3)):
        h = jax.nn.relu(lin(h, W, b))
    h = jnp.concatenate([h, x], axis=-1)
    h = jax.nn.relu(lin(h, W4, b4))
    for W, b in ((W5, b5), (W6, b6), (W7, b7)):
        h = jax.nn.relu(lin(h, W, b))
    return jnp.tanh(lin(h, W8, b8))                  # (B, N, 1)


# --------------------------------------------------------------------------
if __name__ == "__main__":
    base = init_sdfnet_params(seed=0)
    G = _default_packing()
    packed = pack_sdfnet_params(base, G)

    # Small-shape test (single tile, heavy padding).
    key = jax.random.PRNGKey(0)
    B, N = 2, 8
    x = jax.random.normal(key, (B, N, D_IN), jnp.float32)

    out = jax.block_until_ready(sdfnet_forward(x, packed))
    ref = sdfnet_reference(x, base)
    assert out.shape == (B, N, 1), out.shape
    err = float(jnp.max(jnp.abs(out - ref)))
    assert err < 5e-3, err

    # Multi-tile test: M = 2466 is not a multiple of G or TM*G, exercising the
    # packed-row padding, the (i, 0) index_map and the output unscramble.
    B2, N2 = 2, 1233
    x2 = jax.random.normal(jax.random.PRNGKey(1), (B2, N2, D_IN), jnp.float32)
    out2 = jax.block_until_ready(sdfnet_forward(x2, packed))
    ref2 = sdfnet_reference(x2, base)
    assert out2.shape == (B2, N2, 1), out2.shape
    err2 = float(jnp.max(jnp.abs(out2 - ref2)))
    assert err2 < 5e-3, err2

    print("KERNEL_OK")
</pallas_src>

<mosaic_0001>
module attributes {stable_mosaic.version = 11 : i64} {
  func.func @_sdf_kernel(%arg0: i32, %arg1: memref<256x140xf32, #tpu.memory_space<vmem>>, %arg2: memref<2x140x256xbf16, #tpu.memory_space<vmem>>, %arg3: memref<5x256x256xbf16, #tpu.memory_space<vmem>>, %arg4: memref<256x128xbf16, #tpu.memory_space<vmem>>, %arg5: memref<128x256xbf16, #tpu.memory_space<vmem>>, %arg6: memref<256x4xbf16, #tpu.memory_space<vmem>>, %arg7: memref<9x256xf32, #tpu.memory_space<vmem>>, %arg8: memref<256x4xf32, #tpu.memory_space<vmem>>) attributes {dimension_semantics = [#tpu.dimension_semantics<parallel>], iteration_bounds = array<i64: 1>, scalar_prefetch = 0 : i64, scratch_operands = 0 : i64, tpu.core_type = #tpu.core_type<tc>, window_params = [{transform_indices = @transform_0, window_bounds = array<i64: 256, 140>}, {pipeline_mode = #tpu.pipeline_mode<synchronous>, transform_indices = @transform_1, window_bounds = array<i64: 2, 140, 256>}, {pipeline_mode = #tpu.pipeline_mode<synchronous>, transform_indices = @transform_2, window_bounds = array<i64: 5, 256, 256>}, {pipeline_mode = #tpu.pipeline_mode<synchronous>, transform_indices = @transform_3, window_bounds = array<i64: 256, 128>}, {pipeline_mode = #tpu.pipeline_mode<synchronous>, transform_indices = @transform_4, window_bounds = array<i64: 128, 256>}, {pipeline_mode = #tpu.pipeline_mode<synchronous>, transform_indices = @transform_5, window_bounds = array<i64: 256, 4>}, {pipeline_mode = #tpu.pipeline_mode<synchronous>, transform_indices = @transform_6, window_bounds = array<i64: 9, 256>}, {transform_indices = @transform_7, window_bounds = array<i64: 256, 4>}]} {
    %c0 = arith.constant 0 : index
    %c0_0 = arith.constant 0 : index
    %0 = vector.load %arg1[%c0, %c0_0] : memref<256x140xf32, #tpu.memory_space<vmem>>, vector<256x140xf32>
    %1 = arith.truncf %0 : vector<256x140xf32> to vector<256x140xbf16>
    %c0_1 = arith.constant 0 : index
    %c0_2 = arith.constant 0 : index
    %c0_3 = arith.constant 0 : index
    %2 = vector.load %arg2[%c0_1, %c0_2, %c0_3] : memref<2x140x256xbf16, #tpu.memory_space<vmem>>, vector<1x140x256xbf16>
    %3 = vector.shape_cast %2 : vector<1x140x256xbf16> to vector<140x256xbf16>
    %c0_4 = arith.constant 0 : index
    %c0_5 = arith.constant 0 : index
    %4 = vector.load %arg7[%c0_4, %c0_5] : memref<9x256xf32, #tpu.memory_space<vmem>>, vector<1x256xf32>
    %cst = arith.constant dense<0.000000e+00> : vector<256x256xf32>
    %5 = tpu.matmul %1, %3, %cst {dimension_numbers = #tpu.dot_dimension_numbers<[1], [0], [0], [1], [0, 0, 1, 1], [], []>} : vector<256x140xbf16>, vector<140x256xbf16>, vector<256x256xf32> -> vector<256x256xf32>
    %6 = vector.broadcast %4 : vector<1x256xf32> to vector<256x256xf32>
    %7 = arith.addf %5, %6 : vector<256x256xf32>
    %cst_6 = arith.constant 0.000000e+00 : f32
    %8 = vector.broadcast %cst_6 : f32 to vector<256x256xf32>
    %9 = arith.maximumf %7, %8 : vector<256x256xf32>
    %10 = arith.truncf %9 : vector<256x256xf32> to vector<256x256xbf16>
    %c0_7 = arith.constant 0 : index
    %c0_8 = arith.constant 0 : index
    %c0_9 = arith.constant 0 : index
    %11 = vector.load %arg3[%c0_7, %c0_8, %c0_9] : memref<5x256x256xbf16, #tpu.memory_space<vmem>>, vector<1x256x256xbf16>
    %12 = vector.shape_cast %11 : vector<1x256x256xbf16> to vector<256x256xbf16>
    %c1 = arith.constant 1 : index
    %c0_10 = arith.constant 0 : index
    %13 = vector.load %arg7[%c1, %c0_10] : memref<9x256xf32, #tpu.memory_space<vmem>>, vector<1x256xf32>
    %cst_11 = arith.constant dense<0.000000e+00> : vector<256x256xf32>
    %14 = tpu.matmul %10, %12, %cst_11 {dimension_numbers = #tpu.dot_dimension_numbers<[1], [0], [0], [1], [0, 0, 1, 1], [], []>} : vector<256x256xbf16>, vector<256x256xbf16>, vector<256x256xf32> -> vector<256x256xf32>
    %15 = vector.broadcast %13 : vector<1x256xf32> to vector<256x256xf32>
    %16 = arith.addf %14, %15 : vector<256x256xf32>
    %cst_12 = arith.constant 0.000000e+00 : f32
    %17 = vector.broadcast %cst_12 : f32 to vector<256x256xf32>
    %18 = arith.maximumf %16, %17 : vector<256x256xf32>
    %19 = arith.truncf %18 : vector<256x256xf32> to vector<256x256xbf16>
    %c1_13 = arith.constant 1 : index
    %c0_14 = arith.constant 0 : index
    %c0_15 = arith.constant 0 : index
    %20 = vector.load %arg3[%c1_13, %c0_14, %c0_15] : memref<5x256x256xbf16, #tpu.memory_space<vmem>>, vector<1x256x256xbf16>
    %21 = vector.shape_cast %20 : vector<1x256x256xbf16> to vector<256x256xbf16>
    %c2 = arith.constant 2 : index
    %c0_16 = arith.constant 0 : index
    %22 = vector.load %arg7[%c2, %c0_16] : memref<9x256xf32, #tpu.memory_space<vmem>>, vector<1x256xf32>
    %cst_17 = arith.constant dense<0.000000e+00> : vector<256x256xf32>
    %23 = tpu.matmul %19, %21, %cst_17 {dimension_numbers = #tpu.dot_dimension_numbers<[1], [0], [0], [1], [0, 0, 1, 1], [], []>} : vector<256x256xbf16>, vector<256x256xbf16>, vector<256x256xf32> -> vector<256x256xf32>
    %24 = vector.broadcast %22 : vector<1x256xf32> to vector<256x256xf32>
    %25 = arith.addf %23, %24 : vector<256x256xf32>
    %cst_18 = arith.constant 0.000000e+00 : f32
    %26 = vector.broadcast %cst_18 : f32 to vector<256x256xf32>
    %27 = arith.maximumf %25, %26 : vector<256x256xf32>
    %28 = arith.truncf %27 : vector<256x256xf32> to vector<256x256xbf16>
    %c0_19 = arith.constant 0 : index
    %c0_20 = arith.constant 0 : index
    %29 = vector.load %arg4[%c0_19, %c0_20] : memref<256x128xbf16, #tpu.memory_space<vmem>>, vector<256x128xbf16>
    %c3 = arith.constant 3 : index
    %c0_21 = arith.constant 0 : index
    %30 = vector.load %arg7[%c3, %c0_21] : memref<9x256xf32, #tpu.memory_space<vmem>>, vector<1x128xf32>
    %cst_22 = arith.constant dense<0.000000e+00> : vector<256x128xf32>
    %31 = tpu.matmul %28, %29, %cst_22 {dimension_numbers = #tpu.dot_dimension_numbers<[1], [0], [0], [1], [0, 0, 1, 1], [], []>} : vector<256x256xbf16>, vector<256x128xbf16>, vector<256x128xf32> -> vector<256x128xf32>
    %32 = vector.broadcast %30 : vector<1x128xf32> to vector<256x128xf32>
    %33 = arith.addf %31, %32 : vector<256x128xf32>
    %cst_23 = arith.constant 0.000000e+00 : f32
    %34 = vector.broadcast %cst_23 : f32 to vector<256x128xf32>
    %35 = arith.maximumf %33, %34 : vector<256x128xf32>
    %36 = arith.truncf %35 : vector<256x128xf32> to vector<256x128xbf16>
    %c0_24 = arith.constant 0 : index
    %c0_25 = arith.constant 0 : index
    %37 = vector.load %arg5[%c0_24, %c0_25] : memref<128x256xbf16, #tpu.memory_space<vmem>>, vector<128x256xbf16>
    %cst_26 = arith.constant dense<0.000000e+00> : vector<256x256xf32>
    %38 = tpu.matmul %36, %37, %cst_26 {dimension_numbers = #tpu.dot_dimension_numbers<[1], [0], [0], [1], [0, 0, 1, 1], [], []>} : vector<256x128xbf16>, vector<128x256xbf16>, vector<256x256xf32> -> vector<256x256xf32>
    %c1_27 = arith.constant 1 : index
    %c0_28 = arith.constant 0 : index
    %c0_29 = arith.constant 0 : index
    %39 = vector.load %arg2[%c1_27, %c0_28, %c0_29] : memref<2x140x256xbf16, #tpu.memory_space<vmem>>, vector<1x140x256xbf16>
    %40 = vector.shape_cast %39 : vector<1x140x256xbf16> to vector<140x256xbf16>
    %cst_30 = arith.constant dense<0.000000e+00> : vector<256x256xf32>
    %41 = tpu.matmul %1, %40, %cst_30 {dimension_numbers = #tpu.dot_dimension_numbers<[1], [0], [0], [1], [0, 0, 1, 1], [], []>} : vector<256x140xbf16>, vector<140x256xbf16>, vector<256x256xf32> -> vector<256x256xf32>
    %42 = arith.addf %38, %41 : vector<256x256xf32>
    %c4 = arith.constant 4 : index
    %c0_31 = arith.constant 0 : index
    %43 = vector.load %arg7[%c4, %c0_31] : memref<9x256xf32, #tpu.memory_space<vmem>>, vector<1x256xf32>
    %44 = vector.broadcast %43 : vector<1x256xf32> to vector<256x256xf32>
    %45 = arith.addf %42, %44 : vector<256x256xf32>
    %cst_32 = arith.constant 0.000000e+00 : f32
    %46 = vector.broadcast %cst_32 : f32 to vector<256x256xf32>
    %47 = arith.maximumf %45, %46 : vector<256x256xf32>
    %48 = arith.truncf %47 : vector<256x256xf32> to vector<256x256xbf16>
    %c2_33 = arith.constant 2 : index
    %c0_34 = arith.constant 0 : index
    %c0_35 = arith.constant 0 : index
    %49 = vector.load %arg3[%c2_33, %c0_34, %c0_35] : memref<5x256x256xbf16, #tpu.memory_space<vmem>>, vector<1x256x256xbf16>
    %50 = vector.shape_cast %49 : vector<1x256x256xbf16> to vector<256x256xbf16>
    %c5 = arith.constant 5 : index
    %c0_36 = arith.constant 0 : index
    %51 = vector.load %arg7[%c5, %c0_36] : memref<9x256xf32, #tpu.memory_space<vmem>>, vector<1x256xf32>
    %cst_37 = arith.constant dense<0.000000e+00> : vector<256x256xf32>
    %52 = tpu.matmul %48, %50, %cst_37 {dimension_numbers = #tpu.dot_dimension_numbers<[1], [0], [0], [1], [0, 0, 1, 1], [], []>} : vector<256x256xbf16>, vector<256x256xbf16>, vector<256x256xf32> -> vector<256x256xf32>
    %53 = vector.broadcast %51 : vector<1x256xf32> to vector<256x256xf32>
    %54 = arith.addf %52, %53 : vector<256x256xf32>
    %cst_38 = arith.constant 0.000000e+00 : f32
    %55 = vector.broadcast %cst_38 : f32 to vector<256x256xf32>
    %56 = arith.maximumf %54, %55 : vector<256x256xf32>
    %57 = arith.truncf %56 : vector<256x256xf32> to vector<256x256xbf16>
    %c3_39 = arith.constant 3 : index
    %c0_40 = arith.constant 0 : index
    %c0_41 = arith.constant 0 : index
    %58 = vector.load %arg3[%c3_39, %c0_40, %c0_41] : memref<5x256x256xbf16, #tpu.memory_space<vmem>>, vector<1x256x256xbf16>
    %59 = vector.shape_cast %58 : vector<1x256x256xbf16> to vector<256x256xbf16>
    %c6 = arith.constant 6 : index
    %c0_42 = arith.constant 0 : index
    %60 = vector.load %arg7[%c6, %c0_42] : memref<9x256xf32, #tpu.memory_space<vmem>>, vector<1x256xf32>
    %cst_43 = arith.constant dense<0.000000e+00> : vector<256x256xf32>
    %61 = tpu.matmul %57, %59, %cst_43 {dimension_numbers = #tpu.dot_dimension_numbers<[1], [0], [0], [1], [0, 0, 1, 1], [], []>} : vector<256x256xbf16>, vector<256x256xbf16>, vector<256x256xf32> -> vector<256x256xf32>
    %62 = vector.broadcast %60 : vector<1x256xf32> to vector<256x256xf32>
    %63 = arith.addf %61, %62 : vector<256x256xf32>
    %cst_44 = arith.constant 0.000000e+00 : f32
    %64 = vector.broadcast %cst_44 : f32 to vector<256x256xf32>
    %65 = arith.maximumf %63, %64 : vector<256x256xf32>
    %66 = arith.truncf %65 : vector<256x256xf32> to vector<256x256xbf16>
    %c4_45 = arith.constant 4 : index
    %c0_46 = arith.constant 0 : index
    %c0_47 = arith.constant 0 : index
    %67 = vector.load %arg3[%c4_45, %c0_46, %c0_47] : memref<5x256x256xbf16, #tpu.memory_space<vmem>>, vector<1x256x256xbf16>
    %68 = vector.shape_cast %67 : vector<1x256x256xbf16> to vector<256x256xbf16>
    %c7 = arith.constant 7 : index
    %c0_48 = arith.constant 0 : index
    %69 = vector.load %arg7[%c7, %c0_48] : memref<9x256xf32, #tpu.memory_space<vmem>>, vector<1x256xf32>
    %cst_49 = arith.constant dense<0.000000e+00> : vector<256x256xf32>
    %70 = tpu.matmul %66, %68, %cst_49 {dimension_numbers = #tpu.dot_dimension_numbers<[1], [0], [0], [1], [0, 0, 1, 1], [], []>} : vector<256x256xbf16>, vector<256x256xbf16>, vector<256x256xf32> -> vector<256x256xf32>
    %71 = vector.broadcast %69 : vector<1x256xf32> to vector<256x256xf32>
    %72 = arith.addf %70, %71 : vector<256x256xf32>
    %cst_50 = arith.constant 0.000000e+00 : f32
    %73 = vector.broadcast %cst_50 : f32 to vector<256x256xf32>
    %74 = arith.maximumf %72, %73 : vector<256x256xf32>
    %75 = arith.truncf %74 : vector<256x256xf32> to vector<256x256xbf16>
    %c0_51 = arith.constant 0 : index
    %c0_52 = arith.constant 0 : index
    %76 = vector.load %arg6[%c0_51, %c0_52] : memref<256x4xbf16, #tpu.memory_space<vmem>>, vector<256x4xbf16>
    %cst_53 = arith.constant dense<0.000000e+00> : vector<256x4xf32>
    %77 = tpu.matmul %75, %76, %cst_53 {dimension_numbers = #tpu.dot_dimension_numbers<[1], [0], [0], [1], [0, 0, 1, 1], [], []>} : vector<256x256xbf16>, vector<256x4xbf16>, vector<256x4xf32> -> vector<256x4xf32>
    %c8 = arith.constant 8 : index
    %c0_54 = arith.constant 0 : index
    %78 = vector.load %arg7[%c8, %c0_54] : memref<9x256xf32, #tpu.memory_space<vmem>>, vector<1x4xf32>
    %79 = vector.broadcast %78 : vector<1x4xf32> to vector<256x4xf32>
    %80 = arith.addf %77, %79 : vector<256x4xf32>
    %81 = math.tanh %80 : vector<256x4xf32>
    %c0_55 = arith.constant 0 : index
    %c0_56 = arith.constant 0 : index
    %82 = vector.load %arg8[%c0_55, %c0_56] : memref<256x4xf32, #tpu.memory_space<vmem>>, vector<256x4xf32>
    tpu.vector_store %arg8[%c0_55, %c0_56], %81 {strides = array<i32>} : memref<256x4xf32, #tpu.memory_space<vmem>>, vector<256x4xf32>,
    return
  }
  func.func @transform_0(%arg0: i32) -> (i32, i32) {
    %c0_i32 = arith.constant 0 : i32
    %c0_i32_0 = arith.constant 0 : i32
    return %arg0, %c0_i32 : i32, i32
  }
  func.func @transform_1(%arg0: i32) -> (i32, i32, i32) {
    %c0_i32 = arith.constant 0 : i32
    %c0_i32_0 = arith.constant 0 : i32
    %c0_i32_1 = arith.constant 0 : i32
    %c0_i32_2 = arith.constant 0 : i32
    return %c0_i32, %c0_i32_0, %c0_i32_1 : i32, i32, i32
  }
  func.func @transform_2(%arg0: i32) -> (i32, i32, i32) {
    %c0_i32 = arith.constant 0 : i32
    %c0_i32_0 = arith.constant 0 : i32
    %c0_i32_1 = arith.constant 0 : i32
    %c0_i32_2 = arith.constant 0 : i32
    return %c0_i32, %c0_i32_0, %c0_i32_1 : i32, i32, i32
  }
  func.func @transform_3(%arg0: i32) -> (i32, i32) {
    %c0_i32 = arith.constant 0 : i32
    %c0_i32_0 = arith.constant 0 : i32
    %c0_i32_1 = arith.constant 0 : i32
    return %c0_i32, %c0_i32_0 : i32, i32
  }
  func.func @transform_4(%arg0: i32) -> (i32, i32) {
    %c0_i32 = arith.constant 0 : i32
    %c0_i32_0 = arith.constant 0 : i32
    %c0_i32_1 = arith.constant 0 : i32
    return %c0_i32, %c0_i32_0 : i32, i32
  }
  func.func @transform_5(%arg0: i32) -> (i32, i32) {
    %c0_i32 = arith.constant 0 : i32
    %c0_i32_0 = arith.constant 0 : i32
    %c0_i32_1 = arith.constant 0 : i32
    return %c0_i32, %c0_i32_0 : i32, i32
  }
  func.func @transform_6(%arg0: i32) -> (i32, i32) {
    %c0_i32 = arith.constant 0 : i32
    %c0_i32_0 = arith.constant 0 : i32
    %c0_i32_1 = arith.constant 0 : i32
    return %c0_i32, %c0_i32_0 : i32, i32
  }
  func.func @transform_7(%arg0: i32) -> (i32, i32) {
    %c0_i32 = arith.constant 0 : i32
    %c0_i32_0 = arith.constant 0 : i32
    return %arg0, %c0_i32 : i32, i32
  }
}

</mosaic_0001>

<llo_original>
// kernel: sdfnet_forward.1
$region0: #{sdfnet_forward.1}
  #allocation0 [shape = 'u32[]', space=smem, size = 0x4, offset = 0x4, fixed_abs, tag = 'smem constant byte address 0x4 - core index']
  #allocation1 [shape = 'u32[144,128]{1,0:T(1,128)}', space=vmem, size = 0x12000, scoped, tag = 'internal scratch']
  %s0 = inlined_call_operand.vmem [shape: f32[256,140], index: 0, kind: input, shape index: {}]
  %s1 = inlined_call_operand.vmem [shape: bf16[2,140,256], index: 1, kind: input, shape index: {}]
  %s2 = inlined_call_operand.vmem [shape: bf16[5,256,256], index: 2, kind: input, shape index: {}]
  %s3 = inlined_call_operand.vmem [shape: bf16[256,128], index: 3, kind: input, shape index: {}]
  %s4 = inlined_call_operand.vmem [shape: bf16[128,256], index: 4, kind: input, shape index: {}]
  %s5 = inlined_call_operand.vmem [shape: bf16[256,4], index: 5, kind: input, shape index: {}]
  %s6 = inlined_call_operand.vmem [shape: f32[9,256], index: 6, kind: input, shape index: {}]
  %s7 = inlined_call_operand.vmem [shape: f32[256,4], index: 7, kind: output, shape index: {}]
  %s8 = sld [smem:[#allocation0]]
  $region38: #{sdfnet_forward.1} parent=0
    _
  %s10 = ssub.s32 1, %s8
  %s11 = scalar_select 0, %s10, %s8
  // Predicated region
  $region2: #{sdfnet_forward.1} parent=0 // pred_check
    _
  $region3: #{sdfnet_forward.1} parent=0 // pred_check_branch
    %13 = sbr.rel (0) target = $region5
  $region4: #{sdfnet_forward.1} parent=0 // pred_region
    _
  $region5: #{sdfnet_forward.1} parent=0 // pred_fallthru
    _
  // Predicated region
  $region6: #{sdfnet_forward.1} parent=0 // pred_check
    _
  $region7: #{sdfnet_forward.1} parent=0 // pred_check_branch
    %15 = sbr.rel (0) target = $region9
  $region8: #{sdfnet_forward.1} parent=0 // pred_region
    _
  $region9: #{sdfnet_forward.1} parent=0 // pred_fallthru
    _
  // Predicated region
  $region10: #{sdfnet_forward.1} parent=0 // pred_check
    _
  $region11: #{sdfnet_forward.1} parent=0 // pred_check_branch
    %17 = sbr.rel (0) target = $region13
  $region12: #{sdfnet_forward.1} parent=0 // pred_region
    _
  $region13: #{sdfnet_forward.1} parent=0 // pred_fallthru
    _
  // Predicated region
  $region14: #{sdfnet_forward.1} parent=0 // pred_check
    _
  $region15: #{sdfnet_forward.1} parent=0 // pred_check_branch
    %19 = sbr.rel (0) target = $region17
  $region16: #{sdfnet_forward.1} parent=0 // pred_region
    _
  $region17: #{sdfnet_forward.1} parent=0 // pred_fallthru
    _
  // Predicated region
  $region18: #{sdfnet_forward.1} parent=0 // pred_check
    _
  $region19: #{sdfnet_forward.1} parent=0 // pred_check_branch
    %21 = sbr.rel (0) target = $region21
  $region20: #{sdfnet_forward.1} parent=0 // pred_region
    _
  $region21: #{sdfnet_forward.1} parent=0 // pred_fallthru
    _
  // Predicated region
  $region22: #{sdfnet_forward.1} parent=0 // pred_check
    _
  $region23: #{sdfnet_forward.1} parent=0 // pred_check_branch
    %23 = sbr.rel (0) target = $region25
  $region24: #{sdfnet_forward.1} parent=0 // pred_region
    _
  $region25: #{sdfnet_forward.1} parent=0 // pred_fallthru
    _
  // Predicated region
  $region26: #{sdfnet_forward.1} parent=0 // pred_check
    _
  $region27: #{sdfnet_forward.1} parent=0 // pred_check_branch
    %25 = sbr.rel (0) target = $region29
  $region28: #{sdfnet_forward.1} parent=0 // pred_region
    _
  $region29: #{sdfnet_forward.1} parent=0 // pred_fallthru
    _
  %v27 = vld [vmem:[%s0] sm:$0xff]
  %v28 = vld [vmem:[%s0 + $0x8] sm:$0xff]
  %v29 = vld [vmem:[%s0 + $0x10] sm:$0xff]
  %v30 = vld [vmem:[%s0 + $0x18] sm:$0xff]
  %v31 = vld [vmem:[%s0 + $0x20] sm:$0xff]
  %v32 = vld [vmem:[%s0 + $0x28] sm:$0xff]
  %v33 = vld [vmem:[%s0 + $0x30] sm:$0xff]
  %v34 = vld [vmem:[%s0 + $0x38] sm:$0xff]
  %v35 = vld [vmem:[%s0 + $0x40] sm:$0xff]
  %v36 = vld [vmem:[%s0 + $0x48] sm:$0xff]
  %v37 = vld [vmem:[%s0 + $0x50] sm:$0xff]
  %v38 = vld [vmem:[%s0 + $0x58] sm:$0xff]
  %v39 = vld [vmem:[%s0 + $0x60] sm:$0xff]
  %v40 = vld [vmem:[%s0 + $0x68] sm:$0xff]
  %v41 = vld [vmem:[%s0 + $0x70] sm:$0xff]
  %v42 = vld [vmem:[%s0 + $0x78] sm:$0xff]
  %v43 = vld [vmem:[%s0 + $0x80] sm:$0xff]
  %v44 = vld [vmem:[%s0 + $0x88] sm:$0xff]
  %v45 = vld [vmem:[%s0 + $0x90] sm:$0xff]
  %v46 = vld [vmem:[%s0 + $0x98] sm:$0xff]
  %v47 = vld [vmem:[%s0 + $0xa0] sm:$0xff]
  %v48 = vld [vmem:[%s0 + $0xa8] sm:$0xff]
  %v49 = vld [vmem:[%s0 + $0xb0] sm:$0xff]
  %v50 = vld [vmem:[%s0 + $0xb8] sm:$0xff]
  %v51 = vld [vmem:[%s0 + $0xc0] sm:$0xff]
  %v52 = vld [vmem:[%s0 + $0xc8] sm:$0xff]
  %v53 = vld [vmem:[%s0 + $0xd0] sm:$0xff]
  %v54 = vld [vmem:[%s0 + $0xd8] sm:$0xff]
  %v55 = vld [vmem:[%s0 + $0xe0] sm:$0xff]
  %v56 = vld [vmem:[%s0 + $0xe8] sm:$0xff]
  %v57 = vld [vmem:[%s0 + $0xf0] sm:$0xff]
  %v58 = vld [vmem:[%s0 + $0xf8] sm:$0xff]
  %v59 = vld [vmem:[%s0 + $0x100] sm:$0xff]
  %v60 = vld [vmem:[%s0 + $0x108] sm:$0xff]
  %v61 = vld [vmem:[%s0 + $0x110] sm:$0xff]
  %v62 = vld [vmem:[%s0 + $0x118] sm:$0xff]
  %v63 = vld [vmem:[%s0 + $0x120] sm:$0xff]
  %v64 = vld [vmem:[%s0 + $0x128] sm:$0xff]
  %v65 = vld [vmem:[%s0 + $0x130] sm:$0xff]
  %v66 = vld [vmem:[%s0 + $0x138] sm:$0xff]
  %v67 = vld [vmem:[%s0 + $0x140] sm:$0xff]
  %v68 = vld [vmem:[%s0 + $0x148] sm:$0xff]
  %v69 = vld [vmem:[%s0 + $0x150] sm:$0xff]
  %v70 = vld [vmem:[%s0 + $0x158] sm:$0xff]
  %v71 = vld [vmem:[%s0 + $0x160] sm:$0xff]
  %v72 = vld [vmem:[%s0 + $0x168] sm:$0xff]
  %v73 = vld [vmem:[%s0 + $0x170] sm:$0xff]
  %v74 = vld [vmem:[%s0 + $0x178] sm:$0xff]
  %v75 = vld [vmem:[%s0 + $0x180] sm:$0xff]
  %v76 = vld [vmem:[%s0 + $0x188] sm:$0xff]
  %v77 = vld [vmem:[%s0 + $0x190] sm:$0xff]
  %v78 = vld [vmem:[%s0 + $0x198] sm:$0xff]
  %v79 = vld [vmem:[%s0 + $0x1a0] sm:$0xff]
  %v80 = vld [vmem:[%s0 + $0x1a8] sm:$0xff]
  %v81 = vld [vmem:[%s0 + $0x1b0] sm:$0xff]
  %v82 = vld [vmem:[%s0 + $0x1b8] sm:$0xff]
  %v83 = vld [vmem:[%s0 + $0x1c0] sm:$0xff]
  %v84 = vld [vmem:[%s0 + $0x1c8] sm:$0xff]
  %v85 = vld [vmem:[%s0 + $0x1d0] sm:$0xff]
  %v86 = vld [vmem:[%s0 + $0x1d8] sm:$0xff]
  %v87 = vld [vmem:[%s0 + $0x1e0] sm:$0xff]
  %v88 = vld [vmem:[%s0 + $0x1e8] sm:$0xff]
  %v89 = vld [vmem:[%s0 + $0x1f0] sm:$0xff]
  %v90 = vld [vmem:[%s0 + $0x1f8] sm:$0xff]
  %v91 = vpack.c.bf16 %v29, %v27
  %v92 = vpack.c.bf16 %v30, %v28
  %v93 = vpack.c.bf16 %v33, %v31
  %v94 = vpack.c.bf16 %v34, %v32
  %v95 = vpack.c.bf16 %v37, %v35
  %v96 = vpack.c.bf16 %v38, %v36
  %v97 = vpack.c.bf16 %v41, %v39
  %v98 = vpack.c.bf16 %v42, %v40
  %v99 = vpack.c.bf16 %v45, %v43
  %v100 = vpack.c.bf16 %v46, %v44
  %v101 = vpack.c.bf16 %v49, %v47
  %v102 = vpack.c.bf16 %v50, %v48
  %v103 = vpack.c.bf16 %v53, %v51
  %v104 = vpack.c.bf16 %v54, %v52
  %v105 = vpack.c.bf16 %v57, %v55
  %v106 = vpack.c.bf16 %v58, %v56
  %v107 = vpack.c.bf16 %v61, %v59
  %v108 = vpack.c.bf16 %v62, %v60
  %v109 = vpack.c.bf16 %v65, %v63
  %v110 = vpack.c.bf16 %v66, %v64
  %v111 = vpack.c.bf16 %v69, %v67
  %v112 = vpack.c.bf16 %v70, %v68
  %v113 = vpack.c.bf16 %v73, %v71
  %v114 = vpack.c.bf16 %v74, %v72
  %v115 = vpack.c.bf16 %v77, %v75
  %v116 = vpack.c.bf16 %v78, %v76
  %v117 = vpack.c.bf16 %v81, %v79
  %v118 = vpack.c.bf16 %v82, %v80
  %v119 = vpack.c.bf16 %v85, %v83
  %v120 = vpack.c.bf16 %v86, %v84
  %v121 = vpack.c.bf16 %v89, %v87
  %v122 = vpack.c.bf16 %v90, %v88
  %v123 = vld [vmem:[%s1] sm:$0xff]
  %v124 = vld [vmem:[%s1 + $0x8] sm:$0xff]
  %v125 = vld [vmem:[%s1 + $0x10] sm:$0xff]
  %v126 = vld [vmem:[%s1 + $0x18] sm:$0xff]
  %v127 = vld [vmem:[%s1 + $0x20] sm:$0xff]
  %v128 = vld [vmem:[%s1 + $0x28] sm:$0xff]
  %v129 = vld [vmem:[%s1 + $0x30] sm:$0xff]
  %v130 = vld [vmem:[%s1 + $0x38] sm:$0xff]
  %v131 = vld [vmem:[%s1 + $0x40] sm:$0xff]
  %v132 = vld [vmem:[%s1 + $0x48] sm:$0xff]
  %v133 = vld [vmem:[%s1 + $0x50] sm:$0xff]
  %v134 = vld [vmem:[%s1 + $0x58] sm:$0xff]
  %v135 = vld [vmem:[%s1 + $0x60] sm:$0xff]
  %v136 = vld [vmem:[%s1 + $0x68] sm:$0xff]
  %v137 = vld [vmem:[%s1 + $0x70] sm:$0xff]
  %v138 = vld [vmem:[%s1 + $0x78] sm:$0xff]
  %v139 = vld [vmem:[%s1 + $0x80] sm:$0xff]
  %v140 = vld [vmem:[%s1 + $0x88] sm:$0x33]
  %v141 = vld [vmem:[%s6] ss:$8 sm:$0x3]
  %v143 = vlaneseq
  %v144 = vshrl.u32 %v143, 7
  %v145 = vsub.s32 0, %v144
  %v146 = vrot.slane %v141, %v145
  %v147 = vlaneseq
  %v148 = vshrl.u32 %v147, 7
  %v149 = vsub.s32 1, %v148
  %v150 = vrot.slane %v141, %v149
  %v171 = vunpack.c.l.b16 %v123
  %v172 = vunpack.c.h.b16 %v123
  %v173 = vunpack.c.l.b16 %v124
  %v174 = vunpack.c.h.b16 %v124
  %v175 = vunpack.c.l.b16 %v125
  %v176 = vunpack.c.h.b16 %v125
  %v177 = vunpack.c.l.b16 %v126
  %v178 = vunpack.c.h.b16 %v126
  %v179 = vunpack.c.l.b16 %v127
  %v180 = vunpack.c.h.b16 %v127
  %v181 = vunpack.c.l.b16 %v128
  %v182 = vunpack.c.h.b16 %v128
  %v183 = vunpack.c.l.b16 %v129
  %v184 = vunpack.c.h.b16 %v129
  %v185 = vunpack.c.l.b16 %v130
  %v186 = vunpack.c.h.b16 %v130
  %v187 = vunpack.c.l.b16 %v131
  %v188 = vunpack.c.h.b16 %v131
  %v189 = vunpack.c.l.b16 %v132
  %v190 = vunpack.c.h.b16 %v132
  %v191 = vunpack.c.l.b16 %v133
  %v192 = vunpack.c.h.b16 %v133
  %v193 = vunpack.c.l.b16 %v134
  %v194 = vunpack.c.h.b16 %v134
  %v195 = vunpack.c.l.b16 %v135
  %v196 = vunpack.c.h.b16 %v135
  %v197 = vunpack.c.l.b16 %v136
  %v198 = vunpack.c.h.b16 %v136
  %v199 = vunpack.c.l.b16 %v137
  %v200 = vunpack.c.h.b16 %v137
  %v201 = vunpack.c.l.b16 %v138
  %v202 = vunpack.c.h.b16 %v138
  %v203 = vunpack.c.l.b16 %v139
  %v204 = vunpack.c.h.b16 %v139
  %v205 = vunpack.c.l.b16 %v140
  %v206 = vunpack.c.h.b16 %v140
  %v207 = vpack.c.b16 %v173, %v171
  %v208 = vpack.c.b16 %v174, %v172
  %v209 = vpack.c.b16 %v177, %v175
  %v210 = vpack.c.b16 %v178, %v176
  %v211 = vpack.c.b16 %v181, %v179
  %v212 = vpack.c.b16 %v182, %v180
  %v213 = vpack.c.b16 %v185, %v183
  %v214 = vpack.c.b16 %v186, %v184
  %v215 = vpack.c.b16 %v189, %v187
  %v216 = vpack.c.b16 %v190, %v188
  %v217 = vpack.c.b16 %v193, %v191
  %v218 = vpack.c.b16 %v194, %v192
  %v219 = vpack.c.b16 %v197, %v195
  %v220 = vpack.c.b16 %v198, %v196
  %v221 = vpack.c.b16 %v201, %v199
  %v222 = vpack.c.b16 %v202, %v200
  %v223 = vpack.c.b16 %v205, %v203
  %v224 = vpack.c.b16 %v206, %v204
  %vm241 = vcmask 97280
  %v243 = vsel %vm241, %v92, 0
  %v246 = vsel %vm241, %v94, 0
  %v249 = vsel %vm241, %v96, 0
  %v252 = vsel %vm241, %v98, 0
  %v255 = vsel %vm241, %v100, 0
  %v258 = vsel %vm241, %v102, 0
  %v261 = vsel %vm241, %v104, 0
  %v264 = vsel %vm241, %v106, 0
  %v267 = vsel %vm241, %v108, 0
  %v270 = vsel %vm241, %v110, 0
  %v273 = vsel %vm241, %v112, 0
  %v276 = vsel %vm241, %v114, 0
  %v279 = vsel %vm241, %v116, 0
  %v282 = vsel %vm241, %v118, 0
  %v285 = vsel %vm241, %v120, 0
  %v288 = vsel %vm241, %v122, 0
  %vm290 = vcmask 1045504
  %v292 = vsel %vm290, %v223, 0
  %v295 = vsel %vm290, %v224, 0
  %297 = vmatprep.subr.bf16.mxu0 %v222
  %298 = vmatpush1.bf16.msra.mxu0 %v221
  %299 = vmatprep.subr.bf16.mxu0 %v220
  %300 = vmatpush1.bf16.msra.mxu0 %v219
  %301 = vmatprep.subr.bf16.mxu0 %v218
  %302 = vmatpush1.bf16.msra.mxu0 %v217
  %303 = vmatprep.subr.bf16.mxu0 %v216
  %304 = vmatpush1.bf16.msra.mxu0 %v215
  %305 = vmatprep.subr.bf16.mxu0 %v214
  %306 = vmatpush1.bf16.msra.mxu0 %v213
  %307 = vmatprep.subr.bf16.mxu0 %v212
  %308 = vmatpush1.bf16.msra.mxu0 %v211
  %309 = vmatprep.subr.bf16.mxu0 %v210
  %310 = vmatpush1.bf16.msra.mxu0 %v209
  %311 = vmatprep.subr.bf16.mxu0 %v208
  %312 = vmatpush1.bf16.msra.mxu0 %v207
  %313 = vmatprep.subr.bf16.mxu0 0
  %314 = vmatpush2.bf16.msra.mxu0 0
  %315 = vmatprep.subr.bf16.mxu0 0
  %316 = vmatpush2.bf16.msra.mxu0 0
  %317 = vmatprep.subr.bf16.mxu0 0
  %318 = vmatpush2.bf16.msra.mxu0 0
  %319 = vmatprep.subr.bf16.mxu0 0
  %320 = vmatpush2.bf16.msra.mxu0 0
  %321 = vmatprep.subr.bf16.mxu0 0
  %322 = vmatpush2.bf16.msra.mxu0 0
  %323 = vmatprep.subr.bf16.mxu0 0
  %324 = vmatpush2.bf16.msra.mxu0 0
  %325 = vmatprep.subr.bf16.mxu0 0
  %326 = vmatpush2.bf16.msra.mxu0 0
  %327 = vmatprep.subr.bf16.mxu0 %v295
  %328 = vmatpush2.bf16.msra.mxu0 %v292
  %329 = vmatprep.mubr.bf16.mxu0 %v243
  %330 = vmatmul.mubr.bf16.gmra.mxu0 %v91
  %v331 = vpop.f32.mrf.mxu0
  %v332 = vadd.f32 %v146, %v331
  %v333 = vpop.f32.mrf.mxu0
  %v334 = vadd.f32 %v150, %v333
  %v335 = vpop.f32.mrf.mxu0
  %v336 = vadd.f32 %v146, %v335
  %v337 = vpop.f32.mrf.mxu0
  %v338 = vadd.f32 %v150, %v337
  %339 = vmatprep.mubr.bf16.mxu0 %v246
  %340 = vmatmul.mubr.bf16.gmra.mxu0 %v93
  %v341 = vpop.f32.mrf.mxu0
  %v342 = vadd.f32 %v146, %v341
  %v343 = vpop.f32.mrf.mxu0
  %v344 = vadd.f32 %v150, %v343
  %v345 = vpop.f32.mrf.mxu0
  %v346 = vadd.f32 %v146, %v345
  %v347 = vpop.f32.mrf.mxu0
  %v348 = vadd.f32 %v150, %v347
  %349 = vmatprep.mubr.bf16.mxu0 %v249
  %350 = vmatmul.mubr.bf16.gmra.mxu0 %v95
  %v351 = vpop.f32.mrf.mxu0
  %v352 = vadd.f32 %v146, %v351
  %v353 = vpop.f32.mrf.mxu0
  %v354 = vadd.f32 %v150, %v353
  %v355 = vpop.f32.mrf.mxu0
  %v356 = vadd.f32 %v146, %v355
  %v357 = vpop.f32.mrf.mxu0
  %v358 = vadd.f32 %v150, %v357
  %359 = vmatprep.mubr.bf16.mxu0 %v252
  %360 = vmatmul.mubr.bf16.gmra.mxu0 %v97
  %v361 = vpop.f32.mrf.mxu0
  %v362 = vadd.f32 %v146, %v361
  %v363 = vpop.f32.mrf.mxu0
  %v364 = vadd.f32 %v150, %v363
  %v365 = vpop.f32.mrf.mxu0
  %v366 = vadd.f32 %v146, %v365
  %v367 = vpop.f32.mrf.mxu0
  %v368 = vadd.f32 %v150, %v367
  %369 = vmatprep.mubr.bf16.mxu0 %v255
  %370 = vmatmul.mubr.bf16.gmra.mxu0 %v99
  %v371 = vpop.f32.mrf.mxu0
  %v372 = vadd.f32 %v146, %v371
  %v373 = vpop.f32.mrf.mxu0
  %v374 = vadd.f32 %v150, %v373
  %v375 = vpop.f32.mrf.mxu0
  %v376 = vadd.f32 %v146, %v375
  %v377 = vpop.f32.mrf.mxu0
  %v378 = vadd.f32 %v150, %v377
  %379 = vmatprep.mubr.bf16.mxu0 %v258
  %380 = vmatmul.mubr.bf16.gmra.mxu0 %v101
  %v381 = vpop.f32.mrf.mxu0
  %v382 = vadd.f32 %v146, %v381
  %v383 = vpop.f32.mrf.mxu0
  %v384 = vadd.f32 %v150, %v383
  %v385 = vpop.f32.mrf.mxu0
  %v386 = vadd.f32 %v146, %v385
  %v387 = vpop.f32.mrf.mxu0
  %v388 = vadd.f32 %v150, %v387
  %389 = vmatprep.mubr.bf16.mxu0 %v261
  %390 = vmatmul.mubr.bf16.gmra.mxu0 %v103
  %v391 = vpop.f32.mrf.mxu0
  %v392 = vadd.f32 %v146, %v391
  %v393 = vpop.f32.mrf.mxu0
  %v394 = vadd.f32 %v150, %v393
  %v395 = vpop.f32.mrf.mxu0
  %v396 = vadd.f32 %v146, %v395
  %v397 = vpop.f32.mrf.mxu0
  %v398 = vadd.f32 %v150, %v397
  %399 = vmatprep.mubr.bf16.mxu0 %v264
  %400 = vmatmul.mubr.bf16.gmra.mxu0 %v105
  %v401 = vpop.f32.mrf.mxu0
  %v402 = vadd.f32 %v146, %v401
  %v403 = vpop.f32.mrf.mxu0
  %v404 = vadd.f32 %v150, %v403
  %v405 = vpop.f32.mrf.mxu0
  %v406 = vadd.f32 %v146, %v405
  %v407 = vpop.f32.mrf.mxu0
  %v408 = vadd.f32 %v150, %v407
  %409 = vmatprep.mubr.bf16.mxu0 %v267
  %410 = vmatmul.mubr.bf16.gmra.mxu0 %v107
  %v411 = vpop.f32.mrf.mxu0
  %v412 = vadd.f32 %v146, %v411
  %v413 = vpop.f32.mrf.mxu0
  %v414 = vadd.f32 %v150, %v413
  %v415 = vpop.f32.mrf.mxu0
  %v416 = vadd.f32 %v146, %v415
  %v417 = vpop.f32.mrf.mxu0
  %v418 = vadd.f32 %v150, %v417
  %419 = vmatprep.mubr.bf16.mxu0 %v270
  %420 = vmatmul.mubr.bf16.gmra.mxu0 %v109
  %v421 = vpop.f32.mrf.mxu0
  %v422 = vadd.f32 %v146, %v421
  %v423 = vpop.f32.mrf.mxu0
  %v424 = vadd.f32 %v150, %v423
  %v425 = vpop.f32.mrf.mxu0
  %v426 = vadd.f32 %v146, %v425
  %v427 = vpop.f32.mrf.mxu0
  %v428 = vadd.f32 %v150, %v427
  %429 = vmatprep.mubr.bf16.mxu0 %v273
  %430 = vmatmul.mubr.bf16.gmra.mxu0 %v111
  %v431 = vpop.f32.mrf.mxu0
  %v432 = vadd.f32 %v146, %v431
  %v433 = vpop.f32.mrf.mxu0
  %v434 = vadd.f32 %v150, %v433
  %v435 = vpop.f32.mrf.mxu0
  %v436 = vadd.f32 %v146, %v435
  %v437 = vpop.f32.mrf.mxu0
  %v438 = vadd.f32 %v150, %v437
  %439 = vmatprep.mubr.bf16.mxu0 %v276
  %440 = vmatmul.mubr.bf16.gmra.mxu0 %v113
  %v441 = vpop.f32.mrf.mxu0
  %v442 = vadd.f32 %v146, %v441
  %v443 = vpop.f32.mrf.mxu0
  %v444 = vadd.f32 %v150, %v443
  %v445 = vpop.f32.mrf.mxu0
  %v446 = vadd.f32 %v146, %v445
  %v447 = vpop.f32.mrf.mxu0
  %v448 = vadd.f32 %v150, %v447
  %449 = vmatprep.mubr.bf16.mxu0 %v279
  %450 = vmatmul.mubr.bf16.gmra.mxu0 %v115
  %v451 = vpop.f32.mrf.mxu0
  %v452 = vadd.f32 %v146, %v451
  %v453 = vpop.f32.mrf.mxu0
  %v454 = vadd.f32 %v150, %v453
  %v455 = vpop.f32.mrf.mxu0
  %v456 = vadd.f32 %v146, %v455
  %v457 = vpop.f32.mrf.mxu0
  %v458 = vadd.f32 %v150, %v457
  %459 = vmatprep.mubr.bf16.mxu0 %v282
  %460 = vmatmul.mubr.bf16.gmra.mxu0 %v117
  %v461 = vpop.f32.mrf.mxu0
  %v462 = vadd.f32 %v146, %v461
  %v463 = vpop.f32.mrf.mxu0
  %v464 = vadd.f32 %v150, %v463
  %v465 = vpop.f32.mrf.mxu0
  %v466 = vadd.f32 %v146, %v465
  %v467 = vpop.f32.mrf.mxu0
  %v468 = vadd.f32 %v150, %v467
  %469 = vmatprep.mubr.bf16.mxu0 %v285
  %470 = vmatmul.mubr.bf16.gmra.mxu0 %v119
  %v471 = vpop.f32.mrf.mxu0
  %v472 = vadd.f32 %v146, %v471
  %v473 = vpop.f32.mrf.mxu0
  %v474 = vadd.f32 %v150, %v473
  %v475 = vpop.f32.mrf.mxu0
  %v476 = vadd.f32 %v146, %v475
  %v477 = vpop.f32.mrf.mxu0
  %v478 = vadd.f32 %v150, %v477
  %479 = vmatprep.mubr.bf16.mxu0 %v288
  %480 = vmatmul.mubr.bf16.gmra.mxu0 %v121
  %v481 = vpop.f32.mrf.mxu0
  %v482 = vadd.f32 %v146, %v481
  %v483 = vpop.f32.mrf.mxu0
  %v484 = vadd.f32 %v150, %v483
  %v485 = vpop.f32.mrf.mxu0
  %v486 = vadd.f32 %v146, %v485
  %v487 = vpop.f32.mrf.mxu0
  %v488 = vadd.f32 %v150, %v487
  %489 = vdwg.mxu0
  %v490 = vmax.f32 %v332, 0.0
  %v491 = vmax.f32 %v334, 0.0
  %v492 = vmax.f32 %v336, 0.0
  %v493 = vmax.f32 %v338, 0.0
  %v494 = vmax.f32 %v342, 0.0
  %v495 = vmax.f32 %v344, 0.0
  %v496 = vmax.f32 %v346, 0.0
  %v497 = vmax.f32 %v348, 0.0
  %v498 = vmax.f32 %v352, 0.0
  %v499 = vmax.f32 %v354, 0.0
  %v500 = vmax.f32 %v356, 0.0
  %v501 = vmax.f32 %v358, 0.0
  %v502 = vmax.f32 %v362, 0.0
  %v503 = vmax.f32 %v364, 0.0
  %v504 = vmax.f32 %v366, 0.0
  %v505 = vmax.f32 %v368, 0.0
  %v506 = vmax.f32 %v372, 0.0
  %v507 = vmax.f32 %v374, 0.0
  %v508 = vmax.f32 %v376, 0.0
  %v509 = vmax.f32 %v378, 0.0
  %v510 = vmax.f32 %v382, 0.0
  %v511 = vmax.f32 %v384, 0.0
  %v512 = vmax.f32 %v386, 0.0
  %v513 = vmax.f32 %v388, 0.0
  %v514 = vmax.f32 %v392, 0.0
  %v515 = vmax.f32 %v394, 0.0
  %v516 = vmax.f32 %v396, 0.0
  %v517 = vmax.f32 %v398, 0.0
  %v518 = vmax.f32 %v402, 0.0
  %v519 = vmax.f32 %v404, 0.0
  %v520 = vmax.f32 %v406, 0.0
  %v521 = vmax.f32 %v408, 0.0
  %v522 = vmax.f32 %v412, 0.0
  %v523 = vmax.f32 %v414, 0.0
  %v524 = vmax.f32 %v416, 0.0
  %v525 = vmax.f32 %v418, 0.0
  %v526 = vmax.f32 %v422, 0.0
  %v527 = vmax.f32 %v424, 0.0
  %v528 = vmax.f32 %v426, 0.0
  %v529 = vmax.f32 %v428, 0.0
  %v530 = vmax.f32 %v432, 0.0
  %v531 = vmax.f32 %v434, 0.0
  %v532 = vmax.f32 %v436, 0.0
  %v533 = vmax.f32 %v438, 0.0
  %v534 = vmax.f32 %v442, 0.0
  %v535 = vmax.f32 %v444, 0.0
  %v536 = vmax.f32 %v446, 0.0
  %v537 = vmax.f32 %v448, 0.0
  %v538 = vmax.f32 %v452, 0.0
  %v539 = vmax.f32 %v454, 0.0
  %v540 = vmax.f32 %v456, 0.0
  %v541 = vmax.f32 %v458, 0.0
  %v542 = vmax.f32 %v462, 0.0
  %v543 = vmax.f32 %v464, 0.0
  %v544 = vmax.f32 %v466, 0.0
  %v545 = vmax.f32 %v468, 0.0
  %v546 = vmax.f32 %v472, 0.0
  %v547 = vmax.f32 %v474, 0.0
  %v548 = vmax.f32 %v476, 0.0
  %v549 = vmax.f32 %v478, 0.0
  %v550 = vmax.f32 %v482, 0.0
  %v551 = vmax.f32 %v484, 0.0
  %v552 = vmax.f32 %v486, 0.0
  %v553 = vmax.f32 %v488, 0.0
  %v554 = vpack.c.bf16 %v492, %v490
  %v555 = vpack.c.bf16 %v493, %v491
  %v556 = vpack.c.bf16 %v496, %v494
  %v557 = vpack.c.bf16 %v497, %v495
  %v558 = vpack.c.bf16 %v500, %v498
  %v559 = vpack.c.bf16 %v501, %v499
  %v560 = vpack.c.bf16 %v504, %v502
  %v561 = vpack.c.bf16 %v505, %v503
  %v562 = vpack.c.bf16 %v508, %v506
  %v563 = vpack.c.bf16 %v509, %v507
  %v564 = vpack.c.bf16 %v512, %v510
  %v565 = vpack.c.bf16 %v513, %v511
  %v566 = vpack.c.bf16 %v516, %v514
  %v567 = vpack.c.bf16 %v517, %v515
  %v568 = vpack.c.bf16 %v520, %v518
  %v569 = vpack.c.bf16 %v521, %v519
  %v570 = vpack.c.bf16 %v524, %v522
  %v571 = vpack.c.bf16 %v525, %v523
  %v572 = vpack.c.bf16 %v528, %v526
  %v573 = vpack.c.bf16 %v529, %v527
  %v574 = vpack.c.bf16 %v532, %v530
  %v575 = vpack.c.bf16 %v533, %v531
  %v576 = vpack.c.bf16 %v536, %v534
  %v577 = vpack.c.bf16 %v537, %v535
  %v578 = vpack.c.bf16 %v540, %v538
  %v579 = vpack.c.bf16 %v541, %v539
  %v580 = vpack.c.bf16 %v544, %v542
  %v581 = vpack.c.bf16 %v545, %v543
  %v582 = vpack.c.bf16 %v548, %v546
  %v583 = vpack.c.bf16 %v549, %v547
  %v584 = vpack.c.bf16 %v552, %v550
  %v585 = vpack.c.bf16 %v553, %v551
  %v586 = vld [vmem:[%s2] sm:$0xff]
  %v587 = vld [vmem:[%s2 + $0x8] sm:$0xff]
  %v588 = vld [vmem:[%s2 + $0x10] sm:$0xff]
  %v589 = vld [vmem:[%s2 + $0x18] sm:$0xff]
  %v590 = vld [vmem:[%s2 + $0x20] sm:$0xff]
  %v591 = vld [vmem:[%s2 + $0x28] sm:$0xff]
  %v592 = vld [vmem:[%s2 + $0x30] sm:$0xff]
  %v593 = vld [vmem:[%s2 + $0x38] sm:$0xff]
  %v594 = vld [vmem:[%s2 + $0x40] sm:$0xff]
  %v595 = vld [vmem:[%s2 + $0x48] sm:$0xff]
  %v596 = vld [vmem:[%s2 + $0x50] sm:$0xff]
  %v597 = vld [vmem:[%s2 + $0x58] sm:$0xff]
  %v598 = vld [vmem:[%s2 + $0x60] sm:$0xff]
  %v599 = vld [vmem:[%s2 + $0x68] sm:$0xff]
  %v600 = vld [vmem:[%s2 + $0x70] sm:$0xff]
  %v601 = vld [vmem:[%s2 + $0x78] sm:$0xff]
  %v602 = vld [vmem:[%s2 + $0x80] sm:$0xff]
  %v603 = vld [vmem:[%s2 + $0x88] sm:$0xff]
  %v604 = vld [vmem:[%s2 + $0x90] sm:$0xff]
  %v605 = vld [vmem:[%s2 + $0x98] sm:$0xff]
  %v606 = vld [vmem:[%s2 + $0xa0] sm:$0xff]
  %v607 = vld [vmem:[%s2 + $0xa8] sm:$0xff]
  %v608 = vld [vmem:[%s2 + $0xb0] sm:$0xff]
  %v609 = vld [vmem:[%s2 + $0xb8] sm:$0xff]
  %v610 = vld [vmem:[%s2 + $0xc0] sm:$0xff]
  %v611 = vld [vmem:[%s2 + $0xc8] sm:$0xff]
  %v612 = vld [vmem:[%s2 + $0xd0] sm:$0xff]
  %v613 = vld [vmem:[%s2 + $0xd8] sm:$0xff]
  %v614 = vld [vmem:[%s2 + $0xe0] sm:$0xff]
  %v615 = vld [vmem:[%s2 + $0xe8] sm:$0xff]
  %v616 = vld [vmem:[%s2 + $0xf0] sm:$0xff]
  %v617 = vld [vmem:[%s2 + $0xf8] sm:$0xff]
  %s618 = scalar_lea.vmem %s6, 1
  %v619 = vld [vmem:[%s618] ss:$8 sm:$0x3]
  %v621 = vlaneseq
  %v622 = vshrl.u32 %v621, 7
  %v623 = vsub.s32 0, %v622
  %v624 = vrot.slane %v619, %v623
  %v625 = vlaneseq
  %v626 = vshrl.u32 %v625, 7
  %v627 = vsub.s32 1, %v626
  %v628 = vrot.slane %v619, %v627
  %v663 = vunpack.c.l.b16 %v586
  %v664 = vunpack.c.h.b16 %v586
  %v665 = vunpack.c.l.b16 %v587
  %v666 = vunpack.c.h.b16 %v587
  %v667 = vunpack.c.l.b16 %v588
  %v668 = vunpack.c.h.b16 %v588
  %v669 = vunpack.c.l.b16 %v589
  %v670 = vunpack.c.h.b16 %v589
  %v671 = vunpack.c.l.b16 %v590
  %v672 = vunpack.c.h.b16 %v590
  %v673 = vunpack.c.l.b16 %v591
  %v674 = vunpack.c.h.b16 %v591
  %v675 = vunpack.c.l.b16 %v592
  %v676 = vunpack.c.h.b16 %v592
  %v677 = vunpack.c.l.b16 %v593
  %v678 = vunpack.c.h.b16 %v593
  %v679 = vunpack.c.l.b16 %v594
  %v680 = vunpack.c.h.b16 %v594
  %v681 = vunpack.c.l.b16 %v595
  %v682 = vunpack.c.h.b16 %v595
  %v683 = vunpack.c.l.b16 %v596
  %v684 = vunpack.c.h.b16 %v596
  %v685 = vunpack.c.l.b16 %v597
  %v686 = vunpack.c.h.b16 %v597
  %v687 = vunpack.c.l.b16 %v598
  %v688 = vunpack.c.h.b16 %v598
  %v689 = vunpack.c.l.b16 %v599
  %v690 = vunpack.c.h.b16 %v599
  %v691 = vunpack.c.l.b16 %v600
  %v692 = vunpack.c.h.b16 %v600
  %v693 = vunpack.c.l.b16 %v601
  %v694 = vunpack.c.h.b16 %v601
  %v695 = vunpack.c.l.b16 %v602
  %v696 = vunpack.c.h.b16 %v602
  %v697 = vunpack.c.l.b16 %v603
  %v698 = vunpack.c.h.b16 %v603
  %v699 = vunpack.c.l.b16 %v604
  %v700 = vunpack.c.h.b16 %v604
  %v701 = vunpack.c.l.b16 %v605
  %v702 = vunpack.c.h.b16 %v605
  %v703 = vunpack.c.l.b16 %v606
  %v704 = vunpack.c.h.b16 %v606
  %v705 = vunpack.c.l.b16 %v607
  %v706 = vunpack.c.h.b16 %v607
  %v707 = vunpack.c.l.b16 %v608
  %v708 = vunpack.c.h.b16 %v608
  %v709 = vunpack.c.l.b16 %v609
  %v710 = vunpack.c.h.b16 %v609
  %v711 = vunpack.c.l.b16 %v610
  %v712 = vunpack.c.h.b16 %v610
  %v713 = vunpack.c.l.b16 %v611
  %v714 = vunpack.c.h.b16 %v611
  %v715 = vunpack.c.l.b16 %v612
  %v716 = vunpack.c.h.b16 %v612
  %v717 = vunpack.c.l.b16 %v613
  %v718 = vunpack.c.h.b16 %v613
  %v719 = vunpack.c.l.b16 %v614
  %v720 = vunpack.c.h.b16 %v614
  %v721 = vunpack.c.l.b16 %v615
  %v722 = vunpack.c.h.b16 %v615
  %v723 = vunpack.c.l.b16 %v616
  %v724 = vunpack.c.h.b16 %v616
  %v725 = vunpack.c.l.b16 %v617
  %v726 = vunpack.c.h.b16 %v617
  %v727 = vpack.c.b16 %v665, %v663
  %v728 = vpack.c.b16 %v666, %v664
  %v729 = vpack.c.b16 %v669, %v667
  %v730 = vpack.c.b16 %v670, %v668
  %v731 = vpack.c.b16 %v673, %v671
  %v732 = vpack.c.b16 %v674, %v672
  %v733 = vpack.c.b16 %v677, %v675
  %v734 = vpack.c.b16 %v678, %v676
  %v735 = vpack.c.b16 %v681, %v679
  %v736 = vpack.c.b16 %v682, %v680
  %v737 = vpack.c.b16 %v685, %v683
  %v738 = vpack.c.b16 %v686, %v684
  %v739 = vpack.c.b16 %v689, %v687
  %v740 = vpack.c.b16 %v690, %v688
  %v741 = vpack.c.b16 %v693, %v691
  %v742 = vpack.c.b16 %v694, %v692
  %v743 = vpack.c.b16 %v697, %v695
  %v744 = vpack.c.b16 %v698, %v696
  %v745 = vpack.c.b16 %v701, %v699
  %v746 = vpack.c.b16 %v702, %v700
  %v747 = vpack.c.b16 %v705, %v703
  %v748 = vpack.c.b16 %v706, %v704
  %v749 = vpack.c.b16 %v709, %v707
  %v750 = vpack.c.b16 %v710, %v708
  %v751 = vpack.c.b16 %v713, %v711
  %v752 = vpack.c.b16 %v714, %v712
  %v753 = vpack.c.b16 %v717, %v715
  %v754 = vpack.c.b16 %v718, %v716
  %v755 = vpack.c.b16 %v721, %v719
  %v756 = vpack.c.b16 %v722, %v720
  %v757 = vpack.c.b16 %v725, %v723
  %v758 = vpack.c.b16 %v726, %v724
  %791 = vmatprep.subr.bf16.mxu0 %v742
  %792 = vmatpush1.bf16.msra.mxu0 %v741
  %793 = vmatprep.subr.bf16.mxu0 %v740
  %794 = vmatpush1.bf16.msra.mxu0 %v739
  %795 = vmatprep.subr.bf16.mxu0 %v738
  %796 = vmatpush1.bf16.msra.mxu0 %v737
  %797 = vmatprep.subr.bf16.mxu0 %v736
  %798 = vmatpush1.bf16.msra.mxu0 %v735
  %799 = vmatprep.subr.bf16.mxu0 %v734
  %800 = vmatpush1.bf16.msra.mxu0 %v733
  %801 = vmatprep.subr.bf16.mxu0 %v732
  %802 = vmatpush1.bf16.msra.mxu0 %v731
  %803 = vmatprep.subr.bf16.mxu0 %v730
  %804 = vmatpush1.bf16.msra.mxu0 %v729
  %805 = vmatprep.subr.bf16.mxu0 %v728
  %806 = vmatpush1.bf16.msra.mxu0 %v727
  %807 = vmatprep.subr.bf16.mxu0 %v758
  %808 = vmatpush2.bf16.msra.mxu0 %v757
  %809 = vmatprep.subr.bf16.mxu0 %v756
  %810 = vmatpush2.bf16.msra.mxu0 %v755
  %811 = vmatprep.subr.bf16.mxu0 %v754
  %812 = vmatpush2.bf16.msra.mxu0 %v753
  %813 = vmatprep.subr.bf16.mxu0 %v752
  %814 = vmatpush2.bf16.msra.mxu0 %v751
  %815 = vmatprep.subr.bf16.mxu0 %v750
  %816 = vmatpush2.bf16.msra.mxu0 %v749
  %817 = vmatprep.subr.bf16.mxu0 %v748
  %818 = vmatpush2.bf16.msra.mxu0 %v747
  %819 = vmatprep.subr.bf16.mxu0 %v746
  %820 = vmatpush2.bf16.msra.mxu0 %v745
  %821 = vmatprep.subr.bf16.mxu0 %v744
  %822 = vmatpush2.bf16.msra.mxu0 %v743
  %823 = vmatprep.mubr.bf16.mxu0 %v555
  %824 = vmatmul.mubr.bf16.gmra.mxu0 %v554
  %v825 = vpop.f32.mrf.mxu0
  %v826 = vadd.f32 %v624, %v825
  %v827 = vpop.f32.mrf.mxu0
  %v828 = vadd.f32 %v628, %v827
  %v829 = vpop.f32.mrf.mxu0
  %v830 = vadd.f32 %v624, %v829
  %v831 = vpop.f32.mrf.mxu0
  %v832 = vadd.f32 %v628, %v831
  %833 = vmatprep.mubr.bf16.mxu0 %v557
  %834 = vmatmul.mubr.bf16.gmra.mxu0 %v556
  %v835 = vpop.f32.mrf.mxu0
  %v836 = vadd.f32 %v624, %v835
  %v837 = vpop.f32.mrf.mxu0
  %v838 = vadd.f32 %v628, %v837
  %v839 = vpop.f32.mrf.mxu0
  %v840 = vadd.f32 %v624, %v839
  %v841 = vpop.f32.mrf.mxu0
  %v842 = vadd.f32 %v628, %v841
  %843 = vmatprep.mubr.bf16.mxu0 %v559
  %844 = vmatmul.mubr.bf16.gmra.mxu0 %v558
  %v845 = vpop.f32.mrf.mxu0
  %v846 = vadd.f32 %v624, %v845
  %v847 = vpop.f32.mrf.mxu0
  %v848 = vadd.f32 %v628, %v847
  %v849 = vpop.f32.mrf.mxu0
  %v850 = vadd.f32 %v624, %v849
  %v851 = vpop.f32.mrf.mxu0
  %v852 = vadd.f32 %v628, %v851
  %853 = vmatprep.mubr.bf16.mxu0 %v561
  %854 = vmatmul.mubr.bf16.gmra.mxu0 %v560
  %v855 = vpop.f32.mrf.mxu0
  %v856 = vadd.f32 %v624, %v855
  %v857 = vpop.f32.mrf.mxu0
  %v858 = vadd.f32 %v628, %v857
  %v859 = vpop.f32.mrf.mxu0
  %v860 = vadd.f32 %v624, %v859
  %v861 = vpop.f32.mrf.mxu0
  %v862 = vadd.f32 %v628, %v861
  %863 = vmatprep.mubr.bf16.mxu0 %v563
  %864 = vmatmul.mubr.bf16.gmra.mxu0 %v562
  %v865 = vpop.f32.mrf.mxu0
  %v866 = vadd.f32 %v624, %v865
  %v867 = vpop.f32.mrf.mxu0
  %v868 = vadd.f32 %v628, %v867
  %v869 = vpop.f32.mrf.mxu0
  %v870 = vadd.f32 %v624, %v869
  %v871 = vpop.f32.mrf.mxu0
  %v872 = vadd.f32 %v628, %v871
  %873 = vmatprep.mubr.bf16.mxu0 %v565
  %874 = vmatmul.mubr.bf16.gmra.mxu0 %v564
  %v875 = vpop.f32.mrf.mxu0
  %v876 = vadd.f32 %v624, %v875
  %v877 = vpop.f32.mrf.mxu0
  %v878 = vadd.f32 %v628, %v877
  %v879 = vpop.f32.mrf.mxu0
  %v880 = vadd.f32 %v624, %v879
  %v881 = vpop.f32.mrf.mxu0
  %v882 = vadd.f32 %v628, %v881
  %883 = vmatprep.mubr.bf16.mxu0 %v567
  %884 = vmatmul.mubr.bf16.gmra.mxu0 %v566
  %v885 = vpop.f32.mrf.mxu0
  %v886 = vadd.f32 %v624, %v885
  %v887 = vpop.f32.mrf.mxu0
  %v888 = vadd.f32 %v628, %v887
  %v889 = vpop.f32.mrf.mxu0
  %v890 = vadd.f32 %v624, %v889
  %v891 = vpop.f32.mrf.mxu0
  %v892 = vadd.f32 %v628, %v891
  %893 = vmatprep.mubr.bf16.mxu0 %v569
  %894 = vmatmul.mubr.bf16.gmra.mxu0 %v568
  %v895 = vpop.f32.mrf.mxu0
  %v896 = vadd.f32 %v624, %v895
  %v897 = vpop.f32.mrf.mxu0
  %v898 = vadd.f32 %v628, %v897
  %v899 = vpop.f32.mrf.mxu0
  %v900 = vadd.f32 %v624, %v899
  %v901 = vpop.f32.mrf.mxu0
  %v902 = vadd.f32 %v628, %v901
  %903 = vmatprep.mubr.bf16.mxu0 %v571
  %904 = vmatmul.mubr.bf16.gmra.mxu0 %v570
  %v905 = vpop.f32.mrf.mxu0
  %v906 = vadd.f32 %v624, %v905
  %v907 = vpop.f32.mrf.mxu0
  %v908 = vadd.f32 %v628, %v907
  %v909 = vpop.f32.mrf.mxu0
  %v910 = vadd.f32 %v624, %v909
  %v911 = vpop.f32.mrf.mxu0
  %v912 = vadd.f32 %v628, %v911
  %913 = vmatprep.mubr.bf16.mxu0 %v573
  %914 = vmatmul.mubr.bf16.gmra.mxu0 %v572
  %v915 = vpop.f32.mrf.mxu0
  %v916 = vadd.f32 %v624, %v915
  %v917 = vpop.f32.mrf.mxu0
  %v918 = vadd.f32 %v628, %v917
  %v919 = vpop.f32.mrf.mxu0
  %v920 = vadd.f32 %v624, %v919
  %v921 = vpop.f32.mrf.mxu0
  %v922 = vadd.f32 %v628, %v921
  %923 = vmatprep.mubr.bf16.mxu0 %v575
  %924 = vmatmul.mubr.bf16.gmra.mxu0 %v574
  %v925 = vpop.f32.mrf.mxu0
  %v926 = vadd.f32 %v624, %v925
  %v927 = vpop.f32.mrf.mxu0
  %v928 = vadd.f32 %v628, %v927
  %v929 = vpop.f32.mrf.mxu0
  %v930 = vadd.f32 %v624, %v929
  %v931 = vpop.f32.mrf.mxu0
  %v932 = vadd.f32 %v628, %v931
  %933 = vmatprep.mubr.bf16.mxu0 %v577
  %934 = vmatmul.mubr.bf16.gmra.mxu0 %v576
  %v935 = vpop.f32.mrf.mxu0
  %v936 = vadd.f32 %v624, %v935
  %v937 = vpop.f32.mrf.mxu0
  %v938 = vadd.f32 %v628, %v937
  %v939 = vpop.f32.mrf.mxu0
  %v940 = vadd.f32 %v624, %v939
  %v941 = vpop.f32.mrf.mxu0
  %v942 = vadd.f32 %v628, %v941
  %943 = vmatprep.mubr.bf16.mxu0 %v579
  %944 = vmatmul.mubr.bf16.gmra.mxu0 %v578
  %v945 = vpop.f32.mrf.mxu0
  %v946 = vadd.f32 %v624, %v945
  %v947 = vpop.f32.mrf.mxu0
  %v948 = vadd.f32 %v628, %v947
  %v949 = vpop.f32.mrf.mxu0
  %v950 = vadd.f32 %v624, %v949
  %v951 = vpop.f32.mrf.mxu0
  %v952 = vadd.f32 %v628, %v951
  %953 = vmatprep.mubr.bf16.mxu0 %v581
  %954 = vmatmul.mubr.bf16.gmra.mxu0 %v580
  %v955 = vpop.f32.mrf.mxu0
  %v956 = vadd.f32 %v624, %v955
  %v957 = vpop.f32.mrf.mxu0
  %v958 = vadd.f32 %v628, %v957
  %v959 = vpop.f32.mrf.mxu0
  %v960 = vadd.f32 %v624, %v959
  %v961 = vpop.f32.mrf.mxu0
  %v962 = vadd.f32 %v628, %v961
  %963 = vmatprep.mubr.bf16.mxu0 %v583
  %964 = vmatmul.mubr.bf16.gmra.mxu0 %v582
  %v965 = vpop.f32.mrf.mxu0
  %v966 = vadd.f32 %v624, %v965
  %v967 = vpop.f32.mrf.mxu0
  %v968 = vadd.f32 %v628, %v967
  %v969 = vpop.f32.mrf.mxu0
  %v970 = vadd.f32 %v624, %v969
  %v971 = vpop.f32.mrf.mxu0
  %v972 = vadd.f32 %v628, %v971
  %973 = vmatprep.mubr.bf16.mxu0 %v585
  %974 = vmatmul.mubr.bf16.gmra.mxu0 %v584
  %v975 = vpop.f32.mrf.mxu0
  %v976 = vadd.f32 %v624, %v975
  %v977 = vpop.f32.mrf.mxu0
  %v978 = vadd.f32 %v628, %v977
  %v979 = vpop.f32.mrf.mxu0
  %v980 = vadd.f32 %v624, %v979
  %v981 = vpop.f32.mrf.mxu0
  %v982 = vadd.f32 %v628, %v981
  %983 = vdwg.mxu0
  %v984 = vmax.f32 %v826, 0.0
  %v985 = vmax.f32 %v828, 0.0
  %v986 = vmax.f32 %v830, 0.0
  %v987 = vmax.f32 %v832, 0.0
  %v988 = vmax.f32 %v836, 0.0
  %v989 = vmax.f32 %v838, 0.0
  %v990 = vmax.f32 %v840, 0.0
  %v991 = vmax.f32 %v842, 0.0
  %v992 = vmax.f32 %v846, 0.0
  %v993 = vmax.f32 %v848, 0.0
  %v994 = vmax.f32 %v850, 0.0
  %v995 = vmax.f32 %v852, 0.0
  %v996 = vmax.f32 %v856, 0.0
  %v997 = vmax.f32 %v858, 0.0
  %v998 = vmax.f32 %v860, 0.0
  %v999 = vmax.f32 %v862, 0.0
  %v1000 = vmax.f32 %v866, 0.0
  %v1001 = vmax.f32 %v868, 0.0
  %v1002 = vmax.f32 %v870, 0.0
  %v1003 = vmax.f32 %v872, 0.0
  %v1004 = vmax.f32 %v876, 0.0
  %v1005 = vmax.f32 %v878, 0.0
  %v1006 = vmax.f32 %v880, 0.0
  %v1007 = vmax.f32 %v882, 0.0
  %v1008 = vmax.f32 %v886, 0.0
  %v1009 = vmax.f32 %v888, 0.0
  %v1010 = vmax.f32 %v890, 0.0
  %v1011 = vmax.f32 %v892, 0.0
  %v1012 = vmax.f32 %v896, 0.0
  %v1013 = vmax.f32 %v898, 0.0
  %v1014 = vmax.f32 %v900, 0.0
  %v1015 = vmax.f32 %v902, 0.0
  %v1016 = vmax.f32 %v906, 0.0
  %v1017 = vmax.f32 %v908, 0.0
  %v1018 = vmax.f32 %v910, 0.0
  %v1019 = vmax.f32 %v912, 0.0
  %v1020 = vmax.f32 %v916, 0.0
  %v1021 = vmax.f32 %v918, 0.0
  %v1022 = vmax.f32 %v920, 0.0
  %v1023 = vmax.f32 %v922, 0.0
  %v1024 = vmax.f32 %v926, 0.0
  %v1025 = vmax.f32 %v928, 0.0
  %v1026 = vmax.f32 %v930, 0.0
  %v1027 = vmax.f32 %v932, 0.0
  %v1028 = vmax.f32 %v936, 0.0
  %v1029 = vmax.f32 %v938, 0.0
  %v1030 = vmax.f32 %v940, 0.0
  %v1031 = vmax.f32 %v942, 0.0
  %v1032 = vmax.f32 %v946, 0.0
  %v1033 = vmax.f32 %v948, 0.0
  %v1034 = vmax.f32 %v950, 0.0
  %v1035 = vmax.f32 %v952, 0.0
  %v1036 = vmax.f32 %v956, 0.0
  %v1037 = vmax.f32 %v958, 0.0
  %v1038 = vmax.f32 %v960, 0.0
  %v1039 = vmax.f32 %v962, 0.0
  %v1040 = vmax.f32 %v966, 0.0
  %v1041 = vmax.f32 %v968, 0.0
  %v1042 = vmax.f32 %v970, 0.0
  %v1043 = vmax.f32 %v972, 0.0
  %v1044 = vmax.f32 %v976, 0.0
  %v1045 = vmax.f32 %v978, 0.0
  %v1046 = vmax.f32 %v980, 0.0
  %v1047 = vmax.f32 %v982, 0.0
  %v1048 = vpack.c.bf16 %v986, %v984
  %v1049 = vpack.c.bf16 %v987, %v985
  %v1050 = vpack.c.bf16 %v990, %v988
  %v1051 = vpack.c.bf16 %v991, %v989
  %v1052 = vpack.c.bf16 %v994, %v992
  %v1053 = vpack.c.bf16 %v995, %v993
  %v1054 = vpack.c.bf16 %v998, %v996
  %v1055 = vpack.c.bf16 %v999, %v997
  %v1056 = vpack.c.bf16 %v1002, %v1000
  %v1057 = vpack.c.bf16 %v1003, %v1001
  %v1058 = vpack.c.bf16 %v1006, %v1004
  %v1059 = vpack.c.bf16 %v1007, %v1005
  %v1060 = vpack.c.bf16 %v1010, %v1008
  %v1061 = vpack.c.bf16 %v1011, %v1009
  %v1062 = vpack.c.bf16 %v1014, %v1012
  %v1063 = vpack.c.bf16 %v1015, %v1013
  %v1064 = vpack.c.bf16 %v1018, %v1016
  %v1065 = vpack.c.bf16 %v1019, %v1017
  %v1066 = vpack.c.bf16 %v1022, %v1020
  %v1067 = vpack.c.bf16 %v1023, %v1021
  %v1068 = vpack.c.bf16 %v1026, %v1024
  %v1069 = vpack.c.bf16 %v1027, %v1025
  %v1070 = vpack.c.bf16 %v1030, %v1028
  %v1071 = vpack.c.bf16 %v1031, %v1029
  %v1072 = vpack.c.bf16 %v1034, %v1032
  %v1073 = vpack.c.bf16 %v1035, %v1033
  %v1074 = vpack.c.bf16 %v1038, %v1036
  %v1075 = vpack.c.bf16 %v1039, %v1037
  %v1076 = vpack.c.bf16 %v1042, %v1040
  %v1077 = vpack.c.bf16 %v1043, %v1041
  %v1078 = vpack.c.bf16 %v1046, %v1044
  %v1079 = vpack.c.bf16 %v1047, %v1045
  %s1080 = scalar_lea.vmem %s2, 256
  %v1081 = vld [vmem:[%s1080] sm:$0xff]
  %v1082 = vld [vmem:[%s1080 + $0x8] sm:$0xff]
  %v1083 = vld [vmem:[%s1080 + $0x10] sm:$0xff]
  %v1084 = vld [vmem:[%s1080 + $0x18] sm:$0xff]
  %v1085 = vld [vmem:[%s1080 + $0x20] sm:$0xff]
  %v1086 = vld [vmem:[%s1080 + $0x28] sm:$0xff]
  %v1087 = vld [vmem:[%s1080 + $0x30] sm:$0xff]
  %v1088 = vld [vmem:[%s1080 + $0x38] sm:$0xff]
  %v1089 = vld [vmem:[%s1080 + $0x40] sm:$0xff]
  %v1090 = vld [vmem:[%s1080 + $0x48] sm:$0xff]
  %v1091 = vld [vmem:[%s1080 + $0x50] sm:$0xff]
  %v1092 = vld [vmem:[%s1080 + $0x58] sm:$0xff]
  %v1093 = vld [vmem:[%s1080 + $0x60] sm:$0xff]
  %v1094 = vld [vmem:[%s1080 + $0x68] sm:$0xff]
  %v1095 = vld [vmem:[%s1080 + $0x70] sm:$0xff]
  %v1096 = vld [vmem:[%s1080 + $0x78] sm:$0xff]
  %v1097 = vld [vmem:[%s1080 + $0x80] sm:$0xff]
  %v1098 = vld [vmem:[%s1080 + $0x88] sm:$0xff]
  %v1099 = vld [vmem:[%s1080 + $0x90] sm:$0xff]
  %v1100 = vld [vmem:[%s1080 + $0x98] sm:$0xff]
  %v1101 = vld [vmem:[%s1080 + $0xa0] sm:$0xff]
  %v1102 = vld [vmem:[%s1080 + $0xa8] sm:$0xff]
  %v1103 = vld [vmem:[%s1080 + $0xb0] sm:$0xff]
  %v1104 = vld [vmem:[%s1080 + $0xb8] sm:$0xff]
  %v1105 = vld [vmem:[%s1080 + $0xc0] sm:$0xff]
  %v1106 = vld [vmem:[%s1080 + $0xc8] sm:$0xff]
  %v1107 = vld [vmem:[%s1080 + $0xd0] sm:$0xff]
  %v1108 = vld [vmem:[%s1080 + $0xd8] sm:$0xff]
  %v1109 = vld [vmem:[%s1080 + $0xe0] sm:$0xff]
  %v1110 = vld [vmem:[%s1080 + $0xe8] sm:$0xff]
  %v1111 = vld [vmem:[%s1080 + $0xf0] sm:$0xff]
  %v1112 = vld [vmem:[%s1080 + $0xf8] sm:$0xff]
  %s1113 = scalar_lea.vmem %s6, 2
  %v1114 = vld [vmem:[%s1113] ss:$8 sm:$0x3]
  %v1116 = vlaneseq
  %v1117 = vshrl.u32 %v1116, 7
  %v1118 = vsub.s32 0, %v1117
  %v1119 = vrot.slane %v1114, %v1118
  %v1120 = vlaneseq
  %v1121 = vshrl.u32 %v1120, 7
  %v1122 = vsub.s32 1, %v1121
  %v1123 = vrot.slane %v1114, %v1122
  %v1158 = vunpack.c.l.b16 %v1081
  %v1159 = vunpack.c.h.b16 %v1081
  %v1160 = vunpack.c.l.b16 %v1082
  %v1161 = vunpack.c.h.b16 %v1082
  %v1162 = vunpack.c.l.b16 %v1083
  %v1163 = vunpack.c.h.b16 %v1083
  %v1164 = vunpack.c.l.b16 %v1084
  %v1165 = vunpack.c.h.b16 %v1084
  %v1166 = vunpack.c.l.b16 %v1085
  %v1167 = vunpack.c.h.b16 %v1085
  %v1168 = vunpack.c.l.b16 %v1086
  %v1169 = vunpack.c.h.b16 %v1086
  %v1170 = vunpack.c.l.b16 %v1087
  %v1171 = vunpack.c.h.b16 %v1087
  %v1172 = vunpack.c.l.b16 %v1088
  %v1173 = vunpack.c.h.b16 %v1088
  %v1174 = vunpack.c.l.b16 %v1089
  %v1175 = vunpack.c.h.b16 %v1089
  %v1176 = vunpack.c.l.b16 %v1090
  %v1177 = vunpack.c.h.b16 %v1090
  %v1178 = vunpack.c.l.b16 %v1091
  %v1179 = vunpack.c.h.b16 %v1091
  %v1180 = vunpack.c.l.b16 %v1092
  %v1181 = vunpack.c.h.b16 %v1092
  %v1182 = vunpack.c.l.b16 %v1093
  %v1183 = vunpack.c.h.b16 %v1093
  %v1184 = vunpack.c.l.b16 %v1094
  %v1185 = vunpack.c.h.b16 %v1094
  %v1186 = vunpack.c.l.b16 %v1095
  %v1187 = vunpack.c.h.b16 %v1095
  %v1188 = vunpack.c.l.b16 %v1096
  %v1189 = vunpack.c.h.b16 %v1096
  %v1190 = vunpack.c.l.b16 %v1097
  %v1191 = vunpack.c.h.b16 %v1097
  %v1192 = vunpack.c.l.b16 %v1098
  %v1193 = vunpack.c.h.b16 %v1098
  %v1194 = vunpack.c.l.b16 %v1099
  %v1195 = vunpack.c.h.b16 %v1099
  %v1196 = vunpack.c.l.b16 %v1100
  %v1197 = vunpack.c.h.b16 %v1100
  %v1198 = vunpack.c.l.b16 %v1101
  %v1199 = vunpack.c.h.b16 %v1101
  %v1200 = vunpack.c.l.b16 %v1102
  %v1201 = vunpack.c.h.b16 %v1102
  %v1202 = vunpack.c.l.b16 %v1103
  %v1203 = vunpack.c.h.b16 %v1103
  %v1204 = vunpack.c.l.b16 %v1104
  %v1205 = vunpack.c.h.b16 %v1104
  %v1206 = vunpack.c.l.b16 %v1105
  %v1207 = vunpack.c.h.b16 %v1105
  %v1208 = vunpack.c.l.b16 %v1106
  %v1209 = vunpack.c.h.b16 %v1106
  %v1210 = vunpack.c.l.b16 %v1107
  %v1211 = vunpack.c.h.b16 %v1107
  %v1212 = vunpack.c.l.b16 %v1108
  %v1213 = vunpack.c.h.b16 %v1108
  %v1214 = vunpack.c.l.b16 %v1109
  %v1215 = vunpack.c.h.b16 %v1109
  %v1216 = vunpack.c.l.b16 %v1110
  %v1217 = vunpack.c.h.b16 %v1110
  %v1218 = vunpack.c.l.b16 %v1111
  %v1219 = vunpack.c.h.b16 %v1111
  %v1220 = vunpack.c.l.b16 %v1112
  %v1221 = vunpack.c.h.b16 %v1112
  %v1222 = vpack.c.b16 %v1160, %v1158
  %v1223 = vpack.c.b16 %v1161, %v1159
  %v1224 = vpack.c.b16 %v1164, %v1162
  %v1225 = vpack.c.b16 %v1165, %v1163
  %v1226 = vpack.c.b16 %v1168, %v1166
  %v1227 = vpack.c.b16 %v1169, %v1167
  %v1228 = vpack.c.b16 %v1172, %v1170
  %v1229 = vpack.c.b16 %v1173, %v1171
  %v1230 = vpack.c.b16 %v1176, %v1174
  %v1231 = vpack.c.b16 %v1177, %v1175
  %v1232 = vpack.c.b16 %v1180, %v1178
  %v1233 = vpack.c.b16 %v1181, %v1179
  %v1234 = vpack.c.b16 %v1184, %v1182
  %v1235 = vpack.c.b16 %v1185, %v1183
  %v1236 = vpack.c.b16 %v1188, %v1186
  %v1237 = vpack.c.b16 %v1189, %v1187
  %v1238 = vpack.c.b16 %v1192, %v1190
  %v1239 = vpack.c.b16 %v1193, %v1191
  %v1240 = vpack.c.b16 %v1196, %v1194
  %v1241 = vpack.c.b16 %v1197, %v1195
  %v1242 = vpack.c.b16 %v1200, %v1198
  %v1243 = vpack.c.b16 %v1201, %v1199
  %v1244 = vpack.c.b16 %v1204, %v1202
  %v1245 = vpack.c.b16 %v1205, %v1203
  %v1246 = vpack.c.b16 %v1208, %v1206
  %v1247 = vpack.c.b16 %v1209, %v1207
  %v1248 = vpack.c.b16 %v1212, %v1210
  %v1249 = vpack.c.b16 %v1213, %v1211
  %v1250 = vpack.c.b16 %v1216, %v1214
  %v1251 = vpack.c.b16 %v1217, %v1215
  %v1252 = vpack.c.b16 %v1220, %v1218
  %v1253 = vpack.c.b16 %v1221, %v1219
  %1286 = vmatprep.subr.bf16.mxu0 %v1237
  %1287 = vmatpush1.bf16.msra.mxu0 %v1236
  %1288 = vmatprep.subr.bf16.mxu0 %v1235
  %1289 = vmatpush1.bf16.msra.mxu0 %v1234
  %1290 = vmatprep.subr.bf16.mxu0 %v1233
  %1291 = vmatpush1.bf16.msra.mxu0 %v1232
  %1292 = vmatprep.subr.bf16.mxu0 %v1231
  %1293 = vmatpush1.bf16.msra.mxu0 %v1230
  %1294 = vmatprep.subr.bf16.mxu0 %v1229
  %1295 = vmatpush1.bf16.msra.mxu0 %v1228
  %1296 = vmatprep.subr.bf16.mxu0 %v1227
  %1297 = vmatpush1.bf16.msra.mxu0 %v1226
  %1298 = vmatprep.subr.bf16.mxu0 %v1225
  %1299 = vmatpush1.bf16.msra.mxu0 %v1224
  %1300 = vmatprep.subr.bf16.mxu0 %v1223
  %1301 = vmatpush1.bf16.msra.mxu0 %v1222
  %1302 = vmatprep.subr.bf16.mxu0 %v1253
  %1303 = vmatpush2.bf16.msra.mxu0 %v1252
  %1304 = vmatprep.subr.bf16.mxu0 %v1251
  %1305 = vmatpush2.bf16.msra.mxu0 %v1250
  %1306 = vmatprep.subr.bf16.mxu0 %v1249
  %1307 = vmatpush2.bf16.msra.mxu0 %v1248
  %1308 = vmatprep.subr.bf16.mxu0 %v1247
  %1309 = vmatpush2.bf16.msra.mxu0 %v1246
  %1310 = vmatprep.subr.bf16.mxu0 %v1245
  %1311 = vmatpush2.bf16.msra.mxu0 %v1244
  %1312 = vmatprep.subr.bf16.mxu0 %v1243
  %1313 = vmatpush2.bf16.msra.mxu0 %v1242
  %1314 = vmatprep.subr.bf16.mxu0 %v1241
  %1315 = vmatpush2.bf16.msra.mxu0 %v1240
  %1316 = vmatprep.subr.bf16.mxu0 %v1239
  %1317 = vmatpush2.bf16.msra.mxu0 %v1238
  %1318 = vmatprep.mubr.bf16.mxu0 %v1049
  %1319 = vmatmul.mubr.bf16.gmra.mxu0 %v1048
  %v1320 = vpop.f32.mrf.mxu0
  %v1321 = vadd.f32 %v1119, %v1320
  %v1322 = vpop.f32.mrf.mxu0
  %v1323 = vadd.f32 %v1123, %v1322
  %v1324 = vpop.f32.mrf.mxu0
  %v1325 = vadd.f32 %v1119, %v1324
  %v1326 = vpop.f32.mrf.mxu0
  %v1327 = vadd.f32 %v1123, %v1326
  %1328 = vmatprep.mubr.bf16.mxu0 %v1051
  %1329 = vmatmul.mubr.bf16.gmra.mxu0 %v1050
  %v1330 = vpop.f32.mrf.mxu0
  %v1331 = vadd.f32 %v1119, %v1330
  %v1332 = vpop.f32.mrf.mxu0
  %v1333 = vadd.f32 %v1123, %v1332
  %v1334 = vpop.f32.mrf.mxu0
  %v1335 = vadd.f32 %v1119, %v1334
  %v1336 = vpop.f32.mrf.mxu0
  %v1337 = vadd.f32 %v1123, %v1336
  %1338 = vmatprep.mubr.bf16.mxu0 %v1053
  %1339 = vmatmul.mubr.bf16.gmra.mxu0 %v1052
  %v1340 = vpop.f32.mrf.mxu0
  %v1341 = vadd.f32 %v1119, %v1340
  %v1342 = vpop.f32.mrf.mxu0
  %v1343 = vadd.f32 %v1123, %v1342
  %v1344 = vpop.f32.mrf.mxu0
  %v1345 = vadd.f32 %v1119, %v1344
  %v1346 = vpop.f32.mrf.mxu0
  %v1347 = vadd.f32 %v1123, %v1346
  %1348 = vmatprep.mubr.bf16.mxu0 %v1055
  %1349 = vmatmul.mubr.bf16.gmra.mxu0 %v1054
  %v1350 = vpop.f32.mrf.mxu0
  %v1351 = vadd.f32 %v1119, %v1350
  %v1352 = vpop.f32.mrf.mxu0
  %v1353 = vadd.f32 %v1123, %v1352
  %v1354 = vpop.f32.mrf.mxu0
  %v1355 = vadd.f32 %v1119, %v1354
  %v1356 = vpop.f32.mrf.mxu0
  %v1357 = vadd.f32 %v1123, %v1356
  %1358 = vmatprep.mubr.bf16.mxu0 %v1057
  %1359 = vmatmul.mubr.bf16.gmra.mxu0 %v1056
  %v1360 = vpop.f32.mrf.mxu0
  %v1361 = vadd.f32 %v1119, %v1360
  %v1362 = vpop.f32.mrf.mxu0
  %v1363 = vadd.f32 %v1123, %v1362
  %v1364 = vpop.f32.mrf.mxu0
  %v1365 = vadd.f32 %v1119, %v1364
  %v1366 = vpop.f32.mrf.mxu0
  %v1367 = vadd.f32 %v1123, %v1366
  %1368 = vmatprep.mubr.bf16.mxu0 %v1059
  %1369 = vmatmul.mubr.bf16.gmra.mxu0 %v1058
  %v1370 = vpop.f32.mrf.mxu0
  %v1371 = vadd.f32 %v1119, %v1370
  %v1372 = vpop.f32.mrf.mxu0
  %v1373 = vadd.f32 %v1123, %v1372
  %v1374 = vpop.f32.mrf.mxu0
  %v1375 = vadd.f32 %v1119, %v1374
  %v1376 = vpop.f32.mrf.mxu0
  %v1377 = vadd.f32 %v1123, %v1376
  %1378 = vmatprep.mubr.bf16.mxu0 %v1061
  %1379 = vmatmul.mubr.bf16.gmra.mxu0 %v1060
  %v1380 = vpop.f32.mrf.mxu0
  %v1381 = vadd.f32 %v1119, %v1380
  %v1382 = vpop.f32.mrf.mxu0
  %v1383 = vadd.f32 %v1123, %v1382
  %v1384 = vpop.f32.mrf.mxu0
  %v1385 = vadd.f32 %v1119, %v1384
  %v1386 = vpop.f32.mrf.mxu0
  %v1387 = vadd.f32 %v1123, %v1386
  %1388 = vmatprep.mubr.bf16.mxu0 %v1063
  %1389 = vmatmul.mubr.bf16.gmra.mxu0 %v1062
  %v1390 = vpop.f32.mrf.mxu0
  %v1391 = vadd.f32 %v1119, %v1390
  %v1392 = vpop.f32.mrf.mxu0
  %v1393 = vadd.f32 %v1123, %v1392
  %v1394 = vpop.f32.mrf.mxu0
  %v1395 = vadd.f32 %v1119, %v1394
  %v1396 = vpop.f32.mrf.mxu0
  %v1397 = vadd.f32 %v1123, %v1396
  %1398 = vmatprep.mubr.bf16.mxu0 %v1065
  %1399 = vmatmul.mubr.bf16.gmra.mxu0 %v1064
  %v1400 = vpop.f32.mrf.mxu0
  %v1401 = vadd.f32 %v1119, %v1400
  %v1402 = vpop.f32.mrf.mxu0
  %v1403 = vadd.f32 %v1123, %v1402
  %v1404 = vpop.f32.mrf.mxu0
  %v1405 = vadd.f32 %v1119, %v1404
  %v1406 = vpop.f32.mrf.mxu0
  %v1407 = vadd.f32 %v1123, %v1406
  %1408 = vmatprep.mubr.bf16.mxu0 %v1067
  %1409 = vmatmul.mubr.bf16.gmra.mxu0 %v1066
  %v1410 = vpop.f32.mrf.mxu0
  %v1411 = vadd.f32 %v1119, %v1410
  %v1412 = vpop.f32.mrf.mxu0
  %v1413 = vadd.f32 %v1123, %v1412
  %v1414 = vpop.f32.mrf.mxu0
  %v1415 = vadd.f32 %v1119, %v1414
  %v1416 = vpop.f32.mrf.mxu0
  %v1417 = vadd.f32 %v1123, %v1416
  %1418 = vmatprep.mubr.bf16.mxu0 %v1069
  %1419 = vmatmul.mubr.bf16.gmra.mxu0 %v1068
  %v1420 = vpop.f32.mrf.mxu0
  %v1421 = vadd.f32 %v1119, %v1420
  %v1422 = vpop.f32.mrf.mxu0
  %v1423 = vadd.f32 %v1123, %v1422
  %v1424 = vpop.f32.mrf.mxu0
  %v1425 = vadd.f32 %v1119, %v1424
  %v1426 = vpop.f32.mrf.mxu0
  %v1427 = vadd.f32 %v1123, %v1426
  %1428 = vmatprep.mubr.bf16.mxu0 %v1071
  %1429 = vmatmul.mubr.bf16.gmra.mxu0 %v1070
  %v1430 = vpop.f32.mrf.mxu0
  %v1431 = vadd.f32 %v1119, %v1430
  %v1432 = vpop.f32.mrf.mxu0
  %v1433 = vadd.f32 %v1123, %v1432
  %v1434 = vpop.f32.mrf.mxu0
  %v1435 = vadd.f32 %v1119, %v1434
  %v1436 = vpop.f32.mrf.mxu0
  %v1437 = vadd.f32 %v1123, %v1436
  %1438 = vmatprep.mubr.bf16.mxu0 %v1073
  %1439 = vmatmul.mubr.bf16.gmra.mxu0 %v1072
  %v1440 = vpop.f32.mrf.mxu0
  %v1441 = vadd.f32 %v1119, %v1440
  %v1442 = vpop.f32.mrf.mxu0
  %v1443 = vadd.f32 %v1123, %v1442
  %v1444 = vpop.f32.mrf.mxu0
  %v1445 = vadd.f32 %v1119, %v1444
  %v1446 = vpop.f32.mrf.mxu0
  %v1447 = vadd.f32 %v1123, %v1446
  %1448 = vmatprep.mubr.bf16.mxu0 %v1075
  %1449 = vmatmul.mubr.bf16.gmra.mxu0 %v1074
  %v1450 = vpop.f32.mrf.mxu0
  %v1451 = vadd.f32 %v1119, %v1450
  %v1452 = vpop.f32.mrf.mxu0
  %v1453 = vadd.f32 %v1123, %v1452
  %v1454 = vpop.f32.mrf.mxu0
  %v1455 = vadd.f32 %v1119, %v1454
  %v1456 = vpop.f32.mrf.mxu0
  %v1457 = vadd.f32 %v1123, %v1456
  %1458 = vmatprep.mubr.bf16.mxu0 %v1077
  %1459 = vmatmul.mubr.bf16.gmra.mxu0 %v1076
  %v1460 = vpop.f32.mrf.mxu0
  %v1461 = vadd.f32 %v1119, %v1460
  %v1462 = vpop.f32.mrf.mxu0
  %v1463 = vadd.f32 %v1123, %v1462
  %v1464 = vpop.f32.mrf.mxu0
  %v1465 = vadd.f32 %v1119, %v1464
  %v1466 = vpop.f32.mrf.mxu0
  %v1467 = vadd.f32 %v1123, %v1466
  %1468 = vmatprep.mubr.bf16.mxu0 %v1079
  %1469 = vmatmul.mubr.bf16.gmra.mxu0 %v1078
  %v1470 = vpop.f32.mrf.mxu0
  %v1471 = vadd.f32 %v1119, %v1470
  %v1472 = vpop.f32.mrf.mxu0
  %v1473 = vadd.f32 %v1123, %v1472
  %v1474 = vpop.f32.mrf.mxu0
  %v1475 = vadd.f32 %v1119, %v1474
  %v1476 = vpop.f32.mrf.mxu0
  %v1477 = vadd.f32 %v1123, %v1476
  %1478 = vdwg.mxu0
  %v1479 = vmax.f32 %v1321, 0.0
  %v1480 = vmax.f32 %v1323, 0.0
  %v1481 = vmax.f32 %v1325, 0.0
  %v1482 = vmax.f32 %v1327, 0.0
  %v1483 = vmax.f32 %v1331, 0.0
  %v1484 = vmax.f32 %v1333, 0.0
  %v1485 = vmax.f32 %v1335, 0.0
  %v1486 = vmax.f32 %v1337, 0.0
  %v1487 = vmax.f32 %v1341, 0.0
  %v1488 = vmax.f32 %v1343, 0.0
  %v1489 = vmax.f32 %v1345, 0.0
  %v1490 = vmax.f32 %v1347, 0.0
  %v1491 = vmax.f32 %v1351, 0.0
  %v1492 = vmax.f32 %v1353, 0.0
  %v1493 = vmax.f32 %v1355, 0.0
  %v1494 = vmax.f32 %v1357, 0.0
  %v1495 = vmax.f32 %v1361, 0.0
  %v1496 = vmax.f32 %v1363, 0.0
  %v1497 = vmax.f32 %v1365, 0.0
  %v1498 = vmax.f32 %v1367, 0.0
  %v1499 = vmax.f32 %v1371, 0.0
  %v1500 = vmax.f32 %v1373, 0.0
  %v1501 = vmax.f32 %v1375, 0.0
  %v1502 = vmax.f32 %v1377, 0.0
  %v1503 = vmax.f32 %v1381, 0.0
  %v1504 = vmax.f32 %v1383, 0.0
  %v1505 = vmax.f32 %v1385, 0.0
  %v1506 = vmax.f32 %v1387, 0.0
  %v1507 = vmax.f32 %v1391, 0.0
  %v1508 = vmax.f32 %v1393, 0.0
  %v1509 = vmax.f32 %v1395, 0.0
  %v1510 = vmax.f32 %v1397, 0.0
  %v1511 = vmax.f32 %v1401, 0.0
  %v1512 = vmax.f32 %v1403, 0.0
  %v1513 = vmax.f32 %v1405, 0.0
  %v1514 = vmax.f32 %v1407, 0.0
  %v1515 = vmax.f32 %v1411, 0.0
  %v1516 = vmax.f32 %v1413, 0.0
  %v1517 = vmax.f32 %v1415, 0.0
  %v1518 = vmax.f32 %v1417, 0.0
  %v1519 = vmax.f32 %v1421, 0.0
  %v1520 = vmax.f32 %v1423, 0.0
  %v1521 = vmax.f32 %v1425, 0.0
  %v1522 = vmax.f32 %v1427, 0.0
  %v1523 = vmax.f32 %v1431, 0.0
  %v1524 = vmax.f32 %v1433, 0.0
  %v1525 = vmax.f32 %v1435, 0.0
  %v1526 = vmax.f32 %v1437, 0.0
  %v1527 = vmax.f32 %v1441, 0.0
  %v1528 = vmax.f32 %v1443, 0.0
  %v1529 = vmax.f32 %v1445, 0.0
  %v1530 = vmax.f32 %v1447, 0.0
  %v1531 = vmax.f32 %v1451, 0.0
  %v1532 = vmax.f32 %v1453, 0.0
  %v1533 = vmax.f32 %v1455, 0.0
  %v1534 = vmax.f32 %v1457, 0.0
  %v1535 = vmax.f32 %v1461, 0.0
  %v1536 = vmax.f32 %v1463, 0.0
  %v1537 = vmax.f32 %v1465, 0.0
  %v1538 = vmax.f32 %v1467, 0.0
  %v1539 = vmax.f32 %v1471, 0.0
  %v1540 = vmax.f32 %v1473, 0.0
  %v1541 = vmax.f32 %v1475, 0.0
  %v1542 = vmax.f32 %v1477, 0.0
  %v1543 = vpack.c.bf16 %v1481, %v1479
  %v1544 = vpack.c.bf16 %v1482, %v1480
  %v1545 = vpack.c.bf16 %v1485, %v1483
  %v1546 = vpack.c.bf16 %v1486, %v1484
  %v1547 = vpack.c.bf16 %v1489, %v1487
  %v1548 = vpack.c.bf16 %v1490, %v1488
  %v1549 = vpack.c.bf16 %v1493, %v1491
  %v1550 = vpack.c.bf16 %v1494, %v1492
  %v1551 = vpack.c.bf16 %v1497, %v1495
  %v1552 = vpack.c.bf16 %v1498, %v1496
  %v1553 = vpack.c.bf16 %v1501, %v1499
  %v1554 = vpack.c.bf16 %v1502, %v1500
  %v1555 = vpack.c.bf16 %v1505, %v1503
  %v1556 = vpack.c.bf16 %v1506, %v1504
  %v1557 = vpack.c.bf16 %v1509, %v1507
  %v1558 = vpack.c.bf16 %v1510, %v1508
  %v1559 = vpack.c.bf16 %v1513, %v1511
  %v1560 = vpack.c.bf16 %v1514, %v1512
  %v1561 = vpack.c.bf16 %v1517, %v1515
  %v1562 = vpack.c.bf16 %v1518, %v1516
  %v1563 = vpack.c.bf16 %v1521, %v1519
  %v1564 = vpack.c.bf16 %v1522, %v1520
  %v1565 = vpack.c.bf16 %v1525, %v1523
  %v1566 = vpack.c.bf16 %v1526, %v1524
  %v1567 = vpack.c.bf16 %v1529, %v1527
  %v1568 = vpack.c.bf16 %v1530, %v1528
  %v1569 = vpack.c.bf16 %v1533, %v1531
  %v1570 = vpack.c.bf16 %v1534, %v1532
  %v1571 = vpack.c.bf16 %v1537, %v1535
  %v1572 = vpack.c.bf16 %v1538, %v1536
  %v1573 = vpack.c.bf16 %v1541, %v1539
  %v1574 = vpack.c.bf16 %v1542, %v1540
  %v1575 = vld [vmem:[%s3] sm:$0xf]
  %v1576 = vld [vmem:[%s3 + $0x4] sm:$0xf]
  %v1577 = vld [vmem:[%s3 + $0x8] sm:$0xf]
  %v1578 = vld [vmem:[%s3 + $0xc] sm:$0xf]
  %v1579 = vld [vmem:[%s3 + $0x10] sm:$0xf]
  %v1580 = vld [vmem:[%s3 + $0x14] sm:$0xf]
  %v1581 = vld [vmem:[%s3 + $0x18] sm:$0xf]
  %v1582 = vld [vmem:[%s3 + $0x1c] sm:$0xf]
  %v1583 = vld [vmem:[%s3 + $0x20] sm:$0xf]
  %v1584 = vld [vmem:[%s3 + $0x24] sm:$0xf]
  %v1585 = vld [vmem:[%s3 + $0x28] sm:$0xf]
  %v1586 = vld [vmem:[%s3 + $0x2c] sm:$0xf]
  %v1587 = vld [vmem:[%s3 + $0x30] sm:$0xf]
  %v1588 = vld [vmem:[%s3 + $0x34] sm:$0xf]
  %v1589 = vld [vmem:[%s3 + $0x38] sm:$0xf]
  %v1590 = vld [vmem:[%s3 + $0x3c] sm:$0xf]
  %v1591 = vld [vmem:[%s3 + $0x40] sm:$0xf]
  %v1592 = vld [vmem:[%s3 + $0x44] sm:$0xf]
  %v1593 = vld [vmem:[%s3 + $0x48] sm:$0xf]
  %v1594 = vld [vmem:[%s3 + $0x4c] sm:$0xf]
  %v1595 = vld [vmem:[%s3 + $0x50] sm:$0xf]
  %v1596 = vld [vmem:[%s3 + $0x54] sm:$0xf]
  %v1597 = vld [vmem:[%s3 + $0x58] sm:$0xf]
  %v1598 = vld [vmem:[%s3 + $0x5c] sm:$0xf]
  %v1599 = vld [vmem:[%s3 + $0x60] sm:$0xf]
  %v1600 = vld [vmem:[%s3 + $0x64] sm:$0xf]
  %v1601 = vld [vmem:[%s3 + $0x68] sm:$0xf]
  %v1602 = vld [vmem:[%s3 + $0x6c] sm:$0xf]
  %v1603 = vld [vmem:[%s3 + $0x70] sm:$0xf]
  %v1604 = vld [vmem:[%s3 + $0x74] sm:$0xf]
  %v1605 = vld [vmem:[%s3 + $0x78] sm:$0xf]
  %v1606 = vld [vmem:[%s3 + $0x7c] sm:$0xf]
  %v1607 = vld [vmem:[%s6 + $0x3] ss:$0 sm:$0xff]
  %v1640 = vunpack.c.l.b16 %v1575
  %v1641 = vunpack.c.l.b16 %v1576
  %v1642 = vunpack.c.l.b16 %v1577
  %v1643 = vunpack.c.l.b16 %v1578
  %v1644 = vunpack.c.l.b16 %v1579
  %v1645 = vunpack.c.l.b16 %v1580
  %v1646 = vunpack.c.l.b16 %v1581
  %v1647 = vunpack.c.l.b16 %v1582
  %v1648 = vunpack.c.l.b16 %v1583
  %v1649 = vunpack.c.l.b16 %v1584
  %v1650 = vunpack.c.l.b16 %v1585
  %v1651 = vunpack.c.l.b16 %v1586
  %v1652 = vunpack.c.l.b16 %v1587
  %v1653 = vunpack.c.l.b16 %v1588
  %v1654 = vunpack.c.l.b16 %v1589
  %v1655 = vunpack.c.l.b16 %v1590
  %v1656 = vunpack.c.l.b16 %v1591
  %v1657 = vunpack.c.l.b16 %v1592
  %v1658 = vunpack.c.l.b16 %v1593
  %v1659 = vunpack.c.l.b16 %v1594
  %v1660 = vunpack.c.l.b16 %v1595
  %v1661 = vunpack.c.l.b16 %v1596
  %v1662 = vunpack.c.l.b16 %v1597
  %v1663 = vunpack.c.l.b16 %v1598
  %v1664 = vunpack.c.l.b16 %v1599
  %v1665 = vunpack.c.l.b16 %v1600
  %v1666 = vunpack.c.l.b16 %v1601
  %v1667 = vunpack.c.l.b16 %v1602
  %v1668 = vunpack.c.l.b16 %v1603
  %v1669 = vunpack.c.l.b16 %v1604
  %v1670 = vunpack.c.l.b16 %v1605
  %v1671 = vunpack.c.l.b16 %v1606
  %v1672 = vpack.c.b16 %v1641, %v1640
  %v1673 = vpack.c.b16 %v1643, %v1642
  %v1674 = vpack.c.b16 %v1645, %v1644
  %v1675 = vpack.c.b16 %v1647, %v1646
  %v1676 = vpack.c.b16 %v1649, %v1648
  %v1677 = vpack.c.b16 %v1651, %v1650
  %v1678 = vpack.c.b16 %v1653, %v1652
  %v1679 = vpack.c.b16 %v1655, %v1654
  %v1680 = vpack.c.b16 %v1657, %v1656
  %v1681 = vpack.c.b16 %v1659, %v1658
  %v1682 = vpack.c.b16 %v1661, %v1660
  %v1683 = vpack.c.b16 %v1663, %v1662
  %v1684 = vpack.c.b16 %v1665, %v1664
  %v1685 = vpack.c.b16 %v1667, %v1666
  %v1686 = vpack.c.b16 %v1669, %v1668
  %v1687 = vpack.c.b16 %v1671, %v1670
  %1704 = vmatprep.subr.bf16.mxu0 0
  %1705 = vmatpush1.bf16.msra.mxu0 %v1679
  %1706 = vmatprep.subr.bf16.mxu0 0
  %1707 = vmatpush1.bf16.msra.mxu0 %v1678
  %1708 = vmatprep.subr.bf16.mxu0 0
  %1709 = vmatpush1.bf16.msra.mxu0 %v1677
  %1710 = vmatprep.subr.bf16.mxu0 0
  %1711 = vmatpush1.bf16.msra.mxu0 %v1676
  %1712 = vmatprep.subr.bf16.mxu0 0
  %1713 = vmatpush1.bf16.msra.mxu0 %v1675
  %1714 = vmatprep.subr.bf16.mxu0 0
  %1715 = vmatpush1.bf16.msra.mxu0 %v1674
  %1716 = vmatprep.subr.bf16.mxu0 0
  %1717 = vmatpush1.bf16.msra.mxu0 %v1673
  %1718 = vmatprep.subr.bf16.mxu0 0
  %1719 = vmatpush1.bf16.msra.mxu0 %v1672
  %1720 = vmatprep.subr.bf16.mxu0 0
  %1721 = vmatpush2.bf16.msra.mxu0 %v1687
  %1722 = vmatprep.subr.bf16.mxu0 0
  %1723 = vmatpush2.bf16.msra.mxu0 %v1686
  %1724 = vmatprep.subr.bf16.mxu0 0
  %1725 = vmatpush2.bf16.msra.mxu0 %v1685
  %1726 = vmatprep.subr.bf16.mxu0 0
  %1727 = vmatpush2.bf16.msra.mxu0 %v1684
  %1728 = vmatprep.subr.bf16.mxu0 0
  %1729 = vmatpush2.bf16.msra.mxu0 %v1683
  %1730 = vmatprep.subr.bf16.mxu0 0
  %1731 = vmatpush2.bf16.msra.mxu0 %v1682
  %1732 = vmatprep.subr.bf16.mxu0 0
  %1733 = vmatpush2.bf16.msra.mxu0 %v1681
  %1734 = vmatprep.subr.bf16.mxu0 0
  %1735 = vmatpush2.bf16.msra.mxu0 %v1680
  %1736 = vmatprep.mubr.bf16.mxu0 %v1544
  %1737 = vmatmul.mubr.bf16.gmra.mxu0 %v1543
  %v1738 = vpop.f32.mrf.mxu0
  %v1739 = vadd.f32 %v1607, %v1738
  %v1740 = vpop.f32.mrf.mxu0
  %v1741 = vpop.f32.mrf.mxu0
  %v1742 = vadd.f32 %v1607, %v1741
  %v1743 = vpop.f32.mrf.mxu0
  %1744 = vmatprep.mubr.bf16.mxu0 %v1546
  %1745 = vmatmul.mubr.bf16.gmra.mxu0 %v1545
  %v1746 = vpop.f32.mrf.mxu0
  %v1747 = vadd.f32 %v1607, %v1746
  %v1748 = vpop.f32.mrf.mxu0
  %v1749 = vpop.f32.mrf.mxu0
  %v1750 = vadd.f32 %v1607, %v1749
  %v1751 = vpop.f32.mrf.mxu0
  %1752 = vmatprep.mubr.bf16.mxu0 %v1548
  %1753 = vmatmul.mubr.bf16.gmra.mxu0 %v1547
  %v1754 = vpop.f32.mrf.mxu0
  %v1755 = vadd.f32 %v1607, %v1754
  %v1756 = vpop.f32.mrf.mxu0
  %v1757 = vpop.f32.mrf.mxu0
  %v1758 = vadd.f32 %v1607, %v1757
  %v1759 = vpop.f32.mrf.mxu0
  %1760 = vmatprep.mubr.bf16.mxu0 %v1550
  %1761 = vmatmul.mubr.bf16.gmra.mxu0 %v1549
  %v1762 = vpop.f32.mrf.mxu0
  %v1763 = vadd.f32 %v1607, %v1762
  %v1764 = vpop.f32.mrf.mxu0
  %v1765 = vpop.f32.mrf.mxu0
  %v1766 = vadd.f32 %v1607, %v1765
  %v1767 = vpop.f32.mrf.mxu0
  %1768 = vmatprep.mubr.bf16.mxu0 %v1552
  %1769 = vmatmul.mubr.bf16.gmra.mxu0 %v1551
  %v1770 = vpop.f32.mrf.mxu0
  %v1771 = vadd.f32 %v1607, %v1770
  %v1772 = vpop.f32.mrf.mxu0
  %v1773 = vpop.f32.mrf.mxu0
  %v1774 = vadd.f32 %v1607, %v1773
  %v1775 = vpop.f32.mrf.mxu0
  %1776 = vmatprep.mubr.bf16.mxu0 %v1554
  %1777 = vmatmul.mubr.bf16.gmra.mxu0 %v1553
  %v1778 = vpop.f32.mrf.mxu0
  %v1779 = vadd.f32 %v1607, %v1778
  %v1780 = vpop.f32.mrf.mxu0
  %v1781 = vpop.f32.mrf.mxu0
  %v1782 = vadd.f32 %v1607, %v1781
  %v1783 = vpop.f32.mrf.mxu0
  %1784 = vmatprep.mubr.bf16.mxu0 %v1556
  %1785 = vmatmul.mubr.bf16.gmra.mxu0 %v1555
  %v1786 = vpop.f32.mrf.mxu0
  %v1787 = vadd.f32 %v1607, %v1786
  %v1788 = vpop.f32.mrf.mxu0
  %v1789 = vpop.f32.mrf.mxu0
  %v1790 = vadd.f32 %v1607, %v1789
  %v1791 = vpop.f32.mrf.mxu0
  %1792 = vmatprep.mubr.bf16.mxu0 %v1558
  %1793 = vmatmul.mubr.bf16.gmra.mxu0 %v1557
  %v1794 = vpop.f32.mrf.mxu0
  %v1795 = vadd.f32 %v1607, %v1794
  %v1796 = vpop.f32.mrf.mxu0
  %v1797 = vpop.f32.mrf.mxu0
  %v1798 = vadd.f32 %v1607, %v1797
  %v1799 = vpop.f32.mrf.mxu0
  %1800 = vmatprep.mubr.bf16.mxu0 %v1560
  %1801 = vmatmul.mubr.bf16.gmra.mxu0 %v1559
  %v1802 = vpop.f32.mrf.mxu0
  %v1803 = vadd.f32 %v1607, %v1802
  %v1804 = vpop.f32.mrf.mxu0
  %v1805 = vpop.f32.mrf.mxu0
  %v1806 = vadd.f32 %v1607, %v1805
  %v1807 = vpop.f32.mrf.mxu0
  %1808 = vmatprep.mubr.bf16.mxu0 %v1562
  %1809 = vmatmul.mubr.bf16.gmra.mxu0 %v1561
  %v1810 = vpop.f32.mrf.mxu0
  %v1811 = vadd.f32 %v1607, %v1810
  %v1812 = vpop.f32.mrf.mxu0
  %v1813 = vpop.f32.mrf.mxu0
  %v1814 = vadd.f32 %v1607, %v1813
  %v1815 = vpop.f32.mrf.mxu0
  %1816 = vmatprep.mubr.bf16.mxu0 %v1564
  %1817 = vmatmul.mubr.bf16.gmra.mxu0 %v1563
  %v1818 = vpop.f32.mrf.mxu0
  %v1819 = vadd.f32 %v1607, %v1818
  %v1820 = vpop.f32.mrf.mxu0
  %v1821 = vpop.f32.mrf.mxu0
  %v1822 = vadd.f32 %v1607, %v1821
  %v1823 = vpop.f32.mrf.mxu0
  %1824 = vmatprep.mubr.bf16.mxu0 %v1566
  %1825 = vmatmul.mubr.bf16.gmra.mxu0 %v1565
  %v1826 = vpop.f32.mrf.mxu0
  %v1827 = vadd.f32 %v1607, %v1826
  %v1828 = vpop.f32.mrf.mxu0
  %v1829 = vpop.f32.mrf.mxu0
  %v1830 = vadd.f32 %v1607, %v1829
  %v1831 = vpop.f32.mrf.mxu0
  %1832 = vmatprep.mubr.bf16.mxu0 %v1568
  %1833 = vmatmul.mubr.bf16.gmra.mxu0 %v1567
  %v1834 = vpop.f32.mrf.mxu0
  %v1835 = vadd.f32 %v1607, %v1834
  %v1836 = vpop.f32.mrf.mxu0
  %v1837 = vpop.f32.mrf.mxu0
  %v1838 = vadd.f32 %v1607, %v1837
  %v1839 = vpop.f32.mrf.mxu0
  %1840 = vmatprep.mubr.bf16.mxu0 %v1570
  %1841 = vmatmul.mubr.bf16.gmra.mxu0 %v1569
  %v1842 = vpop.f32.mrf.mxu0
  %v1843 = vadd.f32 %v1607, %v1842
  %v1844 = vpop.f32.mrf.mxu0
  %v1845 = vpop.f32.mrf.mxu0
  %v1846 = vadd.f32 %v1607, %v1845
  %v1847 = vpop.f32.mrf.mxu0
  %1848 = vmatprep.mubr.bf16.mxu0 %v1572
  %1849 = vmatmul.mubr.bf16.gmra.mxu0 %v1571
  %v1850 = vpop.f32.mrf.mxu0
  %v1851 = vadd.f32 %v1607, %v1850
  %v1852 = vpop.f32.mrf.mxu0
  %v1853 = vpop.f32.mrf.mxu0
  %v1854 = vadd.f32 %v1607, %v1853
  %v1855 = vpop.f32.mrf.mxu0
  %1856 = vmatprep.mubr.bf16.mxu0 %v1574
  %1857 = vmatmul.mubr.bf16.gmra.mxu0 %v1573
  %v1858 = vpop.f32.mrf.mxu0
  %v1859 = vadd.f32 %v1607, %v1858
  %v1860 = vpop.f32.mrf.mxu0
  %v1861 = vpop.f32.mrf.mxu0
  %v1862 = vadd.f32 %v1607, %v1861
  %v1863 = vpop.f32.mrf.mxu0
  %1864 = vdwg.mxu0
  %v1865 = vmax.f32 %v1739, 0.0
  %v1866 = vmax.f32 %v1742, 0.0
  %v1867 = vmax.f32 %v1747, 0.0
  %v1868 = vmax.f32 %v1750, 0.0
  %v1869 = vmax.f32 %v1755, 0.0
  %v1870 = vmax.f32 %v1758, 0.0
  %v1871 = vmax.f32 %v1763, 0.0
  %v1872 = vmax.f32 %v1766, 0.0
  %v1873 = vmax.f32 %v1771, 0.0
  %v1874 = vmax.f32 %v1774, 0.0
  %v1875 = vmax.f32 %v1779, 0.0
  %v1876 = vmax.f32 %v1782, 0.0
  %v1877 = vmax.f32 %v1787, 0.0
  %v1878 = vmax.f32 %v1790, 0.0
  %v1879 = vmax.f32 %v1795, 0.0
  %v1880 = vmax.f32 %v1798, 0.0
  %v1881 = vmax.f32 %v1803, 0.0
  %v1882 = vmax.f32 %v1806, 0.0
  %v1883 = vmax.f32 %v1811, 0.0
  %v1884 = vmax.f32 %v1814, 0.0
  %v1885 = vmax.f32 %v1819, 0.0
  %v1886 = vmax.f32 %v1822, 0.0
  %v1887 = vmax.f32 %v1827, 0.0
  %v1888 = vmax.f32 %v1830, 0.0
  %v1889 = vmax.f32 %v1835, 0.0
  %v1890 = vmax.f32 %v1838, 0.0
  %v1891 = vmax.f32 %v1843, 0.0
  %v1892 = vmax.f32 %v1846, 0.0
  %v1893 = vmax.f32 %v1851, 0.0
  %v1894 = vmax.f32 %v1854, 0.0
  %v1895 = vmax.f32 %v1859, 0.0
  %v1896 = vmax.f32 %v1862, 0.0
  %v1897 = vpack.c.bf16 %v1866, %v1865
  %v1898 = vpack.c.bf16 %v1868, %v1867
  %v1899 = vpack.c.bf16 %v1870, %v1869
  %v1900 = vpack.c.bf16 %v1872, %v1871
  %v1901 = vpack.c.bf16 %v1874, %v1873
  %v1902 = vpack.c.bf16 %v1876, %v1875
  %v1903 = vpack.c.bf16 %v1878, %v1877
  %v1904 = vpack.c.bf16 %v1880, %v1879
  %v1905 = vpack.c.bf16 %v1882, %v1881
  %v1906 = vpack.c.bf16 %v1884, %v1883
  %v1907 = vpack.c.bf16 %v1886, %v1885
  %v1908 = vpack.c.bf16 %v1888, %v1887
  %v1909 = vpack.c.bf16 %v1890, %v1889
  %v1910 = vpack.c.bf16 %v1892, %v1891
  %v1911 = vpack.c.bf16 %v1894, %v1893
  %v1912 = vpack.c.bf16 %v1896, %v1895
  %v1913 = vld [vmem:[%s4] sm:$0xff]
  %v1914 = vld [vmem:[%s4 + $0x8] sm:$0xff]
  %v1915 = vld [vmem:[%s4 + $0x10] sm:$0xff]
  %v1916 = vld [vmem:[%s4 + $0x18] sm:$0xff]
  %v1917 = vld [vmem:[%s4 + $0x20] sm:$0xff]
  %v1918 = vld [vmem:[%s4 + $0x28] sm:$0xff]
  %v1919 = vld [vmem:[%s4 + $0x30] sm:$0xff]
  %v1920 = vld [vmem:[%s4 + $0x38] sm:$0xff]
  %v1921 = vld [vmem:[%s4 + $0x40] sm:$0xff]
  %v1922 = vld [vmem:[%s4 + $0x48] sm:$0xff]
  %v1923 = vld [vmem:[%s4 + $0x50] sm:$0xff]
  %v1924 = vld [vmem:[%s4 + $0x58] sm:$0xff]
  %v1925 = vld [vmem:[%s4 + $0x60] sm:$0xff]
  %v1926 = vld [vmem:[%s4 + $0x68] sm:$0xff]
  %v1927 = vld [vmem:[%s4 + $0x70] sm:$0xff]
  %v1928 = vld [vmem:[%s4 + $0x78] sm:$0xff]
  %s1929 = scalar_lea.vmem %s1, 144
  %v1930 = vld [vmem:[%s1929] sm:$0xff]
  %v1931 = vld [vmem:[%s1929 + $0x8] sm:$0xff]
  %v1932 = vld [vmem:[%s1929 + $0x10] sm:$0xff]
  %v1933 = vld [vmem:[%s1929 + $0x18] sm:$0xff]
  %v1934 = vld [vmem:[%s1929 + $0x20] sm:$0xff]
  %v1935 = vld [vmem:[%s1929 + $0x28] sm:$0xff]
  %v1936 = vld [vmem:[%s1929 + $0x30] sm:$0xff]
  %v1937 = vld [vmem:[%s1929 + $0x38] sm:$0xff]
  %v1938 = vld [vmem:[%s1929 + $0x40] sm:$0xff]
  %v1939 = vld [vmem:[%s1929 + $0x48] sm:$0xff]
  %v1940 = vld [vmem:[%s1929 + $0x50] sm:$0xff]
  %v1941 = vld [vmem:[%s1929 + $0x58] sm:$0xff]
  %v1942 = vld [vmem:[%s1929 + $0x60] sm:$0xff]
  %v1943 = vld [vmem:[%s1929 + $0x68] sm:$0xff]
  %v1944 = vld [vmem:[%s1929 + $0x70] sm:$0xff]
  %v1945 = vld [vmem:[%s1929 + $0x78] sm:$0xff]
  %v1946 = vld [vmem:[%s1929 + $0x80] sm:$0xff]
  %v1947 = vld [vmem:[%s1929 + $0x88] sm:$0x33]
  %v1966 = vunpack.c.l.b16 %v1930
  %v1967 = vunpack.c.h.b16 %v1930
  %v1968 = vunpack.c.l.b16 %v1931
  %v1969 = vunpack.c.h.b16 %v1931
  %v1970 = vunpack.c.l.b16 %v1932
  %v1971 = vunpack.c.h.b16 %v1932
  %v1972 = vunpack.c.l.b16 %v1933
  %v1973 = vunpack.c.h.b16 %v1933
  %v1974 = vunpack.c.l.b16 %v1934
  %v1975 = vunpack.c.h.b16 %v1934
  %v1976 = vunpack.c.l.b16 %v1935
  %v1977 = vunpack.c.h.b16 %v1935
  %v1978 = vunpack.c.l.b16 %v1936
  %v1979 = vunpack.c.h.b16 %v1936
  %v1980 = vunpack.c.l.b16 %v1937
  %v1981 = vunpack.c.h.b16 %v1937
  %v1982 = vunpack.c.l.b16 %v1938
  %v1983 = vunpack.c.h.b16 %v1938
  %v1984 = vunpack.c.l.b16 %v1939
  %v1985 = vunpack.c.h.b16 %v1939
  %v1986 = vunpack.c.l.b16 %v1940
  %v1987 = vunpack.c.h.b16 %v1940
  %v1988 = vunpack.c.l.b16 %v1941
  %v1989 = vunpack.c.h.b16 %v1941
  %v1990 = vunpack.c.l.b16 %v1942
  %v1991 = vunpack.c.h.b16 %v1942
  %v1992 = vunpack.c.l.b16 %v1943
  %v1993 = vunpack.c.h.b16 %v1943
  %v1994 = vunpack.c.l.b16 %v1944
  %v1995 = vunpack.c.h.b16 %v1944
  %v1996 = vunpack.c.l.b16 %v1945
  %v1997 = vunpack.c.h.b16 %v1945
  %v1998 = vunpack.c.l.b16 %v1946
  %v1999 = vunpack.c.h.b16 %v1946
  %v2000 = vunpack.c.l.b16 %v1947
  %v2001 = vunpack.c.h.b16 %v1947
  %v2002 = vpack.c.b16 %v1968, %v1966
  %v2003 = vpack.c.b16 %v1969, %v1967
  %v2004 = vpack.c.b16 %v1972, %v1970
  %v2005 = vpack.c.b16 %v1973, %v1971
  %v2006 = vpack.c.b16 %v1976, %v1974
  %v2007 = vpack.c.b16 %v1977, %v1975
  %v2008 = vpack.c.b16 %v1980, %v1978
  %v2009 = vpack.c.b16 %v1981, %v1979
  %v2010 = vpack.c.b16 %v1984, %v1982
  %v2011 = vpack.c.b16 %v1985, %v1983
  %v2012 = vpack.c.b16 %v1988, %v1986
  %v2013 = vpack.c.b16 %v1989, %v1987
  %v2014 = vpack.c.b16 %v1992, %v1990
  %v2015 = vpack.c.b16 %v1993, %v1991
  %v2016 = vpack.c.b16 %v1996, %v1994
  %v2017 = vpack.c.b16 %v1997, %v1995
  %v2018 = vpack.c.b16 %v2000, %v1998
  %v2019 = vpack.c.b16 %v2001, %v1999
  %v2037 = vsel %vm290, %v2018, 0
  %v2040 = vsel %vm290, %v2019, 0
  %2042 = vmatprep.subr.bf16.mxu0 %v2017
  %2043 = vmatpush1.bf16.msra.mxu0 %v2016
  %2044 = vmatprep.subr.bf16.mxu0 %v2015
  %2045 = vmatpush1.bf16.msra.mxu0 %v2014
  %2046 = vmatprep.subr.bf16.mxu0 %v2013
  %2047 = vmatpush1.bf16.msra.mxu0 %v2012
  %2048 = vmatprep.subr.bf16.mxu0 %v2011
  %2049 = vmatpush1.bf16.msra.mxu0 %v2010
  %2050 = vmatprep.subr.bf16.mxu0 %v2009
  %2051 = vmatpush1.bf16.msra.mxu0 %v2008
  %2052 = vmatprep.subr.bf16.mxu0 %v2007
  %2053 = vmatpush1.bf16.msra.mxu0 %v2006
  %2054 = vmatprep.subr.bf16.mxu0 %v2005
  %2055 = vmatpush1.bf16.msra.mxu0 %v2004
  %2056 = vmatprep.subr.bf16.mxu0 %v2003
  %2057 = vmatpush1.bf16.msra.mxu0 %v2002
  %2058 = vmatprep.subr.bf16.mxu0 0
  %2059 = vmatpush2.bf16.msra.mxu0 0
  %2060 = vmatprep.subr.bf16.mxu0 0
  %2061 = vmatpush2.bf16.msra.mxu0 0
  %2062 = vmatprep.subr.bf16.mxu0 0
  %2063 = vmatpush2.bf16.msra.mxu0 0
  %2064 = vmatprep.subr.bf16.mxu0 0
  %2065 = vmatpush2.bf16.msra.mxu0 0
  %2066 = vmatprep.subr.bf16.mxu0 0
  %2067 = vmatpush2.bf16.msra.mxu0 0
  %2068 = vmatprep.subr.bf16.mxu0 0
  %2069 = vmatpush2.bf16.msra.mxu0 0
  %2070 = vmatprep.subr.bf16.mxu0 0
  %2071 = vmatpush2.bf16.msra.mxu0 0
  %2072 = vmatprep.subr.bf16.mxu0 %v2040
  %2073 = vmatpush2.bf16.msra.mxu0 %v2037
  %2074 = vmatprep.mubr.bf16.mxu0 %v243
  %2075 = vmatmul.mubr.bf16.gmra.mxu0 %v91
  %v2076 = vpop.f32.mrf.mxu0
  %v2077 = vadd.f32 0.0, %v2076
  %v2078 = vpop.f32.mrf.mxu0
  %v2079 = vadd.f32 0.0, %v2078
  %v2080 = vpop.f32.mrf.mxu0
  %v2081 = vadd.f32 0.0, %v2080
  %v2082 = vpop.f32.mrf.mxu0
  %v2083 = vadd.f32 0.0, %v2082
  %2084 = vmatprep.mubr.bf16.mxu0 %v246
  %2085 = vmatmul.mubr.bf16.gmra.mxu0 %v93
  %v2086 = vpop.f32.mrf.mxu0
  %v2087 = vadd.f32 0.0, %v2086
  %v2088 = vpop.f32.mrf.mxu0
  %v2089 = vadd.f32 0.0, %v2088
  %v2090 = vpop.f32.mrf.mxu0
  %v2091 = vadd.f32 0.0, %v2090
  %v2092 = vpop.f32.mrf.mxu0
  %v2093 = vadd.f32 0.0, %v2092
  %2094 = vmatprep.mubr.bf16.mxu0 %v249
  %2095 = vmatmul.mubr.bf16.gmra.mxu0 %v95
  %v2096 = vpop.f32.mrf.mxu0
  %v2097 = vadd.f32 0.0, %v2096
  %v2098 = vpop.f32.mrf.mxu0
  %v2099 = vadd.f32 0.0, %v2098
  %v2100 = vpop.f32.mrf.mxu0
  %v2101 = vadd.f32 0.0, %v2100
  %v2102 = vpop.f32.mrf.mxu0
  %v2103 = vadd.f32 0.0, %v2102
  %2104 = vmatprep.mubr.bf16.mxu0 %v252
  %2105 = vmatmul.mubr.bf16.gmra.mxu0 %v97
  %v2106 = vpop.f32.mrf.mxu0
  %v2107 = vadd.f32 0.0, %v2106
  %v2108 = vpop.f32.mrf.mxu0
  %v2109 = vadd.f32 0.0, %v2108
  %v2110 = vpop.f32.mrf.mxu0
  %v2111 = vadd.f32 0.0, %v2110
  %v2112 = vpop.f32.mrf.mxu0
  %v2113 = vadd.f32 0.0, %v2112
  %2114 = vmatprep.mubr.bf16.mxu0 %v255
  %2115 = vmatmul.mubr.bf16.gmra.mxu0 %v99
  %v2116 = vpop.f32.mrf.mxu0
  %v2117 = vadd.f32 0.0, %v2116
  %v2118 = vpop.f32.mrf.mxu0
  %v2119 = vadd.f32 0.0, %v2118
  %v2120 = vpop.f32.mrf.mxu0
  %v2121 = vadd.f32 0.0, %v2120
  %v2122 = vpop.f32.mrf.mxu0
  %v2123 = vadd.f32 0.0, %v2122
  %2124 = vmatprep.mubr.bf16.mxu0 %v258
  %2125 = vmatmul.mubr.bf16.gmra.mxu0 %v101
  %v2126 = vpop.f32.mrf.mxu0
  %v2127 = vadd.f32 0.0, %v2126
  %v2128 = vpop.f32.mrf.mxu0
  %v2129 = vadd.f32 0.0, %v2128
  %v2130 = vpop.f32.mrf.mxu0
  %v2131 = vadd.f32 0.0, %v2130
  %v2132 = vpop.f32.mrf.mxu0
  %v2133 = vadd.f32 0.0, %v2132
  %2134 = vmatprep.mubr.bf16.mxu0 %v261
  %2135 = vmatmul.mubr.bf16.gmra.mxu0 %v103
  %v2136 = vpop.f32.mrf.mxu0
  %v2137 = vadd.f32 0.0, %v2136
  %v2138 = vpop.f32.mrf.mxu0
  %v2139 = vadd.f32 0.0, %v2138
  %v2140 = vpop.f32.mrf.mxu0
  %v2141 = vadd.f32 0.0, %v2140
  %v2142 = vpop.f32.mrf.mxu0
  %v2143 = vadd.f32 0.0, %v2142
  %2144 = vmatprep.mubr.bf16.mxu0 %v264
  %2145 = vmatmul.mubr.bf16.gmra.mxu0 %v105
  %v2146 = vpop.f32.mrf.mxu0
  %v2147 = vadd.f32 0.0, %v2146
  %v2148 = vpop.f32.mrf.mxu0
  %v2149 = vadd.f32 0.0, %v2148
  %v2150 = vpop.f32.mrf.mxu0
  %v2151 = vadd.f32 0.0, %v2150
  %v2152 = vpop.f32.mrf.mxu0
  %v2153 = vadd.f32 0.0, %v2152
  %2154 = vmatprep.mubr.bf16.mxu0 %v267
  %2155 = vmatmul.mubr.bf16.gmra.mxu0 %v107
  %v2156 = vpop.f32.mrf.mxu0
  %v2157 = vadd.f32 0.0, %v2156
  %v2158 = vpop.f32.mrf.mxu0
  %v2159 = vadd.f32 0.0, %v2158
  %v2160 = vpop.f32.mrf.mxu0
  %v2161 = vadd.f32 0.0, %v2160
  %v2162 = vpop.f32.mrf.mxu0
  %v2163 = vadd.f32 0.0, %v2162
  %2164 = vmatprep.mubr.bf16.mxu0 %v270
  %2165 = vmatmul.mubr.bf16.gmra.mxu0 %v109
  %v2166 = vpop.f32.mrf.mxu0
  %v2167 = vadd.f32 0.0, %v2166
  %v2168 = vpop.f32.mrf.mxu0
  %v2169 = vadd.f32 0.0, %v2168
  %v2170 = vpop.f32.mrf.mxu0
  %v2171 = vadd.f32 0.0, %v2170
  %v2172 = vpop.f32.mrf.mxu0
  %v2173 = vadd.f32 0.0, %v2172
  %2174 = vmatprep.mubr.bf16.mxu0 %v273
  %2175 = vmatmul.mubr.bf16.gmra.mxu0 %v111
  %v2176 = vpop.f32.mrf.mxu0
  %v2177 = vadd.f32 0.0, %v2176
  %v2178 = vpop.f32.mrf.mxu0
  %v2179 = vadd.f32 0.0, %v2178
  %v2180 = vpop.f32.mrf.mxu0
  %v2181 = vadd.f32 0.0, %v2180
  %v2182 = vpop.f32.mrf.mxu0
  %v2183 = vadd.f32 0.0, %v2182
  %2184 = vmatprep.mubr.bf16.mxu0 %v276
  %2185 = vmatmul.mubr.bf16.gmra.mxu0 %v113
  %v2186 = vpop.f32.mrf.mxu0
  %v2187 = vadd.f32 0.0, %v2186
  %v2188 = vpop.f32.mrf.mxu0
  %v2189 = vadd.f32 0.0, %v2188
  %v2190 = vpop.f32.mrf.mxu0
  %v2191 = vadd.f32 0.0, %v2190
  %v2192 = vpop.f32.mrf.mxu0
  %v2193 = vadd.f32 0.0, %v2192
  %2194 = vmatprep.mubr.bf16.mxu0 %v279
  %2195 = vmatmul.mubr.bf16.gmra.mxu0 %v115
  %v2196 = vpop.f32.mrf.mxu0
  %v2197 = vadd.f32 0.0, %v2196
  %v2198 = vpop.f32.mrf.mxu0
  %v2199 = vadd.f32 0.0, %v2198
  %v2200 = vpop.f32.mrf.mxu0
  %v2201 = vadd.f32 0.0, %v2200
  %v2202 = vpop.f32.mrf.mxu0
  %v2203 = vadd.f32 0.0, %v2202
  %2204 = vmatprep.mubr.bf16.mxu0 %v282
  %2205 = vmatmul.mubr.bf16.gmra.mxu0 %v117
  %v2206 = vpop.f32.mrf.mxu0
  %v2207 = vadd.f32 0.0, %v2206
  %v2208 = vpop.f32.mrf.mxu0
  %v2209 = vadd.f32 0.0, %v2208
  %v2210 = vpop.f32.mrf.mxu0
  %v2211 = vadd.f32 0.0, %v2210
  %v2212 = vpop.f32.mrf.mxu0
  %v2213 = vadd.f32 0.0, %v2212
  %2214 = vmatprep.mubr.bf16.mxu0 %v285
  %2215 = vmatmul.mubr.bf16.gmra.mxu0 %v119
  %v2216 = vpop.f32.mrf.mxu0
  %v2217 = vadd.f32 0.0, %v2216
  %v2218 = vpop.f32.mrf.mxu0
  %v2219 = vadd.f32 0.0, %v2218
  %v2220 = vpop.f32.mrf.mxu0
  %v2221 = vadd.f32 0.0, %v2220
  %v2222 = vpop.f32.mrf.mxu0
  %v2223 = vadd.f32 0.0, %v2222
  %2224 = vmatprep.mubr.bf16.mxu0 %v288
  %2225 = vmatmul.mubr.bf16.gmra.mxu0 %v121
  %v2226 = vpop.f32.mrf.mxu0
  %v2227 = vadd.f32 0.0, %v2226
  %v2228 = vpop.f32.mrf.mxu0
  %v2229 = vadd.f32 0.0, %v2228
  %v2230 = vpop.f32.mrf.mxu0
  %v2231 = vadd.f32 0.0, %v2230
  %v2232 = vpop.f32.mrf.mxu0
  %v2233 = vadd.f32 0.0, %v2232
  %2234 = vdwg.mxu0
  %v2251 = vunpack.c.l.b16 %v1913
  %v2252 = vunpack.c.h.b16 %v1913
  %v2253 = vunpack.c.l.b16 %v1914
  %v2254 = vunpack.c.h.b16 %v1914
  %v2255 = vunpack.c.l.b16 %v1915
  %v2256 = vunpack.c.h.b16 %v1915
  %v2257 = vunpack.c.l.b16 %v1916
  %v2258 = vunpack.c.h.b16 %v1916
  %v2259 = vunpack.c.l.b16 %v1917
  %v2260 = vunpack.c.h.b16 %v1917
  %v2261 = vunpack.c.l.b16 %v1918
  %v2262 = vunpack.c.h.b16 %v1918
  %v2263 = vunpack.c.l.b16 %v1919
  %v2264 = vunpack.c.h.b16 %v1919
  %v2265 = vunpack.c.l.b16 %v1920
  %v2266 = vunpack.c.h.b16 %v1920
  %v2267 = vunpack.c.l.b16 %v1921
  %v2268 = vunpack.c.h.b16 %v1921
  %v2269 = vunpack.c.l.b16 %v1922
  %v2270 = vunpack.c.h.b16 %v1922
  %v2271 = vunpack.c.l.b16 %v1923
  %v2272 = vunpack.c.h.b16 %v1923
  %v2273 = vunpack.c.l.b16 %v1924
  %v2274 = vunpack.c.h.b16 %v1924
  %v2275 = vunpack.c.l.b16 %v1925
  %v2276 = vunpack.c.h.b16 %v1925
  %v2277 = vunpack.c.l.b16 %v1926
  %v2278 = vunpack.c.h.b16 %v1926
  %v2279 = vunpack.c.l.b16 %v1927
  %v2280 = vunpack.c.h.b16 %v1927
  %v2281 = vunpack.c.l.b16 %v1928
  %v2282 = vunpack.c.h.b16 %v1928
  %v2283 = vpack.c.b16 %v2253, %v2251
  %v2284 = vpack.c.b16 %v2254, %v2252
  %v2285 = vpack.c.b16 %v2257, %v2255
  %v2286 = vpack.c.b16 %v2258, %v2256
  %v2287 = vpack.c.b16 %v2261, %v2259
  %v2288 = vpack.c.b16 %v2262, %v2260
  %v2289 = vpack.c.b16 %v2265, %v2263
  %v2290 = vpack.c.b16 %v2266, %v2264
  %v2291 = vpack.c.b16 %v2269, %v2267
  %v2292 = vpack.c.b16 %v2270, %v2268
  %v2293 = vpack.c.b16 %v2273, %v2271
  %v2294 = vpack.c.b16 %v2274, %v2272
  %v2295 = vpack.c.b16 %v2277, %v2275
  %v2296 = vpack.c.b16 %v2278, %v2276
  %v2297 = vpack.c.b16 %v2281, %v2279
  %v2298 = vpack.c.b16 %v2282, %v2280
  %2315 = vmatprep.subr.bf16.mxu0 %v2298
  %2316 = vmatpush1.bf16.msra.mxu0 %v2297
  %2317 = vmatprep.subr.bf16.mxu0 %v2296
  %2318 = vmatpush1.bf16.msra.mxu0 %v2295
  %2319 = vmatprep.subr.bf16.mxu0 %v2294
  %2320 = vmatpush1.bf16.msra.mxu0 %v2293
  %2321 = vmatprep.subr.bf16.mxu0 %v2292
  %2322 = vmatpush1.bf16.msra.mxu0 %v2291
  %2323 = vmatprep.subr.bf16.mxu0 %v2290
  %2324 = vmatpush1.bf16.msra.mxu0 %v2289
  %2325 = vmatprep.subr.bf16.mxu0 %v2288
  %2326 = vmatpush1.bf16.msra.mxu0 %v2287
  %2327 = vmatprep.subr.bf16.mxu0 %v2286
  %2328 = vmatpush1.bf16.msra.mxu0 %v2285
  %2329 = vmatprep.subr.bf16.mxu0 %v2284
  %2330 = vmatpush1.bf16.msra.mxu0 %v2283
  %2331 = vmatprep.subr.bf16.mxu0 0
  %2332 = vmatpush2.bf16.msra.mxu0 0
  %2333 = vmatprep.subr.bf16.mxu0 0
  %2334 = vmatpush2.bf16.msra.mxu0 0
  %2335 = vmatprep.subr.bf16.mxu0 0
  %2336 = vmatpush2.bf16.msra.mxu0 0
  %2337 = vmatprep.subr.bf16.mxu0 0
  %2338 = vmatpush2.bf16.msra.mxu0 0
  %2339 = vmatprep.subr.bf16.mxu0 0
  %2340 = vmatpush2.bf16.msra.mxu0 0
  %2341 = vmatprep.subr.bf16.mxu0 0
  %2342 = vmatpush2.bf16.msra.mxu0 0
  %2343 = vmatprep.subr.bf16.mxu0 0
  %2344 = vmatpush2.bf16.msra.mxu0 0
  %2345 = vmatprep.subr.bf16.mxu0 0
  %2346 = vmatpush2.bf16.msra.mxu0 0
  %2347 = vmatprep.mubr.bf16.mxu0 0
  %2348 = vmatmul.mubr.bf16.gmra.mxu0 %v1897
  %v2349 = vpop.f32.mrf.mxu0
  %v2350 = vadd.f32 %v2077, %v2349
  %v2351 = vpop.f32.mrf.mxu0
  %v2352 = vadd.f32 %v2079, %v2351
  %v2353 = vpop.f32.mrf.mxu0
  %v2354 = vadd.f32 %v2081, %v2353
  %v2355 = vpop.f32.mrf.mxu0
  %v2356 = vadd.f32 %v2083, %v2355
  %2357 = vmatprep.mubr.bf16.mxu0 0
  %2358 = vmatmul.mubr.bf16.gmra.mxu0 %v1898
  %v2359 = vpop.f32.mrf.mxu0
  %v2360 = vadd.f32 %v2087, %v2359
  %v2361 = vpop.f32.mrf.mxu0
  %v2362 = vadd.f32 %v2089, %v2361
  %v2363 = vpop.f32.mrf.mxu0
  %v2364 = vadd.f32 %v2091, %v2363
  %v2365 = vpop.f32.mrf.mxu0
  %v2366 = vadd.f32 %v2093, %v2365
  %2367 = vmatprep.mubr.bf16.mxu0 0
  %2368 = vmatmul.mubr.bf16.gmra.mxu0 %v1899
  %v2369 = vpop.f32.mrf.mxu0
  %v2370 = vadd.f32 %v2097, %v2369
  %v2371 = vpop.f32.mrf.mxu0
  %v2372 = vadd.f32 %v2099, %v2371
  %v2373 = vpop.f32.mrf.mxu0
  %v2374 = vadd.f32 %v2101, %v2373
  %v2375 = vpop.f32.mrf.mxu0
  %v2376 = vadd.f32 %v2103, %v2375
  %2377 = vmatprep.mubr.bf16.mxu0 0
  %2378 = vmatmul.mubr.bf16.gmra.mxu0 %v1900
  %v2379 = vpop.f32.mrf.mxu0
  %v2380 = vadd.f32 %v2107, %v2379
  %v2381 = vpop.f32.mrf.mxu0
  %v2382 = vadd.f32 %v2109, %v2381
  %v2383 = vpop.f32.mrf.mxu0
  %v2384 = vadd.f32 %v2111, %v2383
  %v2385 = vpop.f32.mrf.mxu0
  %v2386 = vadd.f32 %v2113, %v2385
  %2387 = vmatprep.mubr.bf16.mxu0 0
  %2388 = vmatmul.mubr.bf16.gmra.mxu0 %v1901
  %v2389 = vpop.f32.mrf.mxu0
  %v2390 = vadd.f32 %v2117, %v2389
  %v2391 = vpop.f32.mrf.mxu0
  %v2392 = vadd.f32 %v2119, %v2391
  %v2393 = vpop.f32.mrf.mxu0
  %v2394 = vadd.f32 %v2121, %v2393
  %v2395 = vpop.f32.mrf.mxu0
  %v2396 = vadd.f32 %v2123, %v2395
  %2397 = vmatprep.mubr.bf16.mxu0 0
  %2398 = vmatmul.mubr.bf16.gmra.mxu0 %v1902
  %v2399 = vpop.f32.mrf.mxu0
  %v2400 = vadd.f32 %v2127, %v2399
  %v2401 = vpop.f32.mrf.mxu0
  %v2402 = vadd.f32 %v2129, %v2401
  %v2403 = vpop.f32.mrf.mxu0
  %v2404 = vadd.f32 %v2131, %v2403
  %v2405 = vpop.f32.mrf.mxu0
  %v2406 = vadd.f32 %v2133, %v2405
  %2407 = vmatprep.mubr.bf16.mxu0 0
  %2408 = vmatmul.mubr.bf16.gmra.mxu0 %v1903
  %v2409 = vpop.f32.mrf.mxu0
  %v2410 = vadd.f32 %v2137, %v2409
  %v2411 = vpop.f32.mrf.mxu0
  %v2412 = vadd.f32 %v2139, %v2411
  %v2413 = vpop.f32.mrf.mxu0
  %v2414 = vadd.f32 %v2141, %v2413
  %v2415 = vpop.f32.mrf.mxu0
  %v2416 = vadd.f32 %v2143, %v2415
  %2417 = vmatprep.mubr.bf16.mxu0 0
  %2418 = vmatmul.mubr.bf16.gmra.mxu0 %v1904
  %v2419 = vpop.f32.mrf.mxu0
  %v2420 = vadd.f32 %v2147, %v2419
  %v2421 = vpop.f32.mrf.mxu0
  %v2422 = vadd.f32 %v2149, %v2421
  %v2423 = vpop.f32.mrf.mxu0
  %v2424 = vadd.f32 %v2151, %v2423
  %v2425 = vpop.f32.mrf.mxu0
  %v2426 = vadd.f32 %v2153, %v2425
  %2427 = vmatprep.mubr.bf16.mxu0 0
  %2428 = vmatmul.mubr.bf16.gmra.mxu0 %v1905
  %v2429 = vpop.f32.mrf.mxu0
  %v2430 = vadd.f32 %v2157, %v2429
  %v2431 = vpop.f32.mrf.mxu0
  %v2432 = vadd.f32 %v2159, %v2431
  %v2433 = vpop.f32.mrf.mxu0
  %v2434 = vadd.f32 %v2161, %v2433
  %v2435 = vpop.f32.mrf.mxu0
  %v2436 = vadd.f32 %v2163, %v2435
  %2437 = vmatprep.mubr.bf16.mxu0 0
  %2438 = vmatmul.mubr.bf16.gmra.mxu0 %v1906
  %v2439 = vpop.f32.mrf.mxu0
  %v2440 = vadd.f32 %v2167, %v2439
  %v2441 = vpop.f32.mrf.mxu0
  %v2442 = vadd.f32 %v2169, %v2441
  %v2443 = vpop.f32.mrf.mxu0
  %v2444 = vadd.f32 %v2171, %v2443
  %v2445 = vpop.f32.mrf.mxu0
  %v2446 = vadd.f32 %v2173, %v2445
  %2447 = vmatprep.mubr.bf16.mxu0 0
  %2448 = vmatmul.mubr.bf16.gmra.mxu0 %v1907
  %v2449 = vpop.f32.mrf.mxu0
  %v2450 = vadd.f32 %v2177, %v2449
  %v2451 = vpop.f32.mrf.mxu0
  %v2452 = vadd.f32 %v2179, %v2451
  %v2453 = vpop.f32.mrf.mxu0
  %v2454 = vadd.f32 %v2181, %v2453
  %v2455 = vpop.f32.mrf.mxu0
  %v2456 = vadd.f32 %v2183, %v2455
  %2457 = vmatprep.mubr.bf16.mxu0 0
  %2458 = vmatmul.mubr.bf16.gmra.mxu0 %v1908
  %v2459 = vpop.f32.mrf.mxu0
  %v2460 = vadd.f32 %v2187, %v2459
  %v2461 = vpop.f32.mrf.mxu0
  %v2462 = vadd.f32 %v2189, %v2461
  %v2463 = vpop.f32.mrf.mxu0
  %v2464 = vadd.f32 %v2191, %v2463
  %v2465 = vpop.f32.mrf.mxu0
  %v2466 = vadd.f32 %v2193, %v2465
  %2467 = vmatprep.mubr.bf16.mxu0 0
  %2468 = vmatmul.mubr.bf16.gmra.mxu0 %v1909
  %v2469 = vpop.f32.mrf.mxu0
  %v2470 = vadd.f32 %v2197, %v2469
  %v2471 = vpop.f32.mrf.mxu0
  %v2472 = vadd.f32 %v2199, %v2471
  %v2473 = vpop.f32.mrf.mxu0
  %v2474 = vadd.f32 %v2201, %v2473
  %v2475 = vpop.f32.mrf.mxu0
  %v2476 = vadd.f32 %v2203, %v2475
  %2477 = vmatprep.mubr.bf16.mxu0 0
  %2478 = vmatmul.mubr.bf16.gmra.mxu0 %v1910
  %v2479 = vpop.f32.mrf.mxu0
  %v2480 = vadd.f32 %v2207, %v2479
  %v2481 = vpop.f32.mrf.mxu0
  %v2482 = vadd.f32 %v2209, %v2481
  %v2483 = vpop.f32.mrf.mxu0
  %v2484 = vadd.f32 %v2211, %v2483
  %v2485 = vpop.f32.mrf.mxu0
  %v2486 = vadd.f32 %v2213, %v2485
  %2487 = vmatprep.mubr.bf16.mxu0 0
  %2488 = vmatmul.mubr.bf16.gmra.mxu0 %v1911
  %v2489 = vpop.f32.mrf.mxu0
  %v2490 = vadd.f32 %v2217, %v2489
  %v2491 = vpop.f32.mrf.mxu0
  %v2492 = vadd.f32 %v2219, %v2491
  %v2493 = vpop.f32.mrf.mxu0
  %v2494 = vadd.f32 %v2221, %v2493
  %v2495 = vpop.f32.mrf.mxu0
  %v2496 = vadd.f32 %v2223, %v2495
  %2497 = vmatprep.mubr.bf16.mxu0 0
  %2498 = vmatmul.mubr.bf16.gmra.mxu0 %v1912
  %v2499 = vpop.f32.mrf.mxu0
  %v2500 = vadd.f32 %v2227, %v2499
  %v2501 = vpop.f32.mrf.mxu0
  %v2502 = vadd.f32 %v2229, %v2501
  %v2503 = vpop.f32.mrf.mxu0
  %v2504 = vadd.f32 %v2231, %v2503
  %v2505 = vpop.f32.mrf.mxu0
  %v2506 = vadd.f32 %v2233, %v2505
  %2507 = vdwg.mxu0
  %s2508 = scalar_lea.vmem %s6, 4
  %v2509 = vld [vmem:[%s2508] ss:$8 sm:$0x3]
  %v2511 = vlaneseq
  %v2512 = vshrl.u32 %v2511, 7
  %v2513 = vsub.s32 0, %v2512
  %v2514 = vrot.slane %v2509, %v2513
  %v2515 = vlaneseq
  %v2516 = vshrl.u32 %v2515, 7
  %v2517 = vsub.s32 1, %v2516
  %v2518 = vrot.slane %v2509, %v2517
  %v2521 = vadd.f32 %v2350, %v2514
  %v2522 = vadd.f32 %v2352, %v2518
  %v2523 = vadd.f32 %v2354, %v2514
  %v2524 = vadd.f32 %v2356, %v2518
  %v2525 = vadd.f32 %v2360, %v2514
  %v2526 = vadd.f32 %v2362, %v2518
  %v2527 = vadd.f32 %v2364, %v2514
  %v2528 = vadd.f32 %v2366, %v2518
  %v2529 = vadd.f32 %v2370, %v2514
  %v2530 = vadd.f32 %v2372, %v2518
  %v2531 = vadd.f32 %v2374, %v2514
  %v2532 = vadd.f32 %v2376, %v2518
  %v2533 = vadd.f32 %v2380, %v2514
  %v2534 = vadd.f32 %v2382, %v2518
  %v2535 = vadd.f32 %v2384, %v2514
  %v2536 = vadd.f32 %v2386, %v2518
  %v2537 = vadd.f32 %v2390, %v2514
  %v2538 = vadd.f32 %v2392, %v2518
  %v2539 = vadd.f32 %v2394, %v2514
  %v2540 = vadd.f32 %v2396, %v2518
  %v2541 = vadd.f32 %v2400, %v2514
  %v2542 = vadd.f32 %v2402, %v2518
  %v2543 = vadd.f32 %v2404, %v2514
  %v2544 = vadd.f32 %v2406, %v2518
  %v2545 = vadd.f32 %v2410, %v2514
  %v2546 = vadd.f32 %v2412, %v2518
  %v2547 = vadd.f32 %v2414, %v2514
  %v2548 = vadd.f32 %v2416, %v2518
  %v2549 = vadd.f32 %v2420, %v2514
  %v2550 = vadd.f32 %v2422, %v2518
  %v2551 = vadd.f32 %v2424, %v2514
  %v2552 = vadd.f32 %v2426, %v2518
  %v2553 = vadd.f32 %v2430, %v2514
  %v2554 = vadd.f32 %v2432, %v2518
  %v2555 = vadd.f32 %v2434, %v2514
  %v2556 = vadd.f32 %v2436, %v2518
  %v2557 = vadd.f32 %v2440, %v2514
  %v2558 = vadd.f32 %v2442, %v2518
  %v2559 = vadd.f32 %v2444, %v2514
  %v2560 = vadd.f32 %v2446, %v2518
  %v2561 = vadd.f32 %v2450, %v2514
  %v2562 = vadd.f32 %v2452, %v2518
  %v2563 = vadd.f32 %v2454, %v2514
  %v2564 = vadd.f32 %v2456, %v2518
  %v2565 = vadd.f32 %v2460, %v2514
  %v2566 = vadd.f32 %v2462, %v2518
  %v2567 = vadd.f32 %v2464, %v2514
  %v2568 = vadd.f32 %v2466, %v2518
  %v2569 = vadd.f32 %v2470, %v2514
  %v2570 = vadd.f32 %v2472, %v2518
  %v2571 = vadd.f32 %v2474, %v2514
  %v2572 = vadd.f32 %v2476, %v2518
  %v2573 = vadd.f32 %v2480, %v2514
  %v2574 = vadd.f32 %v2482, %v2518
  %v2575 = vadd.f32 %v2484, %v2514
  %v2576 = vadd.f32 %v2486, %v2518
  %v2577 = vadd.f32 %v2490, %v2514
  %v2578 = vadd.f32 %v2492, %v2518
  %v2579 = vadd.f32 %v2494, %v2514
  %v2580 = vadd.f32 %v2496, %v2518
  %v2581 = vadd.f32 %v2500, %v2514
  %v2582 = vadd.f32 %v2502, %v2518
  %v2583 = vadd.f32 %v2504, %v2514
  %v2584 = vadd.f32 %v2506, %v2518
  %v2585 = vmax.f32 %v2521, 0.0
  %v2586 = vmax.f32 %v2522, 0.0
  %v2587 = vmax.f32 %v2523, 0.0
  %v2588 = vmax.f32 %v2524, 0.0
  %v2589 = vmax.f32 %v2525, 0.0
  %v2590 = vmax.f32 %v2526, 0.0
  %v2591 = vmax.f32 %v2527, 0.0
  %v2592 = vmax.f32 %v2528, 0.0
  %v2593 = vmax.f32 %v2529, 0.0
  %v2594 = vmax.f32 %v2530, 0.0
  %v2595 = vmax.f32 %v2531, 0.0
  %v2596 = vmax.f32 %v2532, 0.0
  %v2597 = vmax.f32 %v2533, 0.0
  %v2598 = vmax.f32 %v2534, 0.0
  %v2599 = vmax.f32 %v2535, 0.0
  %v2600 = vmax.f32 %v2536, 0.0
  %v2601 = vmax.f32 %v2537, 0.0
  %v2602 = vmax.f32 %v2538, 0.0
  %v2603 = vmax.f32 %v2539, 0.0
  %v2604 = vmax.f32 %v2540, 0.0
  %v2605 = vmax.f32 %v2541, 0.0
  %v2606 = vmax.f32 %v2542, 0.0
  %v2607 = vmax.f32 %v2543, 0.0
  %v2608 = vmax.f32 %v2544, 0.0
  %v2609 = vmax.f32 %v2545, 0.0
  %v2610 = vmax.f32 %v2546, 0.0
  %v2611 = vmax.f32 %v2547, 0.0
  %v2612 = vmax.f32 %v2548, 0.0
  %v2613 = vmax.f32 %v2549, 0.0
  %v2614 = vmax.f32 %v2550, 0.0
  %v2615 = vmax.f32 %v2551, 0.0
  %v2616 = vmax.f32 %v2552, 0.0
  %v2617 = vmax.f32 %v2553, 0.0
  %v2618 = vmax.f32 %v2554, 0.0
  %v2619 = vmax.f32 %v2555, 0.0
  %v2620 = vmax.f32 %v2556, 0.0
  %v2621 = vmax.f32 %v2557, 0.0
  %v2622 = vmax.f32 %v2558, 0.0
  %v2623 = vmax.f32 %v2559, 0.0
  %v2624 = vmax.f32 %v2560, 0.0
  %v2625 = vmax.f32 %v2561, 0.0
  %v2626 = vmax.f32 %v2562, 0.0
  %v2627 = vmax.f32 %v2563, 0.0
  %v2628 = vmax.f32 %v2564, 0.0
  %v2629 = vmax.f32 %v2565, 0.0
  %v2630 = vmax.f32 %v2566, 0.0
  %v2631 = vmax.f32 %v2567, 0.0
  %v2632 = vmax.f32 %v2568, 0.0
  %v2633 = vmax.f32 %v2569, 0.0
  %v2634 = vmax.f32 %v2570, 0.0
  %v2635 = vmax.f32 %v2571, 0.0
  %v2636 = vmax.f32 %v2572, 0.0
  %v2637 = vmax.f32 %v2573, 0.0
  %v2638 = vmax.f32 %v2574, 0.0
  %v2639 = vmax.f32 %v2575, 0.0
  %v2640 = vmax.f32 %v2576, 0.0
  %v2641 = vmax.f32 %v2577, 0.0
  %v2642 = vmax.f32 %v2578, 0.0
  %v2643 = vmax.f32 %v2579, 0.0
  %v2644 = vmax.f32 %v2580, 0.0
  %v2645 = vmax.f32 %v2581, 0.0
  %v2646 = vmax.f32 %v2582, 0.0
  %v2647 = vmax.f32 %v2583, 0.0
  %v2648 = vmax.f32 %v2584, 0.0
  %v2649 = vpack.c.bf16 %v2587, %v2585
  %v2650 = vpack.c.bf16 %v2588, %v2586
  %v2651 = vpack.c.bf16 %v2591, %v2589
  %v2652 = vpack.c.bf16 %v2592, %v2590
  %v2653 = vpack.c.bf16 %v2595, %v2593
  %v2654 = vpack.c.bf16 %v2596, %v2594
  %v2655 = vpack.c.bf16 %v2599, %v2597
  %v2656 = vpack.c.bf16 %v2600, %v2598
  %v2657 = vpack.c.bf16 %v2603, %v2601
  %v2658 = vpack.c.bf16 %v2604, %v2602
  %v2659 = vpack.c.bf16 %v2607, %v2605
  %v2660 = vpack.c.bf16 %v2608, %v2606
  %v2661 = vpack.c.bf16 %v2611, %v2609
  %v2662 = vpack.c.bf16 %v2612, %v2610
  %v2663 = vpack.c.bf16 %v2615, %v2613
  %v2664 = vpack.c.bf16 %v2616, %v2614
  %v2665 = vpack.c.bf16 %v2619, %v2617
  %v2666 = vpack.c.bf16 %v2620, %v2618
  %v2667 = vpack.c.bf16 %v2623, %v2621
  %v2668 = vpack.c.bf16 %v2624, %v2622
  %v2669 = vpack.c.bf16 %v2627, %v2625
  %v2670 = vpack.c.bf16 %v2628, %v2626
  %v2671 = vpack.c.bf16 %v2631, %v2629
  %v2672 = vpack.c.bf16 %v2632, %v2630
  %v2673 = vpack.c.bf16 %v2635, %v2633
  %v2674 = vpack.c.bf16 %v2636, %v2634
  %v2675 = vpack.c.bf16 %v2639, %v2637
  %v2676 = vpack.c.bf16 %v2640, %v2638
  %v2677 = vpack.c.bf16 %v2643, %v2641
  %v2678 = vpack.c.bf16 %v2644, %v2642
  %v2679 = vpack.c.bf16 %v2647, %v2645
  %v2680 = vpack.c.bf16 %v2648, %v2646
  %s2681 = scalar_lea.vmem %s2, 512
  %v2682 = vld [vmem:[%s2681] sm:$0xff]
  %v2683 = vld [vmem:[%s2681 + $0x8] sm:$0xff]
  %v2684 = vld [vmem:[%s2681 + $0x10] sm:$0xff]
  %v2685 = vld [vmem:[%s2681 + $0x18] sm:$0xff]
  %v2686 = vld [vmem:[%s2681 + $0x20] sm:$0xff]
  %v2687 = vld [vmem:[%s2681 + $0x28] sm:$0xff]
  %v2688 = vld [vmem:[%s2681 + $0x30] sm:$0xff]
  %v2689 = vld [vmem:[%s2681 + $0x38] sm:$0xff]
  %v2690 = vld [vmem:[%s2681 + $0x40] sm:$0xff]
  %v2691 = vld [vmem:[%s2681 + $0x48] sm:$0xff]
  %v2692 = vld [vmem:[%s2681 + $0x50] sm:$0xff]
  %v2693 = vld [vmem:[%s2681 + $0x58] sm:$0xff]
  %v2694 = vld [vmem:[%s2681 + $0x60] sm:$0xff]
  %v2695 = vld [vmem:[%s2681 + $0x68] sm:$0xff]
  %v2696 = vld [vmem:[%s2681 + $0x70] sm:$0xff]
  %v2697 = vld [vmem:[%s2681 + $0x78] sm:$0xff]
  %v2698 = vld [vmem:[%s2681 + $0x80] sm:$0xff]
  %v2699 = vld [vmem:[%s2681 + $0x88] sm:$0xff]
  %v2700 = vld [vmem:[%s2681 + $0x90] sm:$0xff]
  %v2701 = vld [vmem:[%s2681 + $0x98] sm:$0xff]
  %v2702 = vld [vmem:[%s2681 + $0xa0] sm:$0xff]
  %v2703 = vld [vmem:[%s2681 + $0xa8] sm:$0xff]
  %v2704 = vld [vmem:[%s2681 + $0xb0] sm:$0xff]
  %v2705 = vld [vmem:[%s2681 + $0xb8] sm:$0xff]
  %v2706 = vld [vmem:[%s2681 + $0xc0] sm:$0xff]
  %v2707 = vld [vmem:[%s2681 + $0xc8] sm:$0xff]
  %v2708 = vld [vmem:[%s2681 + $0xd0] sm:$0xff]
  %v2709 = vld [vmem:[%s2681 + $0xd8] sm:$0xff]
  %v2710 = vld [vmem:[%s2681 + $0xe0] sm:$0xff]
  %v2711 = vld [vmem:[%s2681 + $0xe8] sm:$0xff]
  %v2712 = vld [vmem:[%s2681 + $0xf0] sm:$0xff]
  %v2713 = vld [vmem:[%s2681 + $0xf8] sm:$0xff]
  %s2714 = scalar_lea.vmem %s6, 5
  %v2715 = vld [vmem:[%s2714] ss:$8 sm:$0x3]
  %v2717 = vlaneseq
  %v2718 = vshrl.u32 %v2717, 7
  %v2719 = vsub.s32 0, %v2718
  %v2720 = vrot.slane %v2715, %v2719
  %v2721 = vlaneseq
  %v2722 = vshrl.u32 %v2721, 7
  %v2723 = vsub.s32 1, %v2722
  %v2724 = vrot.slane %v2715, %v2723
  %v2759 = vunpack.c.l.b16 %v2682
  %v2760 = vunpack.c.h.b16 %v2682
  %v2761 = vunpack.c.l.b16 %v2683
  %v2762 = vunpack.c.h.b16 %v2683
  %v2763 = vunpack.c.l.b16 %v2684
  %v2764 = vunpack.c.h.b16 %v2684
  %v2765 = vunpack.c.l.b16 %v2685
  %v2766 = vunpack.c.h.b16 %v2685
  %v2767 = vunpack.c.l.b16 %v2686
  %v2768 = vunpack.c.h.b16 %v2686
  %v2769 = vunpack.c.l.b16 %v2687
  %v2770 = vunpack.c.h.b16 %v2687
  %v2771 = vunpack.c.l.b16 %v2688
  %v2772 = vunpack.c.h.b16 %v2688
  %v2773 = vunpack.c.l.b16 %v2689
  %v2774 = vunpack.c.h.b16 %v2689
  %v2775 = vunpack.c.l.b16 %v2690
  %v2776 = vunpack.c.h.b16 %v2690
  %v2777 = vunpack.c.l.b16 %v2691
  %v2778 = vunpack.c.h.b16 %v2691
  %v2779 = vunpack.c.l.b16 %v2692
  %v2780 = vunpack.c.h.b16 %v2692
  %v2781 = vunpack.c.l.b16 %v2693
  %v2782 = vunpack.c.h.b16 %v2693
  %v2783 = vunpack.c.l.b16 %v2694
  %v2784 = vunpack.c.h.b16 %v2694
  %v2785 = vunpack.c.l.b16 %v2695
  %v2786 = vunpack.c.h.b16 %v2695
  %v2787 = vunpack.c.l.b16 %v2696
  %v2788 = vunpack.c.h.b16 %v2696
  %v2789 = vunpack.c.l.b16 %v2697
  %v2790 = vunpack.c.h.b16 %v2697
  %v2791 = vunpack.c.l.b16 %v2698
  %v2792 = vunpack.c.h.b16 %v2698
  %v2793 = vunpack.c.l.b16 %v2699
  %v2794 = vunpack.c.h.b16 %v2699
  %v2795 = vunpack.c.l.b16 %v2700
  %v2796 = vunpack.c.h.b16 %v2700
  %v2797 = vunpack.c.l.b16 %v2701
  %v2798 = vunpack.c.h.b16 %v2701
  %v2799 = vunpack.c.l.b16 %v2702
  %v2800 = vunpack.c.h.b16 %v2702
  %v2801 = vunpack.c.l.b16 %v2703
  %v2802 = vunpack.c.h.b16 %v2703
  %v2803 = vunpack.c.l.b16 %v2704
  %v2804 = vunpack.c.h.b16 %v2704
  %v2805 = vunpack.c.l.b16 %v2705
  %v2806 = vunpack.c.h.b16 %v2705
  %v2807 = vunpack.c.l.b16 %v2706
  %v2808 = vunpack.c.h.b16 %v2706
  %v2809 = vunpack.c.l.b16 %v2707
  %v2810 = vunpack.c.h.b16 %v2707
  %v2811 = vunpack.c.l.b16 %v2708
  %v2812 = vunpack.c.h.b16 %v2708
  %v2813 = vunpack.c.l.b16 %v2709
  %v2814 = vunpack.c.h.b16 %v2709
  %v2815 = vunpack.c.l.b16 %v2710
  %v2816 = vunpack.c.h.b16 %v2710
  %v2817 = vunpack.c.l.b16 %v2711
  %v2818 = vunpack.c.h.b16 %v2711
  %v2819 = vunpack.c.l.b16 %v2712
  %v2820 = vunpack.c.h.b16 %v2712
  %v2821 = vunpack.c.l.b16 %v2713
  %v2822 = vunpack.c.h.b16 %v2713
  %v2823 = vpack.c.b16 %v2761, %v2759
  %v2824 = vpack.c.b16 %v2762, %v2760
  %v2825 = vpack.c.b16 %v2765, %v2763
  %v2826 = vpack.c.b16 %v2766, %v2764
  %v2827 = vpack.c.b16 %v2769, %v2767
  %v2828 = vpack.c.b16 %v2770, %v2768
  %v2829 = vpack.c.b16 %v2773, %v2771
  %v2830 = vpack.c.b16 %v2774, %v2772
  %v2831 = vpack.c.b16 %v2777, %v2775
  %v2832 = vpack.c.b16 %v2778, %v2776
  %v2833 = vpack.c.b16 %v2781, %v2779
  %v2834 = vpack.c.b16 %v2782, %v2780
  %v2835 = vpack.c.b16 %v2785, %v2783
  %v2836 = vpack.c.b16 %v2786, %v2784
  %v2837 = vpack.c.b16 %v2789, %v2787
  %v2838 = vpack.c.b16 %v2790, %v2788
  %v2839 = vpack.c.b16 %v2793, %v2791
  %v2840 = vpack.c.b16 %v2794, %v2792
  %v2841 = vpack.c.b16 %v2797, %v2795
  %v2842 = vpack.c.b16 %v2798, %v2796
  %v2843 = vpack.c.b16 %v2801, %v2799
  %v2844 = vpack.c.b16 %v2802, %v2800
  %v2845 = vpack.c.b16 %v2805, %v2803
  %v2846 = vpack.c.b16 %v2806, %v2804
  %v2847 = vpack.c.b16 %v2809, %v2807
  %v2848 = vpack.c.b16 %v2810, %v2808
  %v2849 = vpack.c.b16 %v2813, %v2811
  %v2850 = vpack.c.b16 %v2814, %v2812
  %v2851 = vpack.c.b16 %v2817, %v2815
  %v2852 = vpack.c.b16 %v2818, %v2816
  %v2853 = vpack.c.b16 %v2821, %v2819
  %v2854 = vpack.c.b16 %v2822, %v2820
  %2887 = vmatprep.subr.bf16.mxu0 %v2838
  %2888 = vmatpush1.bf16.msra.mxu0 %v2837
  %2889 = vmatprep.subr.bf16.mxu0 %v2836
  %2890 = vmatpush1.bf16.msra.mxu0 %v2835
  %2891 = vmatprep.subr.bf16.mxu0 %v2834
  %2892 = vmatpush1.bf16.msra.mxu0 %v2833
  %2893 = vmatprep.subr.bf16.mxu0 %v2832
  %2894 = vmatpush1.bf16.msra.mxu0 %v2831
  %2895 = vmatprep.subr.bf16.mxu0 %v2830
  %2896 = vmatpush1.bf16.msra.mxu0 %v2829
  %2897 = vmatprep.subr.bf16.mxu0 %v2828
  %2898 = vmatpush1.bf16.msra.mxu0 %v2827
  %2899 = vmatprep.subr.bf16.mxu0 %v2826
  %2900 = vmatpush1.bf16.msra.mxu0 %v2825
  %2901 = vmatprep.subr.bf16.mxu0 %v2824
  %2902 = vmatpush1.bf16.msra.mxu0 %v2823
  %2903 = vmatprep.subr.bf16.mxu0 %v2854
  %2904 = vmatpush2.bf16.msra.mxu0 %v2853
  %2905 = vmatprep.subr.bf16.mxu0 %v2852
  %2906 = vmatpush2.bf16.msra.mxu0 %v2851
  %2907 = vmatprep.subr.bf16.mxu0 %v2850
  %2908 = vmatpush2.bf16.msra.mxu0 %v2849
  %2909 = vmatprep.subr.bf16.mxu0 %v2848
  %2910 = vmatpush2.bf16.msra.mxu0 %v2847
  %2911 = vmatprep.subr.bf16.mxu0 %v2846
  %2912 = vmatpush2.bf16.msra.mxu0 %v2845
  %2913 = vmatprep.subr.bf16.mxu0 %v2844
  %2914 = vmatpush2.bf16.msra.mxu0 %v2843
  %2915 = vmatprep.subr.bf16.mxu0 %v2842
  %2916 = vmatpush2.bf16.msra.mxu0 %v2841
  %2917 = vmatprep.subr.bf16.mxu0 %v2840
  %2918 = vmatpush2.bf16.msra.mxu0 %v2839
  %2919 = vmatprep.mubr.bf16.mxu0 %v2650
  %2920 = vmatmul.mubr.bf16.gmra.mxu0 %v2649
  %v2921 = vpop.f32.mrf.mxu0
  %v2922 = vadd.f32 %v2720, %v2921
  %v2923 = vpop.f32.mrf.mxu0
  %v2924 = vadd.f32 %v2724, %v2923
  %v2925 = vpop.f32.mrf.mxu0
  %v2926 = vadd.f32 %v2720, %v2925
  %v2927 = vpop.f32.mrf.mxu0
  %v2928 = vadd.f32 %v2724, %v2927
  %2929 = vmatprep.mubr.bf16.mxu0 %v2652
  %2930 = vmatmul.mubr.bf16.gmra.mxu0 %v2651
  %v2931 = vpop.f32.mrf.mxu0
  %v2932 = vadd.f32 %v2720, %v2931
  %v2933 = vpop.f32.mrf.mxu0
  %v2934 = vadd.f32 %v2724, %v2933
  %v2935 = vpop.f32.mrf.mxu0
  %v2936 = vadd.f32 %v2720, %v2935
  %v2937 = vpop.f32.mrf.mxu0
  %v2938 = vadd.f32 %v2724, %v2937
  %2939 = vmatprep.mubr.bf16.mxu0 %v2654
  %2940 = vmatmul.mubr.bf16.gmra.mxu0 %v2653
  %v2941 = vpop.f32.mrf.mxu0
  %v2942 = vadd.f32 %v2720, %v2941
  %v2943 = vpop.f32.mrf.mxu0
  %v2944 = vadd.f32 %v2724, %v2943
  %v2945 = vpop.f32.mrf.mxu0
  %v2946 = vadd.f32 %v2720, %v2945
  %v2947 = vpop.f32.mrf.mxu0
  %v2948 = vadd.f32 %v2724, %v2947
  %2949 = vmatprep.mubr.bf16.mxu0 %v2656
  %2950 = vmatmul.mubr.bf16.gmra.mxu0 %v2655
  %v2951 = vpop.f32.mrf.mxu0
  %v2952 = vadd.f32 %v2720, %v2951
  %v2953 = vpop.f32.mrf.mxu0
  %v2954 = vadd.f32 %v2724, %v2953
  %v2955 = vpop.f32.mrf.mxu0
  %v2956 = vadd.f32 %v2720, %v2955
  %v2957 = vpop.f32.mrf.mxu0
  %v2958 = vadd.f32 %v2724, %v2957
  %2959 = vmatprep.mubr.bf16.mxu0 %v2658
  %2960 = vmatmul.mubr.bf16.gmra.mxu0 %v2657
  %v2961 = vpop.f32.mrf.mxu0
  %v2962 = vadd.f32 %v2720, %v2961
  %v2963 = vpop.f32.mrf.mxu0
  %v2964 = vadd.f32 %v2724, %v2963
  %v2965 = vpop.f32.mrf.mxu0
  %v2966 = vadd.f32 %v2720, %v2965
  %v2967 = vpop.f32.mrf.mxu0
  %v2968 = vadd.f32 %v2724, %v2967
  %2969 = vmatprep.mubr.bf16.mxu0 %v2660
  %2970 = vmatmul.mubr.bf16.gmra.mxu0 %v2659
  %v2971 = vpop.f32.mrf.mxu0
  %v2972 = vadd.f32 %v2720, %v2971
  %v2973 = vpop.f32.mrf.mxu0
  %v2974 = vadd.f32 %v2724, %v2973
  %v2975 = vpop.f32.mrf.mxu0
  %v2976 = vadd.f32 %v2720, %v2975
  %v2977 = vpop.f32.mrf.mxu0
  %v2978 = vadd.f32 %v2724, %v2977
  %2979 = vmatprep.mubr.bf16.mxu0 %v2662
  %2980 = vmatmul.mubr.bf16.gmra.mxu0 %v2661
  %v2981 = vpop.f32.mrf.mxu0
  %v2982 = vadd.f32 %v2720, %v2981
  %v2983 = vpop.f32.mrf.mxu0
  %v2984 = vadd.f32 %v2724, %v2983
  %v2985 = vpop.f32.mrf.mxu0
  %v2986 = vadd.f32 %v2720, %v2985
  %v2987 = vpop.f32.mrf.mxu0
  %v2988 = vadd.f32 %v2724, %v2987
  %2989 = vmatprep.mubr.bf16.mxu0 %v2664
  %2990 = vmatmul.mubr.bf16.gmra.mxu0 %v2663
  %v2991 = vpop.f32.mrf.mxu0
  %v2992 = vadd.f32 %v2720, %v2991
  %v2993 = vpop.f32.mrf.mxu0
  %v2994 = vadd.f32 %v2724, %v2993
  %v2995 = vpop.f32.mrf.mxu0
  %v2996 = vadd.f32 %v2720, %v2995
  %v2997 = vpop.f32.mrf.mxu0
  %v2998 = vadd.f32 %v2724, %v2997
  %2999 = vmatprep.mubr.bf16.mxu0 %v2666
  %3000 = vmatmul.mubr.bf16.gmra.mxu0 %v2665
  %v3001 = vpop.f32.mrf.mxu0
  %v3002 = vadd.f32 %v2720, %v3001
  %v3003 = vpop.f32.mrf.mxu0
  %v3004 = vadd.f32 %v2724, %v3003
  %v3005 = vpop.f32.mrf.mxu0
  %v3006 = vadd.f32 %v2720, %v3005
  %v3007 = vpop.f32.mrf.mxu0
  %v3008 = vadd.f32 %v2724, %v3007
  %3009 = vmatprep.mubr.bf16.mxu0 %v2668
  %3010 = vmatmul.mubr.bf16.gmra.mxu0 %v2667
  %v3011 = vpop.f32.mrf.mxu0
  %v3012 = vadd.f32 %v2720, %v3011
  %v3013 = vpop.f32.mrf.mxu0
  %v3014 = vadd.f32 %v2724, %v3013
  %v3015 = vpop.f32.mrf.mxu0
  %v3016 = vadd.f32 %v2720, %v3015
  %v3017 = vpop.f32.mrf.mxu0
  %v3018 = vadd.f32 %v2724, %v3017
  %3019 = vmatprep.mubr.bf16.mxu0 %v2670
  %3020 = vmatmul.mubr.bf16.gmra.mxu0 %v2669
  %v3021 = vpop.f32.mrf.mxu0
  %v3022 = vadd.f32 %v2720, %v3021
  %v3023 = vpop.f32.mrf.mxu0
  %v3024 = vadd.f32 %v2724, %v3023
  %v3025 = vpop.f32.mrf.mxu0
  %v3026 = vadd.f32 %v2720, %v3025
  %v3027 = vpop.f32.mrf.mxu0
  %v3028 = vadd.f32 %v2724, %v3027
  %3029 = vmatprep.mubr.bf16.mxu0 %v2672
  %3030 = vmatmul.mubr.bf16.gmra.mxu0 %v2671
  %v3031 = vpop.f32.mrf.mxu0
  %v3032 = vadd.f32 %v2720, %v3031
  %v3033 = vpop.f32.mrf.mxu0
  %v3034 = vadd.f32 %v2724, %v3033
  %v3035 = vpop.f32.mrf.mxu0
  %v3036 = vadd.f32 %v2720, %v3035
  %v3037 = vpop.f32.mrf.mxu0
  %v3038 = vadd.f32 %v2724, %v3037
  %3039 = vmatprep.mubr.bf16.mxu0 %v2674
  %3040 = vmatmul.mubr.bf16.gmra.mxu0 %v2673
  %v3041 = vpop.f32.mrf.mxu0
  %v3042 = vadd.f32 %v2720, %v3041
  %v3043 = vpop.f32.mrf.mxu0
  %v3044 = vadd.f32 %v2724, %v3043
  %v3045 = vpop.f32.mrf.mxu0
  %v3046 = vadd.f32 %v2720, %v3045
  %v3047 = vpop.f32.mrf.mxu0
  %v3048 = vadd.f32 %v2724, %v3047
  %3049 = vmatprep.mubr.bf16.mxu0 %v2676
  %3050 = vmatmul.mubr.bf16.gmra.mxu0 %v2675
  %v3051 = vpop.f32.mrf.mxu0
  %v3052 = vadd.f32 %v2720, %v3051
  %v3053 = vpop.f32.mrf.mxu0
  %v3054 = vadd.f32 %v2724, %v3053
  %v3055 = vpop.f32.mrf.mxu0
  %v3056 = vadd.f32 %v2720, %v3055
  %v3057 = vpop.f32.mrf.mxu0
  %v3058 = vadd.f32 %v2724, %v3057
  %3059 = vmatprep.mubr.bf16.mxu0 %v2678
  %3060 = vmatmul.mubr.bf16.gmra.mxu0 %v2677
  %v3061 = vpop.f32.mrf.mxu0
  %v3062 = vadd.f32 %v2720, %v3061
  %v3063 = vpop.f32.mrf.mxu0
  %v3064 = vadd.f32 %v2724, %v3063
  %v3065 = vpop.f32.mrf.mxu0
  %v3066 = vadd.f32 %v2720, %v3065
  %v3067 = vpop.f32.mrf.mxu0
  %v3068 = vadd.f32 %v2724, %v3067
  %3069 = vmatprep.mubr.bf16.mxu0 %v2680
  %3070 = vmatmul.mubr.bf16.gmra.mxu0 %v2679
  %v3071 = vpop.f32.mrf.mxu0
  %v3072 = vadd.f32 %v2720, %v3071
  %v3073 = vpop.f32.mrf.mxu0
  %v3074 = vadd.f32 %v2724, %v3073
  %v3075 = vpop.f32.mrf.mxu0
  %v3076 = vadd.f32 %v2720, %v3075
  %v3077 = vpop.f32.mrf.mxu0
  %v3078 = vadd.f32 %v2724, %v3077
  %3079 = vdwg.mxu0
  %v3080 = vmax.f32 %v2922, 0.0
  %v3081 = vmax.f32 %v2924, 0.0
  %v3082 = vmax.f32 %v2926, 0.0
  %v3083 = vmax.f32 %v2928, 0.0
  %v3084 = vmax.f32 %v2932, 0.0
  %v3085 = vmax.f32 %v2934, 0.0
  %v3086 = vmax.f32 %v2936, 0.0
  %v3087 = vmax.f32 %v2938, 0.0
  %v3088 = vmax.f32 %v2942, 0.0
  %v3089 = vmax.f32 %v2944, 0.0
  %v3090 = vmax.f32 %v2946, 0.0
  %v3091 = vmax.f32 %v2948, 0.0
  %v3092 = vmax.f32 %v2952, 0.0
  %v3093 = vmax.f32 %v2954, 0.0
  %v3094 = vmax.f32 %v2956, 0.0
  %v3095 = vmax.f32 %v2958, 0.0
  %v3096 = vmax.f32 %v2962, 0.0
  %v3097 = vmax.f32 %v2964, 0.0
  %v3098 = vmax.f32 %v2966, 0.0
  %v3099 = vmax.f32 %v2968, 0.0
  %v3100 = vmax.f32 %v2972, 0.0
  %v3101 = vmax.f32 %v2974, 0.0
  %v3102 = vmax.f32 %v2976, 0.0
  %v3103 = vmax.f32 %v2978, 0.0
  %v3104 = vmax.f32 %v2982, 0.0
  %v3105 = vmax.f32 %v2984, 0.0
  %v3106 = vmax.f32 %v2986, 0.0
  %v3107 = vmax.f32 %v2988, 0.0
  %v3108 = vmax.f32 %v2992, 0.0
  %v3109 = vmax.f32 %v2994, 0.0
  %v3110 = vmax.f32 %v2996, 0.0
  %v3111 = vmax.f32 %v2998, 0.0
  %v3112 = vmax.f32 %v3002, 0.0
  %v3113 = vmax.f32 %v3004, 0.0
  %v3114 = vmax.f32 %v3006, 0.0
  %v3115 = vmax.f32 %v3008, 0.0
  %v3116 = vmax.f32 %v3012, 0.0
  %v3117 = vmax.f32 %v3014, 0.0
  %v3118 = vmax.f32 %v3016, 0.0
  %v3119 = vmax.f32 %v3018, 0.0
  %v3120 = vmax.f32 %v3022, 0.0
  %v3121 = vmax.f32 %v3024, 0.0
  %v3122 = vmax.f32 %v3026, 0.0
  %v3123 = vmax.f32 %v3028, 0.0
  %v3124 = vmax.f32 %v3032, 0.0
  %v3125 = vmax.f32 %v3034, 0.0
  %v3126 = vmax.f32 %v3036, 0.0
  %v3127 = vmax.f32 %v3038, 0.0
  %v3128 = vmax.f32 %v3042, 0.0
  %v3129 = vmax.f32 %v3044, 0.0
  %v3130 = vmax.f32 %v3046, 0.0
  %v3131 = vmax.f32 %v3048, 0.0
  %v3132 = vmax.f32 %v3052, 0.0
  %v3133 = vmax.f32 %v3054, 0.0
  %v3134 = vmax.f32 %v3056, 0.0
  %v3135 = vmax.f32 %v3058, 0.0
  %v3136 = vmax.f32 %v3062, 0.0
  %v3137 = vmax.f32 %v3064, 0.0
  %v3138 = vmax.f32 %v3066, 0.0
  %v3139 = vmax.f32 %v3068, 0.0
  %v3140 = vmax.f32 %v3072, 0.0
  %v3141 = vmax.f32 %v3074, 0.0
  %v3142 = vmax.f32 %v3076, 0.0
  %v3143 = vmax.f32 %v3078, 0.0
  %v3144 = vpack.c.bf16 %v3082, %v3080
  %v3145 = vpack.c.bf16 %v3083, %v3081
  %v3146 = vpack.c.bf16 %v3086, %v3084
  %v3147 = vpack.c.bf16 %v3087, %v3085
  %v3148 = vpack.c.bf16 %v3090, %v3088
  %v3149 = vpack.c.bf16 %v3091, %v3089
  %v3150 = vpack.c.bf16 %v3094, %v3092
  %v3151 = vpack.c.bf16 %v3095, %v3093
  %v3152 = vpack.c.bf16 %v3098, %v3096
  %v3153 = vpack.c.bf16 %v3099, %v3097
  %v3154 = vpack.c.bf16 %v3102, %v3100
  %v3155 = vpack.c.bf16 %v3103, %v3101
  %v3156 = vpack.c.bf16 %v3106, %v3104
  %v3157 = vpack.c.bf16 %v3107, %v3105
  %v3158 = vpack.c.bf16 %v3110, %v3108
  %v3159 = vpack.c.bf16 %v3111, %v3109
  %v3160 = vpack.c.bf16 %v3114, %v3112
  %v3161 = vpack.c.bf16 %v3115, %v3113
  %v3162 = vpack.c.bf16 %v3118, %v3116
  %v3163 = vpack.c.bf16 %v3119, %v3117
  %v3164 = vpack.c.bf16 %v3122, %v3120
  %v3165 = vpack.c.bf16 %v3123, %v3121
  %v3166 = vpack.c.bf16 %v3126, %v3124
  %v3167 = vpack.c.bf16 %v3127, %v3125
  %v3168 = vpack.c.bf16 %v3130, %v3128
  %v3169 = vpack.c.bf16 %v3131, %v3129
  %v3170 = vpack.c.bf16 %v3134, %v3132
  %v3171 = vpack.c.bf16 %v3135, %v3133
  %v3172 = vpack.c.bf16 %v3138, %v3136
  %v3173 = vpack.c.bf16 %v3139, %v3137
  %v3174 = vpack.c.bf16 %v3142, %v3140
  %v3175 = vpack.c.bf16 %v3143, %v3141
  %s3176 = scalar_lea.vmem %s2, 768
  %v3177 = vld [vmem:[%s3176] sm:$0xff]
  %v3178 = vld [vmem:[%s3176 + $0x8] sm:$0xff]
  %v3179 = vld [vmem:[%s3176 + $0x10] sm:$0xff]
  %v3180 = vld [vmem:[%s3176 + $0x18] sm:$0xff]
  %v3181 = vld [vmem:[%s3176 + $0x20] sm:$0xff]
  %v3182 = vld [vmem:[%s3176 + $0x28] sm:$0xff]
  %v3183 = vld [vmem:[%s3176 + $0x30] sm:$0xff]
  %v3184 = vld [vmem:[%s3176 + $0x38] sm:$0xff]
  %v3185 = vld [vmem:[%s3176 + $0x40] sm:$0xff]
  %v3186 = vld [vmem:[%s3176 + $0x48] sm:$0xff]
  %v3187 = vld [vmem:[%s3176 + $0x50] sm:$0xff]
  %v3188 = vld [vmem:[%s3176 + $0x58] sm:$0xff]
  %v3189 = vld [vmem:[%s3176 + $0x60] sm:$0xff]
  %v3190 = vld [vmem:[%s3176 + $0x68] sm:$0xff]
  %v3191 = vld [vmem:[%s3176 + $0x70] sm:$0xff]
  %v3192 = vld [vmem:[%s3176 + $0x78] sm:$0xff]
  %v3193 = vld [vmem:[%s3176 + $0x80] sm:$0xff]
  %v3194 = vld [vmem:[%s3176 + $0x88] sm:$0xff]
  %v3195 = vld [vmem:[%s3176 + $0x90] sm:$0xff]
  %v3196 = vld [vmem:[%s3176 + $0x98] sm:$0xff]
  %v3197 = vld [vmem:[%s3176 + $0xa0] sm:$0xff]
  %v3198 = vld [vmem:[%s3176 + $0xa8] sm:$0xff]
  %v3199 = vld [vmem:[%s3176 + $0xb0] sm:$0xff]
  %v3200 = vld [vmem:[%s3176 + $0xb8] sm:$0xff]
  %v3201 = vld [vmem:[%s3176 + $0xc0] sm:$0xff]
  %v3202 = vld [vmem:[%s3176 + $0xc8] sm:$0xff]
  %v3203 = vld [vmem:[%s3176 + $0xd0] sm:$0xff]
  %v3204 = vld [vmem:[%s3176 + $0xd8] sm:$0xff]
  %v3205 = vld [vmem:[%s3176 + $0xe0] sm:$0xff]
  %v3206 = vld [vmem:[%s3176 + $0xe8] sm:$0xff]
  %v3207 = vld [vmem:[%s3176 + $0xf0] sm:$0xff]
  %v3208 = vld [vmem:[%s3176 + $0xf8] sm:$0xff]
  %s3209 = scalar_lea.vmem %s6, 6
  %v3210 = vld [vmem:[%s3209] ss:$8 sm:$0x3]
  %v3212 = vlaneseq
  %v3213 = vshrl.u32 %v3212, 7
  %v3214 = vsub.s32 0, %v3213
  %v3215 = vrot.slane %v3210, %v3214
  %v3216 = vlaneseq
  %v3217 = vshrl.u32 %v3216, 7
  %v3218 = vsub.s32 1, %v3217
  %v3219 = vrot.slane %v3210, %v3218
  %v3254 = vunpack.c.l.b16 %v3177
  %v3255 = vunpack.c.h.b16 %v3177
  %v3256 = vunpack.c.l.b16 %v3178
  %v3257 = vunpack.c.h.b16 %v3178
  %v3258 = vunpack.c.l.b16 %v3179
  %v3259 = vunpack.c.h.b16 %v3179
  %v3260 = vunpack.c.l.b16 %v3180
  %v3261 = vunpack.c.h.b16 %v3180
  %v3262 = vunpack.c.l.b16 %v3181
  %v3263 = vunpack.c.h.b16 %v3181
  %v3264 = vunpack.c.l.b16 %v3182
  %v3265 = vunpack.c.h.b16 %v3182
  %v3266 = vunpack.c.l.b16 %v3183
  %v3267 = vunpack.c.h.b16 %v3183
  %v3268 = vunpack.c.l.b16 %v3184
  %v3269 = vunpack.c.h.b16 %v3184
  %v3270 = vunpack.c.l.b16 %v3185
  %v3271 = vunpack.c.h.b16 %v3185
  %v3272 = vunpack.c.l.b16 %v3186
  %v3273 = vunpack.c.h.b16 %v3186
  %v3274 = vunpack.c.l.b16 %v3187
  %v3275 = vunpack.c.h.b16 %v3187
  %v3276 = vunpack.c.l.b16 %v3188
  %v3277 = vunpack.c.h.b16 %v3188
  %v3278 = vunpack.c.l.b16 %v3189
  %v3279 = vunpack.c.h.b16 %v3189
  %v3280 = vunpack.c.l.b16 %v3190
  %v3281 = vunpack.c.h.b16 %v3190
  %v3282 = vunpack.c.l.b16 %v3191
  %v3283 = vunpack.c.h.b16 %v3191
  %v3284 = vunpack.c.l.b16 %v3192
  %v3285 = vunpack.c.h.b16 %v3192
  %v3286 = vunpack.c.l.b16 %v3193
  %v3287 = vunpack.c.h.b16 %v3193
  %v3288 = vunpack.c.l.b16 %v3194
  %v3289 = vunpack.c.h.b16 %v3194
  %v3290 = vunpack.c.l.b16 %v3195
  %v3291 = vunpack.c.h.b16 %v3195
  %v3292 = vunpack.c.l.b16 %v3196
  %v3293 = vunpack.c.h.b16 %v3196
  %v3294 = vunpack.c.l.b16 %v3197
  %v3295 = vunpack.c.h.b16 %v3197
  %v3296 = vunpack.c.l.b16 %v3198
  %v3297 = vunpack.c.h.b16 %v3198
  %v3298 = vunpack.c.l.b16 %v3199
  %v3299 = vunpack.c.h.b16 %v3199
  %v3300 = vunpack.c.l.b16 %v3200
  %v3301 = vunpack.c.h.b16 %v3200
  %v3302 = vunpack.c.l.b16 %v3201
  %v3303 = vunpack.c.h.b16 %v3201
  %v3304 = vunpack.c.l.b16 %v3202
  %v3305 = vunpack.c.h.b16 %v3202
  %v3306 = vunpack.c.l.b16 %v3203
  %v3307 = vunpack.c.h.b16 %v3203
  %v3308 = vunpack.c.l.b16 %v3204
  %v3309 = vunpack.c.h.b16 %v3204
  %v3310 = vunpack.c.l.b16 %v3205
  %v3311 = vunpack.c.h.b16 %v3205
  %v3312 = vunpack.c.l.b16 %v3206
  %v3313 = vunpack.c.h.b16 %v3206
  %v3314 = vunpack.c.l.b16 %v3207
  %v3315 = vunpack.c.h.b16 %v3207
  %v3316 = vunpack.c.l.b16 %v3208
  %v3317 = vunpack.c.h.b16 %v3208
  %v3318 = vpack.c.b16 %v3256, %v3254
  %v3319 = vpack.c.b16 %v3257, %v3255
  %v3320 = vpack.c.b16 %v3260, %v3258
  %v3321 = vpack.c.b16 %v3261, %v3259
  %v3322 = vpack.c.b16 %v3264, %v3262
  %v3323 = vpack.c.b16 %v3265, %v3263
  %v3324 = vpack.c.b16 %v3268, %v3266
  %v3325 = vpack.c.b16 %v3269, %v3267
  %v3326 = vpack.c.b16 %v3272, %v3270
  %v3327 = vpack.c.b16 %v3273, %v3271
  %v3328 = vpack.c.b16 %v3276, %v3274
  %v3329 = vpack.c.b16 %v3277, %v3275
  %v3330 = vpack.c.b16 %v3280, %v3278
  %v3331 = vpack.c.b16 %v3281, %v3279
  %v3332 = vpack.c.b16 %v3284, %v3282
  %v3333 = vpack.c.b16 %v3285, %v3283
  %v3334 = vpack.c.b16 %v3288, %v3286
  %v3335 = vpack.c.b16 %v3289, %v3287
  %v3336 = vpack.c.b16 %v3292, %v3290
  %v3337 = vpack.c.b16 %v3293, %v3291
  %v3338 = vpack.c.b16 %v3296, %v3294
  %v3339 = vpack.c.b16 %v3297, %v3295
  %v3340 = vpack.c.b16 %v3300, %v3298
  %v3341 = vpack.c.b16 %v3301, %v3299
  %v3342 = vpack.c.b16 %v3304, %v3302
  %v3343 = vpack.c.b16 %v3305, %v3303
  %v3344 = vpack.c.b16 %v3308, %v3306
  %v3345 = vpack.c.b16 %v3309, %v3307
  %v3346 = vpack.c.b16 %v3312, %v3310
  %v3347 = vpack.c.b16 %v3313, %v3311
  %v3348 = vpack.c.b16 %v3316, %v3314
  %v3349 = vpack.c.b16 %v3317, %v3315
  %3382 = vmatprep.subr.bf16.mxu0 %v3333
  %3383 = vmatpush1.bf16.msra.mxu0 %v3332
  %3384 = vmatprep.subr.bf16.mxu0 %v3331
  %3385 = vmatpush1.bf16.msra.mxu0 %v3330
  %3386 = vmatprep.subr.bf16.mxu0 %v3329
  %3387 = vmatpush1.bf16.msra.mxu0 %v3328
  %3388 = vmatprep.subr.bf16.mxu0 %v3327
  %3389 = vmatpush1.bf16.msra.mxu0 %v3326
  %3390 = vmatprep.subr.bf16.mxu0 %v3325
  %3391 = vmatpush1.bf16.msra.mxu0 %v3324
  %3392 = vmatprep.subr.bf16.mxu0 %v3323
  %3393 = vmatpush1.bf16.msra.mxu0 %v3322
  %3394 = vmatprep.subr.bf16.mxu0 %v3321
  %3395 = vmatpush1.bf16.msra.mxu0 %v3320
  %3396 = vmatprep.subr.bf16.mxu0 %v3319
  %3397 = vmatpush1.bf16.msra.mxu0 %v3318
  %3398 = vmatprep.subr.bf16.mxu0 %v3349
  %3399 = vmatpush2.bf16.msra.mxu0 %v3348
  %3400 = vmatprep.subr.bf16.mxu0 %v3347
  %3401 = vmatpush2.bf16.msra.mxu0 %v3346
  %3402 = vmatprep.subr.bf16.mxu0 %v3345
  %3403 = vmatpush2.bf16.msra.mxu0 %v3344
  %3404 = vmatprep.subr.bf16.mxu0 %v3343
  %3405 = vmatpush2.bf16.msra.mxu0 %v3342
  %3406 = vmatprep.subr.bf16.mxu0 %v3341
  %3407 = vmatpush2.bf16.msra.mxu0 %v3340
  %3408 = vmatprep.subr.bf16.mxu0 %v3339
  %3409 = vmatpush2.bf16.msra.mxu0 %v3338
  %3410 = vmatprep.subr.bf16.mxu0 %v3337
  %3411 = vmatpush2.bf16.msra.mxu0 %v3336
  %3412 = vmatprep.subr.bf16.mxu0 %v3335
  %3413 = vmatpush2.bf16.msra.mxu0 %v3334
  %3414 = vmatprep.mubr.bf16.mxu0 %v3145
  %3415 = vmatmul.mubr.bf16.gmra.mxu0 %v3144
  %v3416 = vpop.f32.mrf.mxu0
  %v3417 = vadd.f32 %v3215, %v3416
  %v3418 = vpop.f32.mrf.mxu0
  %v3419 = vadd.f32 %v3219, %v3418
  %v3420 = vpop.f32.mrf.mxu0
  %v3421 = vadd.f32 %v3215, %v3420
  %v3422 = vpop.f32.mrf.mxu0
  %v3423 = vadd.f32 %v3219, %v3422
  %3424 = vmatprep.mubr.bf16.mxu0 %v3147
  %3425 = vmatmul.mubr.bf16.gmra.mxu0 %v3146
  %v3426 = vpop.f32.mrf.mxu0
  %v3427 = vadd.f32 %v3215, %v3426
  %v3428 = vpop.f32.mrf.mxu0
  %v3429 = vadd.f32 %v3219, %v3428
  %v3430 = vpop.f32.mrf.mxu0
  %v3431 = vadd.f32 %v3215, %v3430
  %v3432 = vpop.f32.mrf.mxu0
  %v3433 = vadd.f32 %v3219, %v3432
  %3434 = vmatprep.mubr.bf16.mxu0 %v3149
  %3435 = vmatmul.mubr.bf16.gmra.mxu0 %v3148
  %v3436 = vpop.f32.mrf.mxu0
  %v3437 = vadd.f32 %v3215, %v3436
  %v3438 = vpop.f32.mrf.mxu0
  %v3439 = vadd.f32 %v3219, %v3438
  %v3440 = vpop.f32.mrf.mxu0
  %v3441 = vadd.f32 %v3215, %v3440
  %v3442 = vpop.f32.mrf.mxu0
  %v3443 = vadd.f32 %v3219, %v3442
  %3444 = vmatprep.mubr.bf16.mxu0 %v3151
  %3445 = vmatmul.mubr.bf16.gmra.mxu0 %v3150
  %v3446 = vpop.f32.mrf.mxu0
  %v3447 = vadd.f32 %v3215, %v3446
  %v3448 = vpop.f32.mrf.mxu0
  %v3449 = vadd.f32 %v3219, %v3448
  %v3450 = vpop.f32.mrf.mxu0
  %v3451 = vadd.f32 %v3215, %v3450
  %v3452 = vpop.f32.mrf.mxu0
  %v3453 = vadd.f32 %v3219, %v3452
  %3454 = vmatprep.mubr.bf16.mxu0 %v3153
  %3455 = vmatmul.mubr.bf16.gmra.mxu0 %v3152
  %v3456 = vpop.f32.mrf.mxu0
  %v3457 = vadd.f32 %v3215, %v3456
  %v3458 = vpop.f32.mrf.mxu0
  %v3459 = vadd.f32 %v3219, %v3458
  %v3460 = vpop.f32.mrf.mxu0
  %v3461 = vadd.f32 %v3215, %v3460
  %v3462 = vpop.f32.mrf.mxu0
  %v3463 = vadd.f32 %v3219, %v3462
  %3464 = vmatprep.mubr.bf16.mxu0 %v3155
  %3465 = vmatmul.mubr.bf16.gmra.mxu0 %v3154
  %v3466 = vpop.f32.mrf.mxu0
  %v3467 = vadd.f32 %v3215, %v3466
  %v3468 = vpop.f32.mrf.mxu0
  %v3469 = vadd.f32 %v3219, %v3468
  %v3470 = vpop.f32.mrf.mxu0
  %v3471 = vadd.f32 %v3215, %v3470
  %v3472 = vpop.f32.mrf.mxu0
  %v3473 = vadd.f32 %v3219, %v3472
  %3474 = vmatprep.mubr.bf16.mxu0 %v3157
  %3475 = vmatmul.mubr.bf16.gmra.mxu0 %v3156
  %v3476 = vpop.f32.mrf.mxu0
  %v3477 = vadd.f32 %v3215, %v3476
  %v3478 = vpop.f32.mrf.mxu0
  %v3479 = vadd.f32 %v3219, %v3478
  %v3480 = vpop.f32.mrf.mxu0
  %v3481 = vadd.f32 %v3215, %v3480
  %v3482 = vpop.f32.mrf.mxu0
  %v3483 = vadd.f32 %v3219, %v3482
  %3484 = vmatprep.mubr.bf16.mxu0 %v3159
  %3485 = vmatmul.mubr.bf16.gmra.mxu0 %v3158
  %v3486 = vpop.f32.mrf.mxu0
  %v3487 = vadd.f32 %v3215, %v3486
  %v3488 = vpop.f32.mrf.mxu0
  %v3489 = vadd.f32 %v3219, %v3488
  %v3490 = vpop.f32.mrf.mxu0
  %v3491 = vadd.f32 %v3215, %v3490
  %v3492 = vpop.f32.mrf.mxu0
  %v3493 = vadd.f32 %v3219, %v3492
  %3494 = vmatprep.mubr.bf16.mxu0 %v3161
  %3495 = vmatmul.mubr.bf16.gmra.mxu0 %v3160
  %v3496 = vpop.f32.mrf.mxu0
  %v3497 = vadd.f32 %v3215, %v3496
  %v3498 = vpop.f32.mrf.mxu0
  %v3499 = vadd.f32 %v3219, %v3498
  %v3500 = vpop.f32.mrf.mxu0
  %v3501 = vadd.f32 %v3215, %v3500
  %v3502 = vpop.f32.mrf.mxu0
  %v3503 = vadd.f32 %v3219, %v3502
  %3504 = vmatprep.mubr.bf16.mxu0 %v3163
  %3505 = vmatmul.mubr.bf16.gmra.mxu0 %v3162
  %v3506 = vpop.f32.mrf.mxu0
  %v3507 = vadd.f32 %v3215, %v3506
  %v3508 = vpop.f32.mrf.mxu0
  %v3509 = vadd.f32 %v3219, %v3508
  %v3510 = vpop.f32.mrf.mxu0
  %v3511 = vadd.f32 %v3215, %v3510
  %v3512 = vpop.f32.mrf.mxu0
  %v3513 = vadd.f32 %v3219, %v3512
  %3514 = vmatprep.mubr.bf16.mxu0 %v3165
  %3515 = vmatmul.mubr.bf16.gmra.mxu0 %v3164
  %v3516 = vpop.f32.mrf.mxu0
  %v3517 = vadd.f32 %v3215, %v3516
  %v3518 = vpop.f32.mrf.mxu0
  %v3519 = vadd.f32 %v3219, %v3518
  %v3520 = vpop.f32.mrf.mxu0
  %v3521 = vadd.f32 %v3215, %v3520
  %v3522 = vpop.f32.mrf.mxu0
  %v3523 = vadd.f32 %v3219, %v3522
  %3524 = vmatprep.mubr.bf16.mxu0 %v3167
  %3525 = vmatmul.mubr.bf16.gmra.mxu0 %v3166
  %v3526 = vpop.f32.mrf.mxu0
  %v3527 = vadd.f32 %v3215, %v3526
  %v3528 = vpop.f32.mrf.mxu0
  %v3529 = vadd.f32 %v3219, %v3528
  %v3530 = vpop.f32.mrf.mxu0
  %v3531 = vadd.f32 %v3215, %v3530
  %v3532 = vpop.f32.mrf.mxu0
  %v3533 = vadd.f32 %v3219, %v3532
  %3534 = vmatprep.mubr.bf16.mxu0 %v3169
  %3535 = vmatmul.mubr.bf16.gmra.mxu0 %v3168
  %v3536 = vpop.f32.mrf.mxu0
  %v3537 = vadd.f32 %v3215, %v3536
  %v3538 = vpop.f32.mrf.mxu0
  %v3539 = vadd.f32 %v3219, %v3538
  %v3540 = vpop.f32.mrf.mxu0
  %v3541 = vadd.f32 %v3215, %v3540
  %v3542 = vpop.f32.mrf.mxu0
  %v3543 = vadd.f32 %v3219, %v3542
  %3544 = vmatprep.mubr.bf16.mxu0 %v3171
  %3545 = vmatmul.mubr.bf16.gmra.mxu0 %v3170
  %v3546 = vpop.f32.mrf.mxu0
  %v3547 = vadd.f32 %v3215, %v3546
  %v3548 = vpop.f32.mrf.mxu0
  %v3549 = vadd.f32 %v3219, %v3548
  %v3550 = vpop.f32.mrf.mxu0
  %v3551 = vadd.f32 %v3215, %v3550
  %v3552 = vpop.f32.mrf.mxu0
  %v3553 = vadd.f32 %v3219, %v3552
  %3554 = vmatprep.mubr.bf16.mxu0 %v3173
  %3555 = vmatmul.mubr.bf16.gmra.mxu0 %v3172
  %v3556 = vpop.f32.mrf.mxu0
  %v3557 = vadd.f32 %v3215, %v3556
  %v3558 = vpop.f32.mrf.mxu0
  %v3559 = vadd.f32 %v3219, %v3558
  %v3560 = vpop.f32.mrf.mxu0
  %v3561 = vadd.f32 %v3215, %v3560
  %v3562 = vpop.f32.mrf.mxu0
  %v3563 = vadd.f32 %v3219, %v3562
  %3564 = vmatprep.mubr.bf16.mxu0 %v3175
  %3565 = vmatmul.mubr.bf16.gmra.mxu0 %v3174
  %v3566 = vpop.f32.mrf.mxu0
  %v3567 = vadd.f32 %v3215, %v3566
  %v3568 = vpop.f32.mrf.mxu0
  %v3569 = vadd.f32 %v3219, %v3568
  %v3570 = vpop.f32.mrf.mxu0
  %v3571 = vadd.f32 %v3215, %v3570
  %v3572 = vpop.f32.mrf.mxu0
  %v3573 = vadd.f32 %v3219, %v3572
  %3574 = vdwg.mxu0
  %v3575 = vmax.f32 %v3417, 0.0
  %v3576 = vmax.f32 %v3419, 0.0
  %v3577 = vmax.f32 %v3421, 0.0
  %v3578 = vmax.f32 %v3423, 0.0
  %v3579 = vmax.f32 %v3427, 0.0
  %v3580 = vmax.f32 %v3429, 0.0
  %v3581 = vmax.f32 %v3431, 0.0
  %v3582 = vmax.f32 %v3433, 0.0
  %v3583 = vmax.f32 %v3437, 0.0
  %v3584 = vmax.f32 %v3439, 0.0
  %v3585 = vmax.f32 %v3441, 0.0
  %v3586 = vmax.f32 %v3443, 0.0
  %v3587 = vmax.f32 %v3447, 0.0
  %v3588 = vmax.f32 %v3449, 0.0
  %v3589 = vmax.f32 %v3451, 0.0
  %v3590 = vmax.f32 %v3453, 0.0
  %v3591 = vmax.f32 %v3457, 0.0
  %v3592 = vmax.f32 %v3459, 0.0
  %v3593 = vmax.f32 %v3461, 0.0
  %v3594 = vmax.f32 %v3463, 0.0
  %v3595 = vmax.f32 %v3467, 0.0
  %v3596 = vmax.f32 %v3469, 0.0
  %v3597 = vmax.f32 %v3471, 0.0
  %v3598 = vmax.f32 %v3473, 0.0
  %v3599 = vmax.f32 %v3477, 0.0
  %v3600 = vmax.f32 %v3479, 0.0
  %v3601 = vmax.f32 %v3481, 0.0
  %v3602 = vmax.f32 %v3483, 0.0
  %v3603 = vmax.f32 %v3487, 0.0
  %v3604 = vmax.f32 %v3489, 0.0
  %v3605 = vmax.f32 %v3491, 0.0
  %v3606 = vmax.f32 %v3493, 0.0
  %v3607 = vmax.f32 %v3497, 0.0
  %v3608 = vmax.f32 %v3499, 0.0
  %v3609 = vmax.f32 %v3501, 0.0
  %v3610 = vmax.f32 %v3503, 0.0
  %v3611 = vmax.f32 %v3507, 0.0
  %v3612 = vmax.f32 %v3509, 0.0
  %v3613 = vmax.f32 %v3511, 0.0
  %v3614 = vmax.f32 %v3513, 0.0
  %v3615 = vmax.f32 %v3517, 0.0
  %v3616 = vmax.f32 %v3519, 0.0
  %v3617 = vmax.f32 %v3521, 0.0
  %v3618 = vmax.f32 %v3523, 0.0
  %v3619 = vmax.f32 %v3527, 0.0
  %v3620 = vmax.f32 %v3529, 0.0
  %v3621 = vmax.f32 %v3531, 0.0
  %v3622 = vmax.f32 %v3533, 0.0
  %v3623 = vmax.f32 %v3537, 0.0
  %v3624 = vmax.f32 %v3539, 0.0
  %v3625 = vmax.f32 %v3541, 0.0
  %v3626 = vmax.f32 %v3543, 0.0
  %v3627 = vmax.f32 %v3547, 0.0
  %v3628 = vmax.f32 %v3549, 0.0
  %v3629 = vmax.f32 %v3551, 0.0
  %v3630 = vmax.f32 %v3553, 0.0
  %v3631 = vmax.f32 %v3557, 0.0
  %v3632 = vmax.f32 %v3559, 0.0
  %v3633 = vmax.f32 %v3561, 0.0
  %v3634 = vmax.f32 %v3563, 0.0
  %v3635 = vmax.f32 %v3567, 0.0
  %v3636 = vmax.f32 %v3569, 0.0
  %v3637 = vmax.f32 %v3571, 0.0
  %v3638 = vmax.f32 %v3573, 0.0
  %v3639 = vpack.c.bf16 %v3577, %v3575
  %v3640 = vpack.c.bf16 %v3578, %v3576
  %v3641 = vpack.c.bf16 %v3581, %v3579
  %v3642 = vpack.c.bf16 %v3582, %v3580
  %v3643 = vpack.c.bf16 %v3585, %v3583
  %v3644 = vpack.c.bf16 %v3586, %v3584
  %v3645 = vpack.c.bf16 %v3589, %v3587
  %v3646 = vpack.c.bf16 %v3590, %v3588
  %v3647 = vpack.c.bf16 %v3593, %v3591
  %v3648 = vpack.c.bf16 %v3594, %v3592
  %v3649 = vpack.c.bf16 %v3597, %v3595
  %v3650 = vpack.c.bf16 %v3598, %v3596
  %v3651 = vpack.c.bf16 %v3601, %v3599
  %v3652 = vpack.c.bf16 %v3602, %v3600
  %v3653 = vpack.c.bf16 %v3605, %v3603
  %v3654 = vpack.c.bf16 %v3606, %v3604
  %v3655 = vpack.c.bf16 %v3609, %v3607
  %v3656 = vpack.c.bf16 %v3610, %v3608
  %v3657 = vpack.c.bf16 %v3613, %v3611
  %v3658 = vpack.c.bf16 %v3614, %v3612
  %v3659 = vpack.c.bf16 %v3617, %v3615
  %v3660 = vpack.c.bf16 %v3618, %v3616
  %v3661 = vpack.c.bf16 %v3621, %v3619
  %v3662 = vpack.c.bf16 %v3622, %v3620
  %v3663 = vpack.c.bf16 %v3625, %v3623
  %v3664 = vpack.c.bf16 %v3626, %v3624
  %v3665 = vpack.c.bf16 %v3629, %v3627
  %v3666 = vpack.c.bf16 %v3630, %v3628
  %v3667 = vpack.c.bf16 %v3633, %v3631
  %v3668 = vpack.c.bf16 %v3634, %v3632
  %v3669 = vpack.c.bf16 %v3637, %v3635
  %v3670 = vpack.c.bf16 %v3638, %v3636
  %s3671 = scalar_lea.vmem %s2, 1024
  %v3672 = vld [vmem:[%s3671] sm:$0xff]
  %v3673 = vld [vmem:[%s3671 + $0x8] sm:$0xff]
  %v3674 = vld [vmem:[%s3671 + $0x10] sm:$0xff]
  %v3675 = vld [vmem:[%s3671 + $0x18] sm:$0xff]
  %v3676 = vld [vmem:[%s3671 + $0x20] sm:$0xff]
  %v3677 = vld [vmem:[%s3671 + $0x28] sm:$0xff]
  %v3678 = vld [vmem:[%s3671 + $0x30] sm:$0xff]
  %v3679 = vld [vmem:[%s3671 + $0x38] sm:$0xff]
  %v3680 = vld [vmem:[%s3671 + $0x40] sm:$0xff]
  %v3681 = vld [vmem:[%s3671 + $0x48] sm:$0xff]
  %v3682 = vld [vmem:[%s3671 + $0x50] sm:$0xff]
  %v3683 = vld [vmem:[%s3671 + $0x58] sm:$0xff]
  %v3684 = vld [vmem:[%s3671 + $0x60] sm:$0xff]
  %v3685 = vld [vmem:[%s3671 + $0x68] sm:$0xff]
  %v3686 = vld [vmem:[%s3671 + $0x70] sm:$0xff]
  %v3687 = vld [vmem:[%s3671 + $0x78] sm:$0xff]
  %v3688 = vld [vmem:[%s3671 + $0x80] sm:$0xff]
  %v3689 = vld [vmem:[%s3671 + $0x88] sm:$0xff]
  %v3690 = vld [vmem:[%s3671 + $0x90] sm:$0xff]
  %v3691 = vld [vmem:[%s3671 + $0x98] sm:$0xff]
  %v3692 = vld [vmem:[%s3671 + $0xa0] sm:$0xff]
  %v3693 = vld [vmem:[%s3671 + $0xa8] sm:$0xff]
  %v3694 = vld [vmem:[%s3671 + $0xb0] sm:$0xff]
  %v3695 = vld [vmem:[%s3671 + $0xb8] sm:$0xff]
  %v3696 = vld [vmem:[%s3671 + $0xc0] sm:$0xff]
  %v3697 = vld [vmem:[%s3671 + $0xc8] sm:$0xff]
  %v3698 = vld [vmem:[%s3671 + $0xd0] sm:$0xff]
  %v3699 = vld [vmem:[%s3671 + $0xd8] sm:$0xff]
  %v3700 = vld [vmem:[%s3671 + $0xe0] sm:$0xff]
  %v3701 = vld [vmem:[%s3671 + $0xe8] sm:$0xff]
  %v3702 = vld [vmem:[%s3671 + $0xf0] sm:$0xff]
  %v3703 = vld [vmem:[%s3671 + $0xf8] sm:$0xff]
  %s3704 = scalar_lea.vmem %s6, 7
  %v3705 = vld [vmem:[%s3704] ss:$8 sm:$0x3]
  %v3707 = vlaneseq
  %v3708 = vshrl.u32 %v3707, 7
  %v3709 = vsub.s32 0, %v3708
  %v3710 = vrot.slane %v3705, %v3709
  %v3711 = vlaneseq
  %v3712 = vshrl.u32 %v3711, 7
  %v3713 = vsub.s32 1, %v3712
  %v3714 = vrot.slane %v3705, %v3713
  %v3749 = vunpack.c.l.b16 %v3672
  %v3750 = vunpack.c.h.b16 %v3672
  %v3751 = vunpack.c.l.b16 %v3673
  %v3752 = vunpack.c.h.b16 %v3673
  %v3753 = vunpack.c.l.b16 %v3674
  %v3754 = vunpack.c.h.b16 %v3674
  %v3755 = vunpack.c.l.b16 %v3675
  %v3756 = vunpack.c.h.b16 %v3675
  %v3757 = vunpack.c.l.b16 %v3676
  %v3758 = vunpack.c.h.b16 %v3676
  %v3759 = vunpack.c.l.b16 %v3677
  %v3760 = vunpack.c.h.b16 %v3677
  %v3761 = vunpack.c.l.b16 %v3678
  %v3762 = vunpack.c.h.b16 %v3678
  %v3763 = vunpack.c.l.b16 %v3679
  %v3764 = vunpack.c.h.b16 %v3679
  %v3765 = vunpack.c.l.b16 %v3680
  %v3766 = vunpack.c.h.b16 %v3680
  %v3767 = vunpack.c.l.b16 %v3681
  %v3768 = vunpack.c.h.b16 %v3681
  %v3769 = vunpack.c.l.b16 %v3682
  %v3770 = vunpack.c.h.b16 %v3682
  %v3771 = vunpack.c.l.b16 %v3683
  %v3772 = vunpack.c.h.b16 %v3683
  %v3773 = vunpack.c.l.b16 %v3684
  %v3774 = vunpack.c.h.b16 %v3684
  %v3775 = vunpack.c.l.b16 %v3685
  %v3776 = vunpack.c.h.b16 %v3685
  %v3777 = vunpack.c.l.b16 %v3686
  %v3778 = vunpack.c.h.b16 %v3686
  %v3779 = vunpack.c.l.b16 %v3687
  %v3780 = vunpack.c.h.b16 %v3687
  %v3781 = vunpack.c.l.b16 %v3688
  %v3782 = vunpack.c.h.b16 %v3688
  %v3783 = vunpack.c.l.b16 %v3689
  %v3784 = vunpack.c.h.b16 %v3689
  %v3785 = vunpack.c.l.b16 %v3690
  %v3786 = vunpack.c.h.b16 %v3690
  %v3787 = vunpack.c.l.b16 %v3691
  %v3788 = vunpack.c.h.b16 %v3691
  %v3789 = vunpack.c.l.b16 %v3692
  %v3790 = vunpack.c.h.b16 %v3692
  %v3791 = vunpack.c.l.b16 %v3693
  %v3792 = vunpack.c.h.b16 %v3693
  %v3793 = vunpack.c.l.b16 %v3694
  %v3794 = vunpack.c.h.b16 %v3694
  %v3795 = vunpack.c.l.b16 %v3695
  %v3796 = vunpack.c.h.b16 %v3695
  %v3797 = vunpack.c.l.b16 %v3696
  %v3798 = vunpack.c.h.b16 %v3696
  %v3799 = vunpack.c.l.b16 %v3697
  %v3800 = vunpack.c.h.b16 %v3697
  %v3801 = vunpack.c.l.b16 %v3698
  %v3802 = vunpack.c.h.b16 %v3698
  %v3803 = vunpack.c.l.b16 %v3699
  %v3804 = vunpack.c.h.b16 %v3699
  %v3805 = vunpack.c.l.b16 %v3700
  %v3806 = vunpack.c.h.b16 %v3700
  %v3807 = vunpack.c.l.b16 %v3701
  %v3808 = vunpack.c.h.b16 %v3701
  %v3809 = vunpack.c.l.b16 %v3702
  %v3810 = vunpack.c.h.b16 %v3702
  %v3811 = vunpack.c.l.b16 %v3703
  %v3812 = vunpack.c.h.b16 %v3703
  %v3813 = vpack.c.b16 %v3751, %v3749
  %v3814 = vpack.c.b16 %v3752, %v3750
  %v3815 = vpack.c.b16 %v3755, %v3753
  %v3816 = vpack.c.b16 %v3756, %v3754
  %v3817 = vpack.c.b16 %v3759, %v3757
  %v3818 = vpack.c.b16 %v3760, %v3758
  %v3819 = vpack.c.b16 %v3763, %v3761
  %v3820 = vpack.c.b16 %v3764, %v3762
  %v3821 = vpack.c.b16 %v3767, %v3765
  %v3822 = vpack.c.b16 %v3768, %v3766
  %v3823 = vpack.c.b16 %v3771, %v3769
  %v3824 = vpack.c.b16 %v3772, %v3770
  %v3825 = vpack.c.b16 %v3775, %v3773
  %v3826 = vpack.c.b16 %v3776, %v3774
  %v3827 = vpack.c.b16 %v3779, %v3777
  %v3828 = vpack.c.b16 %v3780, %v3778
  %v3829 = vpack.c.b16 %v3783, %v3781
  %v3830 = vpack.c.b16 %v3784, %v3782
  %v3831 = vpack.c.b16 %v3787, %v3785
  %v3832 = vpack.c.b16 %v3788, %v3786
  %v3833 = vpack.c.b16 %v3791, %v3789
  %v3834 = vpack.c.b16 %v3792, %v3790
  %v3835 = vpack.c.b16 %v3795, %v3793
  %v3836 = vpack.c.b16 %v3796, %v3794
  %v3837 = vpack.c.b16 %v3799, %v3797
  %v3838 = vpack.c.b16 %v3800, %v3798
  %v3839 = vpack.c.b16 %v3803, %v3801
  %v3840 = vpack.c.b16 %v3804, %v3802
  %v3841 = vpack.c.b16 %v3807, %v3805
  %v3842 = vpack.c.b16 %v3808, %v3806
  %v3843 = vpack.c.b16 %v3811, %v3809
  %v3844 = vpack.c.b16 %v3812, %v3810
  %3877 = vmatprep.subr.bf16.mxu0 %v3828
  %3878 = vmatpush1.bf16.msra.mxu0 %v3827
  %3879 = vmatprep.subr.bf16.mxu0 %v3826
  %3880 = vmatpush1.bf16.msra.mxu0 %v3825
  %3881 = vmatprep.subr.bf16.mxu0 %v3824
  %3882 = vmatpush1.bf16.msra.mxu0 %v3823
  %3883 = vmatprep.subr.bf16.mxu0 %v3822
  %3884 = vmatpush1.bf16.msra.mxu0 %v3821
  %3885 = vmatprep.subr.bf16.mxu0 %v3820
  %3886 = vmatpush1.bf16.msra.mxu0 %v3819
  %3887 = vmatprep.subr.bf16.mxu0 %v3818
  %3888 = vmatpush1.bf16.msra.mxu0 %v3817
  %3889 = vmatprep.subr.bf16.mxu0 %v3816
  %3890 = vmatpush1.bf16.msra.mxu0 %v3815
  %3891 = vmatprep.subr.bf16.mxu0 %v3814
  %3892 = vmatpush1.bf16.msra.mxu0 %v3813
  %3893 = vmatprep.subr.bf16.mxu0 %v3844
  %3894 = vmatpush2.bf16.msra.mxu0 %v3843
  %3895 = vmatprep.subr.bf16.mxu0 %v3842
  %3896 = vmatpush2.bf16.msra.mxu0 %v3841
  %3897 = vmatprep.subr.bf16.mxu0 %v3840
  %3898 = vmatpush2.bf16.msra.mxu0 %v3839
  %3899 = vmatprep.subr.bf16.mxu0 %v3838
  %3900 = vmatpush2.bf16.msra.mxu0 %v3837
  %3901 = vmatprep.subr.bf16.mxu0 %v3836
  %3902 = vmatpush2.bf16.msra.mxu0 %v3835
  %3903 = vmatprep.subr.bf16.mxu0 %v3834
  %3904 = vmatpush2.bf16.msra.mxu0 %v3833
  %3905 = vmatprep.subr.bf16.mxu0 %v3832
  %3906 = vmatpush2.bf16.msra.mxu0 %v3831
  %3907 = vmatprep.subr.bf16.mxu0 %v3830
  %3908 = vmatpush2.bf16.msra.mxu0 %v3829
  %3909 = vmatprep.mubr.bf16.mxu0 %v3640
  %3910 = vmatmul.mubr.bf16.gmra.mxu0 %v3639
  %v3911 = vpop.f32.mrf.mxu0
  %v3912 = vadd.f32 %v3710, %v3911
  %v3913 = vpop.f32.mrf.mxu0
  %v3914 = vadd.f32 %v3714, %v3913
  %v3915 = vpop.f32.mrf.mxu0
  %v3916 = vadd.f32 %v3710, %v3915
  %v3917 = vpop.f32.mrf.mxu0
  %v3918 = vadd.f32 %v3714, %v3917
  %3919 = vmatprep.mubr.bf16.mxu0 %v3642
  %3920 = vmatmul.mubr.bf16.gmra.mxu0 %v3641
  %v3921 = vpop.f32.mrf.mxu0
  %v3922 = vadd.f32 %v3710, %v3921
  %v3923 = vpop.f32.mrf.mxu0
  %v3924 = vadd.f32 %v3714, %v3923
  %v3925 = vpop.f32.mrf.mxu0
  %v3926 = vadd.f32 %v3710, %v3925
  %v3927 = vpop.f32.mrf.mxu0
  %v3928 = vadd.f32 %v3714, %v3927
  %3929 = vmatprep.mubr.bf16.mxu0 %v3644
  %3930 = vmatmul.mubr.bf16.gmra.mxu0 %v3643
  %v3931 = vpop.f32.mrf.mxu0
  %v3932 = vadd.f32 %v3710, %v3931
  %v3933 = vpop.f32.mrf.mxu0
  %v3934 = vadd.f32 %v3714, %v3933
  %v3935 = vpop.f32.mrf.mxu0
  %v3936 = vadd.f32 %v3710, %v3935
  %v3937 = vpop.f32.mrf.mxu0
  %v3938 = vadd.f32 %v3714, %v3937
  %3939 = vmatprep.mubr.bf16.mxu0 %v3646
  %3940 = vmatmul.mubr.bf16.gmra.mxu0 %v3645
  %v3941 = vpop.f32.mrf.mxu0
  %v3942 = vadd.f32 %v3710, %v3941
  %v3943 = vpop.f32.mrf.mxu0
  %v3944 = vadd.f32 %v3714, %v3943
  %v3945 = vpop.f32.mrf.mxu0
  %v3946 = vadd.f32 %v3710, %v3945
  %v3947 = vpop.f32.mrf.mxu0
  %v3948 = vadd.f32 %v3714, %v3947
  %3949 = vmatprep.mubr.bf16.mxu0 %v3648
  %3950 = vmatmul.mubr.bf16.gmra.mxu0 %v3647
  %v3951 = vpop.f32.mrf.mxu0
  %v3952 = vadd.f32 %v3710, %v3951
  %v3953 = vpop.f32.mrf.mxu0
  %v3954 = vadd.f32 %v3714, %v3953
  %v3955 = vpop.f32.mrf.mxu0
  %v3956 = vadd.f32 %v3710, %v3955
  %v3957 = vpop.f32.mrf.mxu0
  %v3958 = vadd.f32 %v3714, %v3957
  %3959 = vmatprep.mubr.bf16.mxu0 %v3650
  %3960 = vmatmul.mubr.bf16.gmra.mxu0 %v3649
  %v3961 = vpop.f32.mrf.mxu0
  %v3962 = vadd.f32 %v3710, %v3961
  %v3963 = vpop.f32.mrf.mxu0
  %v3964 = vadd.f32 %v3714, %v3963
  %v3965 = vpop.f32.mrf.mxu0
  %v3966 = vadd.f32 %v3710, %v3965
  %v3967 = vpop.f32.mrf.mxu0
  %v3968 = vadd.f32 %v3714, %v3967
  %3969 = vmatprep.mubr.bf16.mxu0 %v3652
  %3970 = vmatmul.mubr.bf16.gmra.mxu0 %v3651
  %v3971 = vpop.f32.mrf.mxu0
  %v3972 = vadd.f32 %v3710, %v3971
  %v3973 = vpop.f32.mrf.mxu0
  %v3974 = vadd.f32 %v3714, %v3973
  %v3975 = vpop.f32.mrf.mxu0
  %v3976 = vadd.f32 %v3710, %v3975
  %v3977 = vpop.f32.mrf.mxu0
  %v3978 = vadd.f32 %v3714, %v3977
  %3979 = vmatprep.mubr.bf16.mxu0 %v3654
  %3980 = vmatmul.mubr.bf16.gmra.mxu0 %v3653
  %v3981 = vpop.f32.mrf.mxu0
  %v3982 = vadd.f32 %v3710, %v3981
  %v3983 = vpop.f32.mrf.mxu0
  %v3984 = vadd.f32 %v3714, %v3983
  %v3985 = vpop.f32.mrf.mxu0
  %v3986 = vadd.f32 %v3710, %v3985
  %v3987 = vpop.f32.mrf.mxu0
  %v3988 = vadd.f32 %v3714, %v3987
  %3989 = vmatprep.mubr.bf16.mxu0 %v3656
  %3990 = vmatmul.mubr.bf16.gmra.mxu0 %v3655
  %v3991 = vpop.f32.mrf.mxu0
  %v3992 = vadd.f32 %v3710, %v3991
  %v3993 = vpop.f32.mrf.mxu0
  %v3994 = vadd.f32 %v3714, %v3993
  %v3995 = vpop.f32.mrf.mxu0
  %v3996 = vadd.f32 %v3710, %v3995
  %v3997 = vpop.f32.mrf.mxu0
  %v3998 = vadd.f32 %v3714, %v3997
  %3999 = vmatprep.mubr.bf16.mxu0 %v3658
  %4000 = vmatmul.mubr.bf16.gmra.mxu0 %v3657
  %v4001 = vpop.f32.mrf.mxu0
  %v4002 = vadd.f32 %v3710, %v4001
  %v4003 = vpop.f32.mrf.mxu0
  %v4004 = vadd.f32 %v3714, %v4003
  %v4005 = vpop.f32.mrf.mxu0
  %v4006 = vadd.f32 %v3710, %v4005
  %v4007 = vpop.f32.mrf.mxu0
  %v4008 = vadd.f32 %v3714, %v4007
  %4009 = vmatprep.mubr.bf16.mxu0 %v3660
  %4010 = vmatmul.mubr.bf16.gmra.mxu0 %v3659
  %v4011 = vpop.f32.mrf.mxu0
  %v4012 = vadd.f32 %v3710, %v4011
  %v4013 = vpop.f32.mrf.mxu0
  %v4014 = vadd.f32 %v3714, %v4013
  %v4015 = vpop.f32.mrf.mxu0
  %v4016 = vadd.f32 %v3710, %v4015
  %v4017 = vpop.f32.mrf.mxu0
  %v4018 = vadd.f32 %v3714, %v4017
  %4019 = vmatprep.mubr.bf16.mxu0 %v3662
  %4020 = vmatmul.mubr.bf16.gmra.mxu0 %v3661
  %v4021 = vpop.f32.mrf.mxu0
  %v4022 = vadd.f32 %v3710, %v4021
  %v4023 = vpop.f32.mrf.mxu0
  %v4024 = vadd.f32 %v3714, %v4023
  %v4025 = vpop.f32.mrf.mxu0
  %v4026 = vadd.f32 %v3710, %v4025
  %v4027 = vpop.f32.mrf.mxu0
  %v4028 = vadd.f32 %v3714, %v4027
  %4029 = vmatprep.mubr.bf16.mxu0 %v3664
  %4030 = vmatmul.mubr.bf16.gmra.mxu0 %v3663
  %v4031 = vpop.f32.mrf.mxu0
  %v4032 = vadd.f32 %v3710, %v4031
  %v4033 = vpop.f32.mrf.mxu0
  %v4034 = vadd.f32 %v3714, %v4033
  %v4035 = vpop.f32.mrf.mxu0
  %v4036 = vadd.f32 %v3710, %v4035
  %v4037 = vpop.f32.mrf.mxu0
  %v4038 = vadd.f32 %v3714, %v4037
  %4039 = vmatprep.mubr.bf16.mxu0 %v3666
  %4040 = vmatmul.mubr.bf16.gmra.mxu0 %v3665
  %v4041 = vpop.f32.mrf.mxu0
  %v4042 = vadd.f32 %v3710, %v4041
  %v4043 = vpop.f32.mrf.mxu0
  %v4044 = vadd.f32 %v3714, %v4043
  %v4045 = vpop.f32.mrf.mxu0
  %v4046 = vadd.f32 %v3710, %v4045
  %v4047 = vpop.f32.mrf.mxu0
  %v4048 = vadd.f32 %v3714, %v4047
  %4049 = vmatprep.mubr.bf16.mxu0 %v3668
  %4050 = vmatmul.mubr.bf16.gmra.mxu0 %v3667
  %v4051 = vpop.f32.mrf.mxu0
  %v4052 = vadd.f32 %v3710, %v4051
  %v4053 = vpop.f32.mrf.mxu0
  %v4054 = vadd.f32 %v3714, %v4053
  %v4055 = vpop.f32.mrf.mxu0
  %v4056 = vadd.f32 %v3710, %v4055
  %v4057 = vpop.f32.mrf.mxu0
  %v4058 = vadd.f32 %v3714, %v4057
  %4059 = vmatprep.mubr.bf16.mxu0 %v3670
  %4060 = vmatmul.mubr.bf16.gmra.mxu0 %v3669
  %v4061 = vpop.f32.mrf.mxu0
  %v4062 = vadd.f32 %v3710, %v4061
  %v4063 = vpop.f32.mrf.mxu0
  %v4064 = vadd.f32 %v3714, %v4063
  %v4065 = vpop.f32.mrf.mxu0
  %v4066 = vadd.f32 %v3710, %v4065
  %v4067 = vpop.f32.mrf.mxu0
  %v4068 = vadd.f32 %v3714, %v4067
  %4069 = vdwg.mxu0
  %v4070 = vmax.f32 %v3912, 0.0
  %v4071 = vmax.f32 %v3914, 0.0
  %v4072 = vmax.f32 %v3916, 0.0
  %v4073 = vmax.f32 %v3918, 0.0
  %v4074 = vmax.f32 %v3922, 0.0
  %v4075 = vmax.f32 %v3924, 0.0
  %v4076 = vmax.f32 %v3926, 0.0
  %v4077 = vmax.f32 %v3928, 0.0
  %v4078 = vmax.f32 %v3932, 0.0
  %v4079 = vmax.f32 %v3934, 0.0
  %v4080 = vmax.f32 %v3936, 0.0
  %v4081 = vmax.f32 %v3938, 0.0
  %v4082 = vmax.f32 %v3942, 0.0
  %v4083 = vmax.f32 %v3944, 0.0
  %v4084 = vmax.f32 %v3946, 0.0
  %v4085 = vmax.f32 %v3948, 0.0
  %v4086 = vmax.f32 %v3952, 0.0
  %v4087 = vmax.f32 %v3954, 0.0
  %v4088 = vmax.f32 %v3956, 0.0
  %v4089 = vmax.f32 %v3958, 0.0
  %v4090 = vmax.f32 %v3962, 0.0
  %v4091 = vmax.f32 %v3964, 0.0
  %v4092 = vmax.f32 %v3966, 0.0
  %v4093 = vmax.f32 %v3968, 0.0
  %v4094 = vmax.f32 %v3972, 0.0
  %v4095 = vmax.f32 %v3974, 0.0
  %v4096 = vmax.f32 %v3976, 0.0
  %v4097 = vmax.f32 %v3978, 0.0
  %v4098 = vmax.f32 %v3982, 0.0
  %v4099 = vmax.f32 %v3984, 0.0
  %v4100 = vmax.f32 %v3986, 0.0
  %v4101 = vmax.f32 %v3988, 0.0
  %v4102 = vmax.f32 %v3992, 0.0
  %v4103 = vmax.f32 %v3994, 0.0
  %v4104 = vmax.f32 %v3996, 0.0
  %v4105 = vmax.f32 %v3998, 0.0
  %v4106 = vmax.f32 %v4002, 0.0
  %v4107 = vmax.f32 %v4004, 0.0
  %v4108 = vmax.f32 %v4006, 0.0
  %v4109 = vmax.f32 %v4008, 0.0
  %v4110 = vmax.f32 %v4012, 0.0
  %v4111 = vmax.f32 %v4014, 0.0
  %v4112 = vmax.f32 %v4016, 0.0
  %v4113 = vmax.f32 %v4018, 0.0
  %v4114 = vmax.f32 %v4022, 0.0
  %v4115 = vmax.f32 %v4024, 0.0
  %v4116 = vmax.f32 %v4026, 0.0
  %v4117 = vmax.f32 %v4028, 0.0
  %v4118 = vmax.f32 %v4032, 0.0
  %v4119 = vmax.f32 %v4034, 0.0
  %v4120 = vmax.f32 %v4036, 0.0
  %v4121 = vmax.f32 %v4038, 0.0
  %v4122 = vmax.f32 %v4042, 0.0
  %v4123 = vmax.f32 %v4044, 0.0
  %v4124 = vmax.f32 %v4046, 0.0
  %v4125 = vmax.f32 %v4048, 0.0
  %v4126 = vmax.f32 %v4052, 0.0
  %v4127 = vmax.f32 %v4054, 0.0
  %v4128 = vmax.f32 %v4056, 0.0
  %v4129 = vmax.f32 %v4058, 0.0
  %v4130 = vmax.f32 %v4062, 0.0
  %v4131 = vmax.f32 %v4064, 0.0
  %v4132 = vmax.f32 %v4066, 0.0
  %v4133 = vmax.f32 %v4068, 0.0
  %v4134 = vpack.c.bf16 %v4072, %v4070
  %v4135 = vpack.c.bf16 %v4073, %v4071
  %v4136 = vpack.c.bf16 %v4076, %v4074
  %v4137 = vpack.c.bf16 %v4077, %v4075
  %v4138 = vpack.c.bf16 %v4080, %v4078
  %v4139 = vpack.c.bf16 %v4081, %v4079
  %v4140 = vpack.c.bf16 %v4084, %v4082
  %v4141 = vpack.c.bf16 %v4085, %v4083
  %v4142 = vpack.c.bf16 %v4088, %v4086
  %v4143 = vpack.c.bf16 %v4089, %v4087
  %v4144 = vpack.c.bf16 %v4092, %v4090
  %v4145 = vpack.c.bf16 %v4093, %v4091
  %v4146 = vpack.c.bf16 %v4096, %v4094
  %v4147 = vpack.c.bf16 %v4097, %v4095
  %v4148 = vpack.c.bf16 %v4100, %v4098
  %v4149 = vpack.c.bf16 %v4101, %v4099
  %v4150 = vpack.c.bf16 %v4104, %v4102
  %v4151 = vpack.c.bf16 %v4105, %v4103
  %v4152 = vpack.c.bf16 %v4108, %v4106
  %v4153 = vpack.c.bf16 %v4109, %v4107
  %v4154 = vpack.c.bf16 %v4112, %v4110
  %v4155 = vpack.c.bf16 %v4113, %v4111
  %v4156 = vpack.c.bf16 %v4116, %v4114
  %v4157 = vpack.c.bf16 %v4117, %v4115
  %v4158 = vpack.c.bf16 %v4120, %v4118
  %v4159 = vpack.c.bf16 %v4121, %v4119
  %v4160 = vpack.c.bf16 %v4124, %v4122
  %v4161 = vpack.c.bf16 %v4125, %v4123
  %v4162 = vpack.c.bf16 %v4128, %v4126
  %v4163 = vpack.c.bf16 %v4129, %v4127
  %v4164 = vpack.c.bf16 %v4132, %v4130
  %v4165 = vpack.c.bf16 %v4133, %v4131
  %v4166 = vld [vmem:[%s5] sm:$0xf]
  %v4167 = vld [vmem:[%s5 + $0x4] sm:$0xf]
  %v4168 = vld [vmem:[%s5 + $0x8] sm:$0xf]
  %v4169 = vld [vmem:[%s5 + $0xc] sm:$0xf]
  %v4170 = vld [vmem:[%s5 + $0x10] sm:$0xf]
  %v4171 = vld [vmem:[%s5 + $0x14] sm:$0xf]
  %v4172 = vld [vmem:[%s5 + $0x18] sm:$0xf]
  %v4173 = vld [vmem:[%s5 + $0x1c] sm:$0xf]
  %v4174 = vld [vmem:[%s5 + $0x20] sm:$0xf]
  %v4175 = vld [vmem:[%s5 + $0x24] sm:$0xf]
  %v4176 = vld [vmem:[%s5 + $0x28] sm:$0xf]
  %v4177 = vld [vmem:[%s5 + $0x2c] sm:$0xf]
  %v4178 = vld [vmem:[%s5 + $0x30] sm:$0xf]
  %v4179 = vld [vmem:[%s5 + $0x34] sm:$0xf]
  %v4180 = vld [vmem:[%s5 + $0x38] sm:$0xf]
  %v4181 = vld [vmem:[%s5 + $0x3c] sm:$0xf]
  %v4182 = vld [vmem:[%s5 + $0x40] sm:$0xf]
  %v4183 = vld [vmem:[%s5 + $0x44] sm:$0xf]
  %v4184 = vld [vmem:[%s5 + $0x48] sm:$0xf]
  %v4185 = vld [vmem:[%s5 + $0x4c] sm:$0xf]
  %v4186 = vld [vmem:[%s5 + $0x50] sm:$0xf]
  %v4187 = vld [vmem:[%s5 + $0x54] sm:$0xf]
  %v4188 = vld [vmem:[%s5 + $0x58] sm:$0xf]
  %v4189 = vld [vmem:[%s5 + $0x5c] sm:$0xf]
  %v4190 = vld [vmem:[%s5 + $0x60] sm:$0xf]
  %v4191 = vld [vmem:[%s5 + $0x64] sm:$0xf]
  %v4192 = vld [vmem:[%s5 + $0x68] sm:$0xf]
  %v4193 = vld [vmem:[%s5 + $0x6c] sm:$0xf]
  %v4194 = vld [vmem:[%s5 + $0x70] sm:$0xf]
  %v4195 = vld [vmem:[%s5 + $0x74] sm:$0xf]
  %v4196 = vld [vmem:[%s5 + $0x78] sm:$0xf]
  %v4197 = vld [vmem:[%s5 + $0x7c] sm:$0xf]
  %v4198 = vld [vmem:[%s6 + $0x10] ss:$0 sm:$0xff]
  %v4231 = vunpack.c.l.b16 %v4166
  %v4232 = vunpack.c.l.b16 %v4167
  %v4233 = vunpack.c.l.b16 %v4168
  %v4234 = vunpack.c.l.b16 %v4169
  %v4235 = vunpack.c.l.b16 %v4170
  %v4236 = vunpack.c.l.b16 %v4171
  %v4237 = vunpack.c.l.b16 %v4172
  %v4238 = vunpack.c.l.b16 %v4173
  %v4239 = vunpack.c.l.b16 %v4174
  %v4240 = vunpack.c.l.b16 %v4175
  %v4241 = vunpack.c.l.b16 %v4176
  %v4242 = vunpack.c.l.b16 %v4177
  %v4243 = vunpack.c.l.b16 %v4178
  %v4244 = vunpack.c.l.b16 %v4179
  %v4245 = vunpack.c.l.b16 %v4180
  %v4246 = vunpack.c.l.b16 %v4181
  %v4247 = vunpack.c.l.b16 %v4182
  %v4248 = vunpack.c.l.b16 %v4183
  %v4249 = vunpack.c.l.b16 %v4184
  %v4250 = vunpack.c.l.b16 %v4185
  %v4251 = vunpack.c.l.b16 %v4186
  %v4252 = vunpack.c.l.b16 %v4187
  %v4253 = vunpack.c.l.b16 %v4188
  %v4254 = vunpack.c.l.b16 %v4189
  %v4255 = vunpack.c.l.b16 %v4190
  %v4256 = vunpack.c.l.b16 %v4191
  %v4257 = vunpack.c.l.b16 %v4192
  %v4258 = vunpack.c.l.b16 %v4193
  %v4259 = vunpack.c.l.b16 %v4194
  %v4260 = vunpack.c.l.b16 %v4195
  %v4261 = vunpack.c.l.b16 %v4196
  %v4262 = vunpack.c.l.b16 %v4197
  %v4263 = vpack.c.b16 %v4232, %v4231
  %v4264 = vpack.c.b16 %v4234, %v4233
  %v4265 = vpack.c.b16 %v4236, %v4235
  %v4266 = vpack.c.b16 %v4238, %v4237
  %v4267 = vpack.c.b16 %v4240, %v4239
  %v4268 = vpack.c.b16 %v4242, %v4241
  %v4269 = vpack.c.b16 %v4244, %v4243
  %v4270 = vpack.c.b16 %v4246, %v4245
  %v4271 = vpack.c.b16 %v4248, %v4247
  %v4272 = vpack.c.b16 %v4250, %v4249
  %v4273 = vpack.c.b16 %v4252, %v4251
  %v4274 = vpack.c.b16 %v4254, %v4253
  %v4275 = vpack.c.b16 %v4256, %v4255
  %v4276 = vpack.c.b16 %v4258, %v4257
  %v4277 = vpack.c.b16 %v4260, %v4259
  %v4278 = vpack.c.b16 %v4262, %v4261
  %4295 = vmatprep.subr.bf16.mxu0 0
  %4296 = vmatpush1.bf16.msra.mxu0 %v4270
  %4297 = vmatprep.subr.bf16.mxu0 0
  %4298 = vmatpush1.bf16.msra.mxu0 %v4269
  %4299 = vmatprep.subr.bf16.mxu0 0
  %4300 = vmatpush1.bf16.msra.mxu0 %v4268
  %4301 = vmatprep.subr.bf16.mxu0 0
  %4302 = vmatpush1.bf16.msra.mxu0 %v4267
  %4303 = vmatprep.subr.bf16.mxu0 0
  %4304 = vmatpush1.bf16.msra.mxu0 %v4266
  %4305 = vmatprep.subr.bf16.mxu0 0
  %4306 = vmatpush1.bf16.msra.mxu0 %v4265
  %4307 = vmatprep.subr.bf16.mxu0 0
  %4308 = vmatpush1.bf16.msra.mxu0 %v4264
  %4309 = vmatprep.subr.bf16.mxu0 0
  %4310 = vmatpush1.bf16.msra.mxu0 %v4263
  %4311 = vmatprep.subr.bf16.mxu0 0
  %4312 = vmatpush2.bf16.msra.mxu0 %v4278
  %4313 = vmatprep.subr.bf16.mxu0 0
  %4314 = vmatpush2.bf16.msra.mxu0 %v4277
  %4315 = vmatprep.subr.bf16.mxu0 0
  %4316 = vmatpush2.bf16.msra.mxu0 %v4276
  %4317 = vmatprep.subr.bf16.mxu0 0
  %4318 = vmatpush2.bf16.msra.mxu0 %v4275
  %4319 = vmatprep.subr.bf16.mxu0 0
  %4320 = vmatpush2.bf16.msra.mxu0 %v4274
  %4321 = vmatprep.subr.bf16.mxu0 0
  %4322 = vmatpush2.bf16.msra.mxu0 %v4273
  %4323 = vmatprep.subr.bf16.mxu0 0
  %4324 = vmatpush2.bf16.msra.mxu0 %v4272
  %4325 = vmatprep.subr.bf16.mxu0 0
  %4326 = vmatpush2.bf16.msra.mxu0 %v4271
  %4327 = vmatprep.mubr.bf16.mxu0 %v4135
  %4328 = vmatmul.mubr.bf16.gmra.mxu0 %v4134
  %v4329 = vpop.f32.mrf.mxu0
  %v4330 = vadd.f32 %v4198, %v4329
  %v4331 = vpop.f32.mrf.mxu0
  %v4332 = vpop.f32.mrf.mxu0
  %v4333 = vadd.f32 %v4198, %v4332
  %v4334 = vpop.f32.mrf.mxu0
  %4335 = vmatprep.mubr.bf16.mxu0 %v4137
  %4336 = vmatmul.mubr.bf16.gmra.mxu0 %v4136
  %v4337 = vpop.f32.mrf.mxu0
  %v4338 = vadd.f32 %v4198, %v4337
  %v4339 = vpop.f32.mrf.mxu0
  %v4340 = vpop.f32.mrf.mxu0
  %v4341 = vadd.f32 %v4198, %v4340
  %v4342 = vpop.f32.mrf.mxu0
  %4343 = vmatprep.mubr.bf16.mxu0 %v4139
  %4344 = vmatmul.mubr.bf16.gmra.mxu0 %v4138
  %v4345 = vpop.f32.mrf.mxu0
  %v4346 = vadd.f32 %v4198, %v4345
  %v4347 = vpop.f32.mrf.mxu0
  %v4348 = vpop.f32.mrf.mxu0
  %v4349 = vadd.f32 %v4198, %v4348
  %v4350 = vpop.f32.mrf.mxu0
  %4351 = vmatprep.mubr.bf16.mxu0 %v4141
  %4352 = vmatmul.mubr.bf16.gmra.mxu0 %v4140
  %v4353 = vpop.f32.mrf.mxu0
  %v4354 = vadd.f32 %v4198, %v4353
  %v4355 = vpop.f32.mrf.mxu0
  %v4356 = vpop.f32.mrf.mxu0
  %v4357 = vadd.f32 %v4198, %v4356
  %v4358 = vpop.f32.mrf.mxu0
  %4359 = vmatprep.mubr.bf16.mxu0 %v4143
  %4360 = vmatmul.mubr.bf16.gmra.mxu0 %v4142
  %v4361 = vpop.f32.mrf.mxu0
  %v4362 = vadd.f32 %v4198, %v4361
  %v4363 = vpop.f32.mrf.mxu0
  %v4364 = vpop.f32.mrf.mxu0
  %v4365 = vadd.f32 %v4198, %v4364
  %v4366 = vpop.f32.mrf.mxu0
  %4367 = vmatprep.mubr.bf16.mxu0 %v4145
  %4368 = vmatmul.mubr.bf16.gmra.mxu0 %v4144
  %v4369 = vpop.f32.mrf.mxu0
  %v4370 = vadd.f32 %v4198, %v4369
  %v4371 = vpop.f32.mrf.mxu0
  %v4372 = vpop.f32.mrf.mxu0
  %v4373 = vadd.f32 %v4198, %v4372
  %v4374 = vpop.f32.mrf.mxu0
  %4375 = vmatprep.mubr.bf16.mxu0 %v4147
  %4376 = vmatmul.mubr.bf16.gmra.mxu0 %v4146
  %v4377 = vpop.f32.mrf.mxu0
  %v4378 = vadd.f32 %v4198, %v4377
  %v4379 = vpop.f32.mrf.mxu0
  %v4380 = vpop.f32.mrf.mxu0
  %v4381 = vadd.f32 %v4198, %v4380
  %v4382 = vpop.f32.mrf.mxu0
  %4383 = vmatprep.mubr.bf16.mxu0 %v4149
  %4384 = vmatmul.mubr.bf16.gmra.mxu0 %v4148
  %v4385 = vpop.f32.mrf.mxu0
  %v4386 = vadd.f32 %v4198, %v4385
  %v4387 = vpop.f32.mrf.mxu0
  %v4388 = vpop.f32.mrf.mxu0
  %v4389 = vadd.f32 %v4198, %v4388
  %v4390 = vpop.f32.mrf.mxu0
  %4391 = vmatprep.mubr.bf16.mxu0 %v4151
  %4392 = vmatmul.mubr.bf16.gmra.mxu0 %v4150
  %v4393 = vpop.f32.mrf.mxu0
  %v4394 = vadd.f32 %v4198, %v4393
  %v4395 = vpop.f32.mrf.mxu0
  %v4396 = vpop.f32.mrf.mxu0
  %v4397 = vadd.f32 %v4198, %v4396
  %v4398 = vpop.f32.mrf.mxu0
  %4399 = vmatprep.mubr.bf16.mxu0 %v4153
  %4400 = vmatmul.mubr.bf16.gmra.mxu0 %v4152
  %v4401 = vpop.f32.mrf.mxu0
  %v4402 = vadd.f32 %v4198, %v4401
  %v4403 = vpop.f32.mrf.mxu0
  %v4404 = vpop.f32.mrf.mxu0
  %v4405 = vadd.f32 %v4198, %v4404
  %v4406 = vpop.f32.mrf.mxu0
  %4407 = vmatprep.mubr.bf16.mxu0 %v4155
  %4408 = vmatmul.mubr.bf16.gmra.mxu0 %v4154
  %v4409 = vpop.f32.mrf.mxu0
  %v4410 = vadd.f32 %v4198, %v4409
  %v4411 = vpop.f32.mrf.mxu0
  %v4412 = vpop.f32.mrf.mxu0
  %v4413 = vadd.f32 %v4198, %v4412
  %v4414 = vpop.f32.mrf.mxu0
  %4415 = vmatprep.mubr.bf16.mxu0 %v4157
  %4416 = vmatmul.mubr.bf16.gmra.mxu0 %v4156
  %v4417 = vpop.f32.mrf.mxu0
  %v4418 = vadd.f32 %v4198, %v4417
  %v4419 = vpop.f32.mrf.mxu0
  %v4420 = vpop.f32.mrf.mxu0
  %v4421 = vadd.f32 %v4198, %v4420
  %v4422 = vpop.f32.mrf.mxu0
  %4423 = vmatprep.mubr.bf16.mxu0 %v4159
  %4424 = vmatmul.mubr.bf16.gmra.mxu0 %v4158
  %v4425 = vpop.f32.mrf.mxu0
  %v4426 = vadd.f32 %v4198, %v4425
  %v4427 = vpop.f32.mrf.mxu0
  %v4428 = vpop.f32.mrf.mxu0
  %v4429 = vadd.f32 %v4198, %v4428
  %v4430 = vpop.f32.mrf.mxu0
  %4431 = vmatprep.mubr.bf16.mxu0 %v4161
  %4432 = vmatmul.mubr.bf16.gmra.mxu0 %v4160
  %v4433 = vpop.f32.mrf.mxu0
  %v4434 = vadd.f32 %v4198, %v4433
  %v4435 = vpop.f32.mrf.mxu0
  %v4436 = vpop.f32.mrf.mxu0
  %v4437 = vadd.f32 %v4198, %v4436
  %v4438 = vpop.f32.mrf.mxu0
  %4439 = vmatprep.mubr.bf16.mxu0 %v4163
  %4440 = vmatmul.mubr.bf16.gmra.mxu0 %v4162
  %v4441 = vpop.f32.mrf.mxu0
  %v4442 = vadd.f32 %v4198, %v4441
  %v4443 = vpop.f32.mrf.mxu0
  %v4444 = vpop.f32.mrf.mxu0
  %v4445 = vadd.f32 %v4198, %v4444
  %v4446 = vpop.f32.mrf.mxu0
  %4447 = vmatprep.mubr.bf16.mxu0 %v4165
  %4448 = vmatmul.mubr.bf16.gmra.mxu0 %v4164
  %v4449 = vpop.f32.mrf.mxu0
  %v4450 = vadd.f32 %v4198, %v4449
  %v4451 = vpop.f32.mrf.mxu0
  %v4452 = vpop.f32.mrf.mxu0
  %v4453 = vadd.f32 %v4198, %v4452
  %v4454 = vpop.f32.mrf.mxu0
  %4455 = vdwg.mxu0
  %v4456 = vtanh.pop %v4330
  %v4457 = vtanh.pop %v4333
  %v4458 = vtanh.pop %v4338
  %v4459 = vtanh.pop %v4341
  %v4460 = vtanh.pop %v4346
  %v4461 = vtanh.pop %v4349
  %v4462 = vtanh.pop %v4354
  %v4463 = vtanh.pop %v4357
  %v4464 = vtanh.pop %v4362
  %v4465 = vtanh.pop %v4365
  %v4466 = vtanh.pop %v4370
  %v4467 = vtanh.pop %v4373
  %v4468 = vtanh.pop %v4378
  %v4469 = vtanh.pop %v4381
  %v4470 = vtanh.pop %v4386
  %v4471 = vtanh.pop %v4389
  %v4472 = vtanh.pop %v4394
  %v4473 = vtanh.pop %v4397
  %v4474 = vtanh.pop %v4402
  %v4475 = vtanh.pop %v4405
  %v4476 = vtanh.pop %v4410
  %v4477 = vtanh.pop %v4413
  %v4478 = vtanh.pop %v4418
  %v4479 = vtanh.pop %v4421
  %v4480 = vtanh.pop %v4426
  %v4481 = vtanh.pop %v4429
  %v4482 = vtanh.pop %v4434
  %v4483 = vtanh.pop %v4437
  %v4484 = vtanh.pop %v4442
  %v4485 = vtanh.pop %v4445
  %v4486 = vtanh.pop %v4450
  %v4487 = vtanh.pop %v4453
  %vm4488 = vcmask 31744
  %4489 = vst.msk [vmem:[%s7] sm:$0xff] %vm4488, %v4456
  %4490 = vst.msk [vmem:[%s7 + $0x8] sm:$0xff] %vm4488, %v4457
  %4491 = vst.msk [vmem:[%s7 + $0x10] sm:$0xff] %vm4488, %v4458
  %4492 = vst.msk [vmem:[%s7 + $0x18] sm:$0xff] %vm4488, %v4459
  %4493 = vst.msk [vmem:[%s7 + $0x20] sm:$0xff] %vm4488, %v4460
  %4494 = vst.msk [vmem:[%s7 + $0x28] sm:$0xff] %vm4488, %v4461
  %4495 = vst.msk [vmem:[%s7 + $0x30] sm:$0xff] %vm4488, %v4462
  %4496 = vst.msk [vmem:[%s7 + $0x38] sm:$0xff] %vm4488, %v4463
  %4497 = vst.msk [vmem:[%s7 + $0x40] sm:$0xff] %vm4488, %v4464
  %4498 = vst.msk [vmem:[%s7 + $0x48] sm:$0xff] %vm4488, %v4465
  %4499 = vst.msk [vmem:[%s7 + $0x50] sm:$0xff] %vm4488, %v4466
  %4500 = vst.msk [vmem:[%s7 + $0x58] sm:$0xff] %vm4488, %v4467
  %4501 = vst.msk [vmem:[%s7 + $0x60] sm:$0xff] %vm4488, %v4468
  %4502 = vst.msk [vmem:[%s7 + $0x68] sm:$0xff] %vm4488, %v4469
  %4503 = vst.msk [vmem:[%s7 + $0x70] sm:$0xff] %vm4488, %v4470
  %4504 = vst.msk [vmem:[%s7 + $0x78] sm:$0xff] %vm4488, %v4471
  %4505 = vst.msk [vmem:[%s7 + $0x80] sm:$0xff] %vm4488, %v4472
  %4506 = vst.msk [vmem:[%s7 + $0x88] sm:$0xff] %vm4488, %v4473
  %4507 = vst.msk [vmem:[%s7 + $0x90] sm:$0xff] %vm4488, %v4474
  %4508 = vst.msk [vmem:[%s7 + $0x98] sm:$0xff] %vm4488, %v4475
  %4509 = vst.msk [vmem:[%s7 + $0xa0] sm:$0xff] %vm4488, %v4476
  %4510 = vst.msk [vmem:[%s7 + $0xa8] sm:$0xff] %vm4488, %v4477
  %4511 = vst.msk [vmem:[%s7 + $0xb0] sm:$0xff] %vm4488, %v4478
  %4512 = vst.msk [vmem:[%s7 + $0xb8] sm:$0xff] %vm4488, %v4479
  %4513 = vst.msk [vmem:[%s7 + $0xc0] sm:$0xff] %vm4488, %v4480
  %4514 = vst.msk [vmem:[%s7 + $0xc8] sm:$0xff] %vm4488, %v4481
  %4515 = vst.msk [vmem:[%s7 + $0xd0] sm:$0xff] %vm4488, %v4482
  %4516 = vst.msk [vmem:[%s7 + $0xd8] sm:$0xff] %vm4488, %v4483
  %4517 = vst.msk [vmem:[%s7 + $0xe0] sm:$0xff] %vm4488, %v4484
  %4518 = vst.msk [vmem:[%s7 + $0xe8] sm:$0xff] %vm4488, %v4485
  %4519 = vst.msk [vmem:[%s7 + $0xf0] sm:$0xff] %vm4488, %v4486
  %4520 = vst.msk [vmem:[%s7 + $0xf8] sm:$0xff] %vm4488, %v4487
  // Predicated region
  $region30: #{sdfnet_forward.1} parent=0 // pred_check
    _
  $region31: #{sdfnet_forward.1} parent=0 // pred_check_branch
    %4522 = sbr.rel (0) target = $region33
  $region32: #{sdfnet_forward.1} parent=0 // pred_region
    _
  $region33: #{sdfnet_forward.1} parent=0 // pred_fallthru
    _
  // Predicated region
  $region34: #{sdfnet_forward.1} parent=0 // pred_check
    _
  $region35: #{sdfnet_forward.1} parent=0 // pred_check_branch
    %4524 = sbr.rel (0) target = $region37
  $region36: #{sdfnet_forward.1} parent=0 // pred_region
    _
  $region37: #{sdfnet_forward.1} parent=0 // pred_fallthru
    _

</llo_original>
